<compile_context>
chip_gen: v7x
topology: tpu7x:2x2x1
jax: 0.10.0
libtpu: 0.0.40
codegen_flags: <defaults>
</compile_context>

<pallas_src>
import math
import functools

import jax
import jax.numpy as jnp
from jax.experimental import pallas as pl
from jax.experimental.pallas import tpu as pltpu

LN_EPS = 1e-5


def _layernorm(x, w, b):
    # x: (rows, C) f32, w/b: (1, C) f32
    mu = jnp.mean(x, axis=-1, keepdims=True)
    var = jnp.mean((x - mu) ** 2, axis=-1, keepdims=True)
    return (x - mu) * jax.lax.rsqrt(var + LN_EPS) * w + b


def block_kernel(
    x_ref,                      # (1, TQ, C) f32   residual rows of this q-tile
    ln1_w_ref, ln1_b_ref,       # (1, C)     f32
    wqkv_ref, bqkv_ref,         # (C, 3C) bf16 (wq pre-scaled), (1, 3C) f32
    wo_ref, bo_ref,             # (C, C)  bf16, (1, C)  f32
    ln2_w_ref, ln2_b_ref,       # (1, C)     f32
    w1_ref, b1_ref,             # (C, 4C) bf16, (1, 4C) f32
    w2_ref, b2_ref,             # (4C, C) bf16, (1, C)  f32
    o_ref,                      # (1, TQ, C) f32
    k_scr, v_scr,               # (T, C) bf16 VMEM scratch (persist over q-tiles)
    *, n_head: int,
):
    TQ, C = x_ref.shape[1], x_ref.shape[2]
    hs = C // n_head
    qi = pl.program_id(1)
    row0 = pl.multiple_of(qi * TQ, TQ)

    x_t = x_ref[0]                                              # (TQ, C) f32

    # ---- per-tile LN1 + fused QKV projection (scale folded into wq/bq) ----
    xn1 = _layernorm(x_t, ln1_w_ref[...], ln1_b_ref[...])
    qkv = jnp.dot(xn1.astype(jnp.bfloat16), wqkv_ref[...],
                  preferred_element_type=jnp.float32) + bqkv_ref[...]   # (TQ, 3C) f32
    q_t = qkv[:, 0 * C:1 * C].astype(jnp.bfloat16)              # already * 1/sqrt(hs)
    k_new = qkv[:, 1 * C:2 * C].astype(jnp.bfloat16)
    v_new = qkv[:, 2 * C:3 * C].astype(jnp.bfloat16)
    # Append this tile's K/V rows to the per-sequence scratch.
    k_scr[pl.ds(row0, TQ), :] = k_new
    v_scr[pl.ds(row0, TQ), :] = v_new

    # ---- flash-style causal attention over k-tiles 0..qi -------------------
    q_rows = row0 + jax.lax.broadcasted_iota(jnp.int32, (TQ, TQ), 0)
    col_ids = jax.lax.broadcasted_iota(jnp.int32, (TQ, TQ), 1)

    def kt_body(kt, carry):
        k0 = pl.multiple_of(kt * TQ, TQ)
        k_blk = k_scr[pl.ds(k0, TQ), :]                         # (TK, C) bf16
        v_blk = v_scr[pl.ds(k0, TQ), :]                         # (TK, C) bf16
        mask = q_rows >= (k0 + col_ids)
        new = []
        for h in range(n_head):
            m_h, l_h, acc_h = carry[h]
            sl = slice(h * hs, (h + 1) * hs)
            # q_h @ k_h^T without materializing a transpose (heads = lane slices)
            s = jax.lax.dot_general(q_t[:, sl], k_blk[:, sl],
                                    (((1,), (1,)), ((), ())),
                                    preferred_element_type=jnp.float32)  # (TQ, TK)
            s = jnp.where(mask, s, -1e30)
            m_new = jnp.maximum(m_h, jnp.max(s, axis=-1, keepdims=True))
            alpha = jnp.exp(m_h - m_new)
            p = jnp.exp(s - m_new)
            l_new = alpha * l_h + jnp.sum(p, axis=-1, keepdims=True)
            acc_new = alpha * acc_h + jnp.dot(p.astype(jnp.bfloat16), v_blk[:, sl],
                                              preferred_element_type=jnp.float32)
            new.append((m_new, l_new, acc_new))
        return tuple(new)

    init = tuple((jnp.full((TQ, 1), -1e30, jnp.float32),
                  jnp.zeros((TQ, 1), jnp.float32),
                  jnp.zeros((TQ, hs), jnp.float32)) for _ in range(n_head))
    carry = jax.lax.fori_loop(0, qi + 1, kt_body, init)

    # ---- per-head output projection accumulation (no concatenate) ----------
    att = jnp.zeros((TQ, C), jnp.float32)
    for h in range(n_head):
        _, l_h, acc_h = carry[h]
        o_h = acc_h * pl.reciprocal(l_h, approx=True)           # (TQ, hs) f32
        att = att + jnp.dot(o_h.astype(jnp.bfloat16),
                            wo_ref[h * hs:(h + 1) * hs, :],
                            preferred_element_type=jnp.float32)
    x1 = x_t + att + bo_ref[...]                                # f32 residual

    # ---- feed-forward on the same q tile -----------------------------------
    xn2 = _layernorm(x1, ln2_w_ref[...], ln2_b_ref[...])
    h1 = jnp.dot(xn2.astype(jnp.bfloat16), w1_ref[...],
                 preferred_element_type=jnp.float32) + b1_ref[...]
    h1 = jnp.maximum(h1, 0.0)                                   # ReLU
    ff = jnp.dot(h1.astype(jnp.bfloat16), w2_ref[...],
                 preferred_element_type=jnp.float32) + b2_ref[...]

    o_ref[0] = (x1 + ff).astype(o_ref.dtype)


def _default_q_tile(T):
    # Prefer 256/128-row tiles (amortize per-step overhead, keep MXU M dim
    # full); otherwise the largest multiple-of-16 divisor of T (bf16 sublane
    # packing on the K/V scratch slices).
    for cand in (256, 128):
        if T % cand == 0:
            return cand
    for cand in range(min(T, 256) - min(T, 256) % 16, 0, -16):
        if cand > 0 and T % cand == 0:
            return cand
    return T


def _default_vmem_limit():
    # Lean on v7x (64 MiB physical -> ~48 MiB), generous on v5e/v6e (128 MiB).
    try:
        cap = pltpu.get_tpu_info().vmem_capacity_bytes
    except Exception:
        cap = 64 * 1024 * 1024
    return max(32 * 1024 * 1024, min(cap - 16 * 1024 * 1024, 100 * 1024 * 1024))


def block_forward(x, params, n_head, q_tile=None, vmem_limit_bytes=None):
    B, T, C = x.shape
    H4 = 4 * C
    assert C % n_head == 0
    hs = C // n_head
    scale = 1.0 / math.sqrt(hs)

    if q_tile is None:
        q_tile = _default_q_tile(T)
    assert T % q_tile == 0 and q_tile % 8 == 0
    NQ = T // q_tile

    wdt = jnp.bfloat16
    # Fused QKV weight/bias; 1/sqrt(hs) folded into the q columns.
    wqkv = jnp.concatenate(
        [params["wq"] * scale, params["wk"], params["wv"]], axis=1).astype(wdt)
    bqkv = jnp.concatenate(
        [params["bq"] * scale, params["bk"], params["bv"]], axis=1).astype(jnp.float32)
    wo = params["wo"].astype(wdt)
    w1 = params["w1"].astype(wdt)
    w2 = params["w2"].astype(wdt)

    if vmem_limit_bytes is None:
        vmem_limit_bytes = _default_vmem_limit()

    args = (x,
            params["ln1_w"], params["ln1_b"],
            wqkv, bqkv,
            wo, params["bo"],
            params["ln2_w"], params["ln2_b"],
            w1, params["b1"],
            w2, params["b2"])

    def run(single_buffer_weights):
        if single_buffer_weights:
            const = lambda shape: pl.BlockSpec(shape, lambda b, qi: (0, 0),
                                               pipeline_mode=pl.Buffered(1))
        else:
            const = lambda shape: pl.BlockSpec(shape, lambda b, qi: (0, 0))

        in_specs = [
            pl.BlockSpec((1, q_tile, C), lambda b, qi: (b, qi, 0)),  # x streamed per tile
            const((1, C)), const((1, C)),                            # ln1 w, b
            const((C, 3 * C)), const((1, 3 * C)),                    # fused wqkv, bqkv
            const((C, C)), const((1, C)),                            # wo, bo
            const((1, C)), const((1, C)),                            # ln2 w, b
            const((C, H4)), const((1, H4)),                          # ffn w1, b1
            const((H4, C)), const((1, C)),                           # ffn w2, b2
        ]

        grid_spec = pltpu.PrefetchScalarGridSpec(
            num_scalar_prefetch=0,
            grid=(B, NQ),
            in_specs=in_specs,
            out_specs=pl.BlockSpec((1, q_tile, C), lambda b, qi: (b, qi, 0)),
            scratch_shapes=[
                pltpu.VMEM((T, C), jnp.bfloat16),   # k (filled incrementally)
                pltpu.VMEM((T, C), jnp.bfloat16),   # v (filled incrementally)
            ],
        )

        return pl.pallas_call(
            functools.partial(block_kernel, n_head=n_head),
            out_shape=jax.ShapeDtypeStruct((B, T, C), x.dtype),
            grid_spec=grid_spec,
            compiler_params=pltpu.CompilerParams(
                # q-tile axis is "arbitrary": K/V scratch is carried across it.
                dimension_semantics=("parallel", "arbitrary"),
                vmem_limit_bytes=vmem_limit_bytes,
            ),
        )(*args)

    try:
        return run(True)
    except Exception:
        # pl.Buffered(1) not supported on this jax version: fall back to the
        # default (double-buffered) weight BlockSpecs.
        return run(False)


def make_params(key, C):
    H4 = 4 * C
    keys = jax.random.split(key, 8)
    s = 0.02
    return {
        "ln1_w": jnp.ones((1, C), jnp.float32),
        "ln1_b": jnp.zeros((1, C), jnp.float32),
        "wq": s * jax.random.normal(keys[0], (C, C), jnp.float32),
        "wk": s * jax.random.normal(keys[1], (C, C), jnp.float32),
        "wv": s * jax.random.normal(keys[2], (C, C), jnp.float32),
        "wo": s * jax.random.normal(keys[3], (C, C), jnp.float32),
        "bq": jnp.zeros((1, C), jnp.float32),
        "bk": jnp.zeros((1, C), jnp.float32),
        "bv": jnp.zeros((1, C), jnp.float32),
        "bo": s * jax.random.normal(keys[4], (1, C), jnp.float32),
        "ln2_w": jnp.ones((1, C), jnp.float32),
        "ln2_b": jnp.zeros((1, C), jnp.float32),
        "w1": s * jax.random.normal(keys[5], (C, H4), jnp.float32),
        "b1": s * jax.random.normal(keys[6], (1, H4), jnp.float32),
        "w2": s * jax.random.normal(keys[7], (H4, C), jnp.float32),
        "b2": jnp.zeros((1, C), jnp.float32),
    }


def reference_forward(x, p, n_head):
    """Pure-JAX f32 reference of the same Block."""
    B, T, C = x.shape
    hs = C // n_head

    def ln(v, w, b):
        mu = jnp.mean(v, -1, keepdims=True)
        var = jnp.mean((v - mu) ** 2, -1, keepdims=True)
        return (v - mu) / jnp.sqrt(var + LN_EPS) * w + b

    xn = ln(x, p["ln1_w"], p["ln1_b"])
    q = xn @ p["wq"] + p["bq"]
    k = xn @ p["wk"] + p["bk"]
    v = xn @ p["wv"] + p["bv"]
    q = q.reshape(B, T, n_head, hs).transpose(0, 2, 1, 3)
    k = k.reshape(B, T, n_head, hs).transpose(0, 2, 1, 3)
    v = v.reshape(B, T, n_head, hs).transpose(0, 2, 1, 3)
    sc = jnp.einsum("bhtd,bhsd->bhts", q, k) / math.sqrt(hs)
    mask = jnp.tril(jnp.ones((T, T), bool))
    sc = jnp.where(mask[None, None], sc, -1e30)
    a = jax.nn.softmax(sc, axis=-1)
    o = jnp.einsum("bhts,bhsd->bhtd", a, v).transpose(0, 2, 1, 3).reshape(B, T, C)
    o = o @ p["wo"] + p["bo"]
    x1 = x + o
    xn2 = ln(x1, p["ln2_w"], p["ln2_b"])
    h = jnp.maximum(xn2 @ p["w1"] + p["b1"], 0.0)
    return x1 + h @ p["w2"] + p["b2"]


if __name__ == "__main__":
    # Small but TPU-friendly shapes: lane-dense C=128, T=32 with q_tile=16 so
    # the multi-q-tile K/V scratch carry + k-tile loop path is exercised.
    B, T, C, n_head = 2, 32, 128, 4
    key = jax.random.PRNGKey(0)
    kx, kp = jax.random.split(key)
    x = jax.random.normal(kx, (B, T, C), jnp.float32)
    params = make_params(kp, C)

    out = jax.block_until_ready(block_forward(x, params, n_head, q_tile=16))
    ref = reference_forward(x, params, n_head)

    assert out.shape == (B, T, C)
    # bf16 matmuls + approximate softmax reciprocal -> looser tolerance than f32.
    err = jnp.max(jnp.abs(out - ref))
    assert jnp.allclose(out, ref, atol=2e-2, rtol=2e-2), f"max abs err {err}"

    print("KERNEL_OK")
</pallas_src>

<mosaic_0001>
module attributes {stable_mosaic.version = 11 : i64} {
  func.func @block_kernel(%arg0: i32, %arg1: i32, %arg2: memref<1x16x128xf32, #tpu.memory_space<vmem>>, %arg3: memref<1x128xf32, #tpu.memory_space<vmem>>, %arg4: memref<1x128xf32, #tpu.memory_space<vmem>>, %arg5: memref<128x384xbf16, #tpu.memory_space<vmem>>, %arg6: memref<1x384xf32, #tpu.memory_space<vmem>>, %arg7: memref<128x128xbf16, #tpu.memory_space<vmem>>, %arg8: memref<1x128xf32, #tpu.memory_space<vmem>>, %arg9: memref<1x128xf32, #tpu.memory_space<vmem>>, %arg10: memref<1x128xf32, #tpu.memory_space<vmem>>, %arg11: memref<128x512xbf16, #tpu.memory_space<vmem>>, %arg12: memref<1x512xf32, #tpu.memory_space<vmem>>, %arg13: memref<512x128xbf16, #tpu.memory_space<vmem>>, %arg14: memref<1x128xf32, #tpu.memory_space<vmem>>, %arg15: memref<1x16x128xf32, #tpu.memory_space<vmem>>, %arg16: memref<32x128xbf16, #tpu.memory_space<vmem>>, %arg17: memref<32x128xbf16, #tpu.memory_space<vmem>>) attributes {dimension_semantics = [#tpu.dimension_semantics<parallel>, #tpu.dimension_semantics<arbitrary>], iteration_bounds = array<i64: 2, 2>, scalar_prefetch = 0 : i64, scratch_operands = 2 : i64, tpu.core_type = #tpu.core_type<tc>, window_params = [{transform_indices = @transform_0, window_bounds = array<i64: 1, 16, 128>}, {pipeline_mode = #tpu.pipeline_mode<synchronous>, transform_indices = @transform_1, window_bounds = array<i64: 1, 128>}, {pipeline_mode = #tpu.pipeline_mode<synchronous>, transform_indices = @transform_2, window_bounds = array<i64: 1, 128>}, {pipeline_mode = #tpu.pipeline_mode<synchronous>, transform_indices = @transform_3, window_bounds = array<i64: 128, 384>}, {pipeline_mode = #tpu.pipeline_mode<synchronous>, transform_indices = @transform_4, window_bounds = array<i64: 1, 384>}, {pipeline_mode = #tpu.pipeline_mode<synchronous>, transform_indices = @transform_5, window_bounds = array<i64: 128, 128>}, {pipeline_mode = #tpu.pipeline_mode<synchronous>, transform_indices = @transform_6, window_bounds = array<i64: 1, 128>}, {pipeline_mode = #tpu.pipeline_mode<synchronous>, transform_indices = @transform_7, window_bounds = array<i64: 1, 128>}, {pipeline_mode = #tpu.pipeline_mode<synchronous>, transform_indices = @transform_8, window_bounds = array<i64: 1, 128>}, {pipeline_mode = #tpu.pipeline_mode<synchronous>, transform_indices = @transform_9, window_bounds = array<i64: 128, 512>}, {pipeline_mode = #tpu.pipeline_mode<synchronous>, transform_indices = @transform_10, window_bounds = array<i64: 1, 512>}, {pipeline_mode = #tpu.pipeline_mode<synchronous>, transform_indices = @transform_11, window_bounds = array<i64: 512, 128>}, {pipeline_mode = #tpu.pipeline_mode<synchronous>, transform_indices = @transform_12, window_bounds = array<i64: 1, 128>}, {transform_indices = @transform_13, window_bounds = array<i64: 1, 16, 128>}]} {
    %c16_i32 = arith.constant 16 : i32
    %0 = arith.muli %arg1, %c16_i32 : i32
    %1 = tpu.assume_multiple %0, 16 : i32
    %c0 = arith.constant 0 : index
    %c0_0 = arith.constant 0 : index
    %c0_1 = arith.constant 0 : index
    %2 = vector.load %arg2[%c0, %c0_0, %c0_1] : memref<1x16x128xf32, #tpu.memory_space<vmem>>, vector<1x16x128xf32>
    %3 = vector.shape_cast %2 : vector<1x16x128xf32> to vector<16x128xf32>
    %c0_2 = arith.constant 0 : index
    %c0_3 = arith.constant 0 : index
    %4 = vector.load %arg3[%c0_2, %c0_3] : memref<1x128xf32, #tpu.memory_space<vmem>>, vector<1x128xf32>
    %c0_4 = arith.constant 0 : index
    %c0_5 = arith.constant 0 : index
    %5 = vector.load %arg4[%c0_4, %c0_5] : memref<1x128xf32, #tpu.memory_space<vmem>>, vector<1x128xf32>
    %cst = arith.constant dense<0.000000e+00> : vector<16xf32>
    %6 = vector.multi_reduction <add>, %3, %cst [1] : vector<16x128xf32> to vector<16xf32>
    %7 = vector.shape_cast %6 : vector<16xf32> to vector<16x1xf32>
    %cst_6 = arith.constant 1.280000e+02 : f32
    %8 = vector.broadcast %cst_6 : f32 to vector<16x1xf32>
    %9 = arith.divf %7, %8 : vector<16x1xf32>
    %10 = vector.broadcast %9 : vector<16x1xf32> to vector<16x128xf32>
    %11 = arith.subf %3, %10 : vector<16x128xf32>
    %12 = arith.mulf %11, %11 : vector<16x128xf32>
    %cst_7 = arith.constant dense<0.000000e+00> : vector<16xf32>
    %13 = vector.multi_reduction <add>, %12, %cst_7 [1] : vector<16x128xf32> to vector<16xf32>
    %14 = vector.shape_cast %13 : vector<16xf32> to vector<16x1xf32>
    %cst_8 = arith.constant 1.280000e+02 : f32
    %15 = vector.broadcast %cst_8 : f32 to vector<16x1xf32>
    %16 = arith.divf %14, %15 : vector<16x1xf32>
    %17 = vector.broadcast %9 : vector<16x1xf32> to vector<16x128xf32>
    %18 = arith.subf %3, %17 : vector<16x128xf32>
    %cst_9 = arith.constant 9.99999974E-6 : f32
    %19 = vector.broadcast %cst_9 : f32 to vector<16x1xf32>
    %20 = arith.addf %16, %19 : vector<16x1xf32>
    %21 = math.rsqrt %20 : vector<16x1xf32>
    %22 = vector.broadcast %21 : vector<16x1xf32> to vector<16x128xf32>
    %23 = arith.mulf %18, %22 : vector<16x128xf32>
    %24 = vector.broadcast %4 : vector<1x128xf32> to vector<16x128xf32>
    %25 = arith.mulf %23, %24 : vector<16x128xf32>
    %26 = vector.broadcast %5 : vector<1x128xf32> to vector<16x128xf32>
    %27 = arith.addf %25, %26 : vector<16x128xf32>
    %28 = arith.truncf %27 : vector<16x128xf32> to vector<16x128xbf16>
    %c0_10 = arith.constant 0 : index
    %c0_11 = arith.constant 0 : index
    %29 = vector.load %arg5[%c0_10, %c0_11] : memref<128x384xbf16, #tpu.memory_space<vmem>>, vector<128x384xbf16>
    %cst_12 = arith.constant dense<0.000000e+00> : vector<16x384xf32>
    %30 = tpu.matmul %28, %29, %cst_12 {dimension_numbers = #tpu.dot_dimension_numbers<[1], [0], [0], [1], [0, 0, 1, 1], [], []>} : vector<16x128xbf16>, vector<128x384xbf16>, vector<16x384xf32> -> vector<16x384xf32>
    %c0_13 = arith.constant 0 : index
    %c0_14 = arith.constant 0 : index
    %31 = vector.load %arg6[%c0_13, %c0_14] : memref<1x384xf32, #tpu.memory_space<vmem>>, vector<1x384xf32>
    %32 = vector.broadcast %31 : vector<1x384xf32> to vector<16x384xf32>
    %33 = arith.addf %30, %32 : vector<16x384xf32>
    %34 = vector.extract_strided_slice %33 {offsets = [0, 0], sizes = [16, 128], strides = [1, 1]} : vector<16x384xf32> to vector<16x128xf32>
    %35 = arith.truncf %34 : vector<16x128xf32> to vector<16x128xbf16>
    %36 = vector.extract_strided_slice %33 {offsets = [0, 128], sizes = [16, 128], strides = [1, 1]} : vector<16x384xf32> to vector<16x128xf32>
    %37 = arith.truncf %36 : vector<16x128xf32> to vector<16x128xbf16>
    %38 = vector.extract_strided_slice %33 {offsets = [0, 256], sizes = [16, 128], strides = [1, 1]} : vector<16x384xf32> to vector<16x128xf32>
    %39 = arith.truncf %38 : vector<16x128xf32> to vector<16x128xbf16>
    %40 = arith.index_cast %1 : i32 to index
    %c0_15 = arith.constant 0 : index
    %41 = vector.load %arg16[%40, %c0_15] : memref<32x128xbf16, #tpu.memory_space<vmem>>, vector<16x128xbf16>
    tpu.vector_store %arg16[%40, %c0_15], %37 {strides = array<i32>} : memref<32x128xbf16, #tpu.memory_space<vmem>>, vector<16x128xbf16>,
    %42 = arith.index_cast %1 : i32 to index
    %c0_16 = arith.constant 0 : index
    %43 = vector.load %arg17[%42, %c0_16] : memref<32x128xbf16, #tpu.memory_space<vmem>>, vector<16x128xbf16>
    tpu.vector_store %arg17[%42, %c0_16], %39 {strides = array<i32>} : memref<32x128xbf16, #tpu.memory_space<vmem>>, vector<16x128xbf16>,
    %44 = tpu.iota {dimensions = array<i32: 0>} : vector<16x16xi32>
    %45 = vector.broadcast %1 : i32 to vector<16x16xi32>
    %46 = arith.addi %45, %44 : vector<16x16xi32>
    %47 = tpu.iota {dimensions = array<i32: 1>} : vector<16x16xi32>
    %cst_17 = arith.constant -1.000000e+30 : f32
    %48 = vector.broadcast %cst_17 : f32 to vector<16x1xf32>
    %cst_18 = arith.constant 0.000000e+00 : f32
    %49 = vector.broadcast %cst_18 : f32 to vector<16x1xf32>
    %cst_19 = arith.constant 0.000000e+00 : f32
    %50 = vector.broadcast %cst_19 : f32 to vector<16x32xf32>
    %cst_20 = arith.constant -1.000000e+30 : f32
    %51 = vector.broadcast %cst_20 : f32 to vector<16x1xf32>
    %cst_21 = arith.constant 0.000000e+00 : f32
    %52 = vector.broadcast %cst_21 : f32 to vector<16x1xf32>
    %cst_22 = arith.constant 0.000000e+00 : f32
    %53 = vector.broadcast %cst_22 : f32 to vector<16x32xf32>
    %cst_23 = arith.constant -1.000000e+30 : f32
    %54 = vector.broadcast %cst_23 : f32 to vector<16x1xf32>
    %cst_24 = arith.constant 0.000000e+00 : f32
    %55 = vector.broadcast %cst_24 : f32 to vector<16x1xf32>
    %cst_25 = arith.constant 0.000000e+00 : f32
    %56 = vector.broadcast %cst_25 : f32 to vector<16x32xf32>
    %cst_26 = arith.constant -1.000000e+30 : f32
    %57 = vector.broadcast %cst_26 : f32 to vector<16x1xf32>
    %cst_27 = arith.constant 0.000000e+00 : f32
    %58 = vector.broadcast %cst_27 : f32 to vector<16x1xf32>
    %cst_28 = arith.constant 0.000000e+00 : f32
    %59 = vector.broadcast %cst_28 : f32 to vector<16x32xf32>
    %c1_i32 = arith.constant 1 : i32
    %60 = arith.addi %arg1, %c1_i32 : i32
    %c0_i32 = arith.constant 0 : i32
    %61 = arith.subi %60, %c0_i32 : i32
    %62 = arith.addi %c0_i32, %61 : i32
    %c1_i32_29 = arith.constant 1 : i32
    %63:12 = scf.for %arg18 = %c0_i32 to %62 step %c1_i32_29 iter_args(%arg19 = %48, %arg20 = %49, %arg21 = %50, %arg22 = %51, %arg23 = %52, %arg24 = %53, %arg25 = %54, %arg26 = %55, %arg27 = %56, %arg28 = %57, %arg29 = %58, %arg30 = %59) -> (vector<16x1xf32>, vector<16x1xf32>, vector<16x32xf32>, vector<16x1xf32>, vector<16x1xf32>, vector<16x32xf32>, vector<16x1xf32>, vector<16x1xf32>, vector<16x32xf32>, vector<16x1xf32>, vector<16x1xf32>, vector<16x32xf32>)  : i32 {
      %c16_i32_65 = arith.constant 16 : i32
      %139 = arith.muli %arg18, %c16_i32_65 : i32
      %140 = tpu.assume_multiple %139, 16 : i32
      %141 = arith.index_cast %140 : i32 to index
      %c0_66 = arith.constant 0 : index
      %142 = vector.load %arg16[%141, %c0_66] : memref<32x128xbf16, #tpu.memory_space<vmem>>, vector<16x128xbf16>
      %143 = arith.index_cast %140 : i32 to index
      %c0_67 = arith.constant 0 : index
      %144 = vector.load %arg17[%143, %c0_67] : memref<32x128xbf16, #tpu.memory_space<vmem>>, vector<16x128xbf16>
      %145 = vector.broadcast %140 : i32 to vector<16x16xi32>
      %146 = arith.addi %145, %47 : vector<16x16xi32>
      %147 = arith.cmpi sge, %46, %146 : vector<16x16xi32>
      %148 = vector.extract_strided_slice %35 {offsets = [0, 0], sizes = [16, 32], strides = [1, 1]} : vector<16x128xbf16> to vector<16x32xbf16>
      %149 = vector.extract_strided_slice %142 {offsets = [0, 0], sizes = [16, 32], strides = [1, 1]} : vector<16x128xbf16> to vector<16x32xbf16>
      %cst_68 = arith.constant dense<0.000000e+00> : vector<16x16xf32>
      %150 = tpu.matmul %148, %149, %cst_68 {dimension_numbers = #tpu.dot_dimension_numbers<[1], [1], [0], [0], [0, 0, 1, 0], [], []>} : vector<16x32xbf16>, vector<16x32xbf16>, vector<16x16xf32> -> vector<16x16xf32>
      %cst_69 = arith.constant -1.000000e+30 : f32
      %151 = vector.broadcast %cst_69 : f32 to vector<16x16xf32>
      %152 = arith.select %147, %150, %151 : vector<16x16xi1>, vector<16x16xf32>
      %cst_70 = arith.constant dense<0xFF800000> : vector<16xf32>
      %153 = vector.multi_reduction <maximumf>, %152, %cst_70 [1] : vector<16x16xf32> to vector<16xf32>
      %154 = vector.shape_cast %153 : vector<16xf32> to vector<16x1xf32>
      %155 = arith.maximumf %arg19, %154 : vector<16x1xf32>
      %156 = arith.subf %arg19, %155 : vector<16x1xf32>
      %157 = math.exp %156 : vector<16x1xf32>
      %158 = vector.broadcast %155 : vector<16x1xf32> to vector<16x16xf32>
      %159 = arith.subf %152, %158 : vector<16x16xf32>
      %160 = math.exp %159 : vector<16x16xf32>
      %161 = arith.mulf %157, %arg20 : vector<16x1xf32>
      %cst_71 = arith.constant dense<0.000000e+00> : vector<16xf32>
      %162 = vector.multi_reduction <add>, %160, %cst_71 [1] : vector<16x16xf32> to vector<16xf32>
      %163 = vector.shape_cast %162 : vector<16xf32> to vector<16x1xf32>
      %164 = arith.addf %161, %163 : vector<16x1xf32>
      %165 = vector.broadcast %157 : vector<16x1xf32> to vector<16x32xf32>
      %166 = arith.mulf %165, %arg21 : vector<16x32xf32>
      %167 = arith.truncf %160 : vector<16x16xf32> to vector<16x16xbf16>
      %168 = vector.extract_strided_slice %144 {offsets = [0, 0], sizes = [16, 32], strides = [1, 1]} : vector<16x128xbf16> to vector<16x32xbf16>
      %cst_72 = arith.constant dense<0.000000e+00> : vector<16x32xf32>
      %169 = tpu.matmul %167, %168, %cst_72 {dimension_numbers = #tpu.dot_dimension_numbers<[1], [0], [0], [1], [0, 0, 1, 1], [], []>} : vector<16x16xbf16>, vector<16x32xbf16>, vector<16x32xf32> -> vector<16x32xf32>
      %170 = arith.addf %166, %169 : vector<16x32xf32>
      %171 = vector.extract_strided_slice %35 {offsets = [0, 32], sizes = [16, 32], strides = [1, 1]} : vector<16x128xbf16> to vector<16x32xbf16>
      %172 = vector.extract_strided_slice %142 {offsets = [0, 32], sizes = [16, 32], strides = [1, 1]} : vector<16x128xbf16> to vector<16x32xbf16>
      %cst_73 = arith.constant dense<0.000000e+00> : vector<16x16xf32>
      %173 = tpu.matmul %171, %172, %cst_73 {dimension_numbers = #tpu.dot_dimension_numbers<[1], [1], [0], [0], [0, 0, 1, 0], [], []>} : vector<16x32xbf16>, vector<16x32xbf16>, vector<16x16xf32> -> vector<16x16xf32>
      %cst_74 = arith.constant -1.000000e+30 : f32
      %174 = vector.broadcast %cst_74 : f32 to vector<16x16xf32>
      %175 = arith.select %147, %173, %174 : vector<16x16xi1>, vector<16x16xf32>
      %cst_75 = arith.constant dense<0xFF800000> : vector<16xf32>
      %176 = vector.multi_reduction <maximumf>, %175, %cst_75 [1] : vector<16x16xf32> to vector<16xf32>
      %177 = vector.shape_cast %176 : vector<16xf32> to vector<16x1xf32>
      %178 = arith.maximumf %arg22, %177 : vector<16x1xf32>
      %179 = arith.subf %arg22, %178 : vector<16x1xf32>
      %180 = math.exp %179 : vector<16x1xf32>
      %181 = vector.broadcast %178 : vector<16x1xf32> to vector<16x16xf32>
      %182 = arith.subf %175, %181 : vector<16x16xf32>
      %183 = math.exp %182 : vector<16x16xf32>
      %184 = arith.mulf %180, %arg23 : vector<16x1xf32>
      %cst_76 = arith.constant dense<0.000000e+00> : vector<16xf32>
      %185 = vector.multi_reduction <add>, %183, %cst_76 [1] : vector<16x16xf32> to vector<16xf32>
      %186 = vector.shape_cast %185 : vector<16xf32> to vector<16x1xf32>
      %187 = arith.addf %184, %186 : vector<16x1xf32>
      %188 = vector.broadcast %180 : vector<16x1xf32> to vector<16x32xf32>
      %189 = arith.mulf %188, %arg24 : vector<16x32xf32>
      %190 = arith.truncf %183 : vector<16x16xf32> to vector<16x16xbf16>
      %191 = vector.extract_strided_slice %144 {offsets = [0, 32], sizes = [16, 32], strides = [1, 1]} : vector<16x128xbf16> to vector<16x32xbf16>
      %cst_77 = arith.constant dense<0.000000e+00> : vector<16x32xf32>
      %192 = tpu.matmul %190, %191, %cst_77 {dimension_numbers = #tpu.dot_dimension_numbers<[1], [0], [0], [1], [0, 0, 1, 1], [], []>} : vector<16x16xbf16>, vector<16x32xbf16>, vector<16x32xf32> -> vector<16x32xf32>
      %193 = arith.addf %189, %192 : vector<16x32xf32>
      %194 = vector.extract_strided_slice %35 {offsets = [0, 64], sizes = [16, 32], strides = [1, 1]} : vector<16x128xbf16> to vector<16x32xbf16>
      %195 = vector.extract_strided_slice %142 {offsets = [0, 64], sizes = [16, 32], strides = [1, 1]} : vector<16x128xbf16> to vector<16x32xbf16>
      %cst_78 = arith.constant dense<0.000000e+00> : vector<16x16xf32>
      %196 = tpu.matmul %194, %195, %cst_78 {dimension_numbers = #tpu.dot_dimension_numbers<[1], [1], [0], [0], [0, 0, 1, 0], [], []>} : vector<16x32xbf16>, vector<16x32xbf16>, vector<16x16xf32> -> vector<16x16xf32>
      %cst_79 = arith.constant -1.000000e+30 : f32
      %197 = vector.broadcast %cst_79 : f32 to vector<16x16xf32>
      %198 = arith.select %147, %196, %197 : vector<16x16xi1>, vector<16x16xf32>
      %cst_80 = arith.constant dense<0xFF800000> : vector<16xf32>
      %199 = vector.multi_reduction <maximumf>, %198, %cst_80 [1] : vector<16x16xf32> to vector<16xf32>
      %200 = vector.shape_cast %199 : vector<16xf32> to vector<16x1xf32>
      %201 = arith.maximumf %arg25, %200 : vector<16x1xf32>
      %202 = arith.subf %arg25, %201 : vector<16x1xf32>
      %203 = math.exp %202 : vector<16x1xf32>
      %204 = vector.broadcast %201 : vector<16x1xf32> to vector<16x16xf32>
      %205 = arith.subf %198, %204 : vector<16x16xf32>
      %206 = math.exp %205 : vector<16x16xf32>
      %207 = arith.mulf %203, %arg26 : vector<16x1xf32>
      %cst_81 = arith.constant dense<0.000000e+00> : vector<16xf32>
      %208 = vector.multi_reduction <add>, %206, %cst_81 [1] : vector<16x16xf32> to vector<16xf32>
      %209 = vector.shape_cast %208 : vector<16xf32> to vector<16x1xf32>
      %210 = arith.addf %207, %209 : vector<16x1xf32>
      %211 = vector.broadcast %203 : vector<16x1xf32> to vector<16x32xf32>
      %212 = arith.mulf %211, %arg27 : vector<16x32xf32>
      %213 = arith.truncf %206 : vector<16x16xf32> to vector<16x16xbf16>
      %214 = vector.extract_strided_slice %144 {offsets = [0, 64], sizes = [16, 32], strides = [1, 1]} : vector<16x128xbf16> to vector<16x32xbf16>
      %cst_82 = arith.constant dense<0.000000e+00> : vector<16x32xf32>
      %215 = tpu.matmul %213, %214, %cst_82 {dimension_numbers = #tpu.dot_dimension_numbers<[1], [0], [0], [1], [0, 0, 1, 1], [], []>} : vector<16x16xbf16>, vector<16x32xbf16>, vector<16x32xf32> -> vector<16x32xf32>
      %216 = arith.addf %212, %215 : vector<16x32xf32>
      %217 = vector.extract_strided_slice %35 {offsets = [0, 96], sizes = [16, 32], strides = [1, 1]} : vector<16x128xbf16> to vector<16x32xbf16>
      %218 = vector.extract_strided_slice %142 {offsets = [0, 96], sizes = [16, 32], strides = [1, 1]} : vector<16x128xbf16> to vector<16x32xbf16>
      %cst_83 = arith.constant dense<0.000000e+00> : vector<16x16xf32>
      %219 = tpu.matmul %217, %218, %cst_83 {dimension_numbers = #tpu.dot_dimension_numbers<[1], [1], [0], [0], [0, 0, 1, 0], [], []>} : vector<16x32xbf16>, vector<16x32xbf16>, vector<16x16xf32> -> vector<16x16xf32>
      %cst_84 = arith.constant -1.000000e+30 : f32
      %220 = vector.broadcast %cst_84 : f32 to vector<16x16xf32>
      %221 = arith.select %147, %219, %220 : vector<16x16xi1>, vector<16x16xf32>
      %cst_85 = arith.constant dense<0xFF800000> : vector<16xf32>
      %222 = vector.multi_reduction <maximumf>, %221, %cst_85 [1] : vector<16x16xf32> to vector<16xf32>
      %223 = vector.shape_cast %222 : vector<16xf32> to vector<16x1xf32>
      %224 = arith.maximumf %arg28, %223 : vector<16x1xf32>
      %225 = arith.subf %arg28, %224 : vector<16x1xf32>
      %226 = math.exp %225 : vector<16x1xf32>
      %227 = vector.broadcast %224 : vector<16x1xf32> to vector<16x16xf32>
      %228 = arith.subf %221, %227 : vector<16x16xf32>
      %229 = math.exp %228 : vector<16x16xf32>
      %230 = arith.mulf %226, %arg29 : vector<16x1xf32>
      %cst_86 = arith.constant dense<0.000000e+00> : vector<16xf32>
      %231 = vector.multi_reduction <add>, %229, %cst_86 [1] : vector<16x16xf32> to vector<16xf32>
      %232 = vector.shape_cast %231 : vector<16xf32> to vector<16x1xf32>
      %233 = arith.addf %230, %232 : vector<16x1xf32>
      %234 = vector.broadcast %226 : vector<16x1xf32> to vector<16x32xf32>
      %235 = arith.mulf %234, %arg30 : vector<16x32xf32>
      %236 = arith.truncf %229 : vector<16x16xf32> to vector<16x16xbf16>
      %237 = vector.extract_strided_slice %144 {offsets = [0, 96], sizes = [16, 32], strides = [1, 1]} : vector<16x128xbf16> to vector<16x32xbf16>
      %cst_87 = arith.constant dense<0.000000e+00> : vector<16x32xf32>
      %238 = tpu.matmul %236, %237, %cst_87 {dimension_numbers = #tpu.dot_dimension_numbers<[1], [0], [0], [1], [0, 0, 1, 1], [], []>} : vector<16x16xbf16>, vector<16x32xbf16>, vector<16x32xf32> -> vector<16x32xf32>
      %239 = arith.addf %235, %238 : vector<16x32xf32>
      scf.yield %155, %164, %170, %178, %187, %193, %201, %210, %216, %224, %233, %239 : vector<16x1xf32>, vector<16x1xf32>, vector<16x32xf32>, vector<16x1xf32>, vector<16x1xf32>, vector<16x32xf32>, vector<16x1xf32>, vector<16x1xf32>, vector<16x32xf32>, vector<16x1xf32>, vector<16x1xf32>, vector<16x32xf32>
    }
    %cst_30 = arith.constant 0.000000e+00 : f32
    %64 = vector.broadcast %cst_30 : f32 to vector<16x128xf32>
    %65 = tpu.reciprocal %63#1 {approx = true} : vector<16x1xf32> -> vector<16x1xf32>
    %66 = vector.broadcast %65 : vector<16x1xf32> to vector<16x32xf32>
    %67 = arith.mulf %63#2, %66 : vector<16x32xf32>
    %68 = arith.truncf %67 : vector<16x32xf32> to vector<16x32xbf16>
    %c0_31 = arith.constant 0 : index
    %c0_32 = arith.constant 0 : index
    %69 = vector.load %arg7[%c0_31, %c0_32] : memref<128x128xbf16, #tpu.memory_space<vmem>>, vector<32x128xbf16>
    %cst_33 = arith.constant dense<0.000000e+00> : vector<16x128xf32>
    %70 = tpu.matmul %68, %69, %cst_33 {dimension_numbers = #tpu.dot_dimension_numbers<[1], [0], [0], [1], [0, 0, 1, 1], [], []>} : vector<16x32xbf16>, vector<32x128xbf16>, vector<16x128xf32> -> vector<16x128xf32>
    %71 = arith.addf %64, %70 : vector<16x128xf32>
    %72 = tpu.reciprocal %63#4 {approx = true} : vector<16x1xf32> -> vector<16x1xf32>
    %73 = vector.broadcast %72 : vector<16x1xf32> to vector<16x32xf32>
    %74 = arith.mulf %63#5, %73 : vector<16x32xf32>
    %75 = arith.truncf %74 : vector<16x32xf32> to vector<16x32xbf16>
    %c32 = arith.constant 32 : index
    %c0_34 = arith.constant 0 : index
    %76 = vector.load %arg7[%c32, %c0_34] : memref<128x128xbf16, #tpu.memory_space<vmem>>, vector<32x128xbf16>
    %cst_35 = arith.constant dense<0.000000e+00> : vector<16x128xf32>
    %77 = tpu.matmul %75, %76, %cst_35 {dimension_numbers = #tpu.dot_dimension_numbers<[1], [0], [0], [1], [0, 0, 1, 1], [], []>} : vector<16x32xbf16>, vector<32x128xbf16>, vector<16x128xf32> -> vector<16x128xf32>
    %78 = arith.addf %71, %77 : vector<16x128xf32>
    %79 = tpu.reciprocal %63#7 {approx = true} : vector<16x1xf32> -> vector<16x1xf32>
    %80 = vector.broadcast %79 : vector<16x1xf32> to vector<16x32xf32>
    %81 = arith.mulf %63#8, %80 : vector<16x32xf32>
    %82 = arith.truncf %81 : vector<16x32xf32> to vector<16x32xbf16>
    %c64 = arith.constant 64 : index
    %c0_36 = arith.constant 0 : index
    %83 = vector.load %arg7[%c64, %c0_36] : memref<128x128xbf16, #tpu.memory_space<vmem>>, vector<32x128xbf16>
    %cst_37 = arith.constant dense<0.000000e+00> : vector<16x128xf32>
    %84 = tpu.matmul %82, %83, %cst_37 {dimension_numbers = #tpu.dot_dimension_numbers<[1], [0], [0], [1], [0, 0, 1, 1], [], []>} : vector<16x32xbf16>, vector<32x128xbf16>, vector<16x128xf32> -> vector<16x128xf32>
    %85 = arith.addf %78, %84 : vector<16x128xf32>
    %86 = tpu.reciprocal %63#10 {approx = true} : vector<16x1xf32> -> vector<16x1xf32>
    %87 = vector.broadcast %86 : vector<16x1xf32> to vector<16x32xf32>
    %88 = arith.mulf %63#11, %87 : vector<16x32xf32>
    %89 = arith.truncf %88 : vector<16x32xf32> to vector<16x32xbf16>
    %c96 = arith.constant 96 : index
    %c0_38 = arith.constant 0 : index
    %90 = vector.load %arg7[%c96, %c0_38] : memref<128x128xbf16, #tpu.memory_space<vmem>>, vector<32x128xbf16>
    %cst_39 = arith.constant dense<0.000000e+00> : vector<16x128xf32>
    %91 = tpu.matmul %89, %90, %cst_39 {dimension_numbers = #tpu.dot_dimension_numbers<[1], [0], [0], [1], [0, 0, 1, 1], [], []>} : vector<16x32xbf16>, vector<32x128xbf16>, vector<16x128xf32> -> vector<16x128xf32>
    %92 = arith.addf %85, %91 : vector<16x128xf32>
    %93 = arith.addf %3, %92 : vector<16x128xf32>
    %c0_40 = arith.constant 0 : index
    %c0_41 = arith.constant 0 : index
    %94 = vector.load %arg8[%c0_40, %c0_41] : memref<1x128xf32, #tpu.memory_space<vmem>>, vector<1x128xf32>
    %95 = vector.broadcast %94 : vector<1x128xf32> to vector<16x128xf32>
    %96 = arith.addf %93, %95 : vector<16x128xf32>
    %c0_42 = arith.constant 0 : index
    %c0_43 = arith.constant 0 : index
    %97 = vector.load %arg9[%c0_42, %c0_43] : memref<1x128xf32, #tpu.memory_space<vmem>>, vector<1x128xf32>
    %c0_44 = arith.constant 0 : index
    %c0_45 = arith.constant 0 : index
    %98 = vector.load %arg10[%c0_44, %c0_45] : memref<1x128xf32, #tpu.memory_space<vmem>>, vector<1x128xf32>
    %cst_46 = arith.constant dense<0.000000e+00> : vector<16xf32>
    %99 = vector.multi_reduction <add>, %96, %cst_46 [1] : vector<16x128xf32> to vector<16xf32>
    %100 = vector.shape_cast %99 : vector<16xf32> to vector<16x1xf32>
    %cst_47 = arith.constant 1.280000e+02 : f32
    %101 = vector.broadcast %cst_47 : f32 to vector<16x1xf32>
    %102 = arith.divf %100, %101 : vector<16x1xf32>
    %103 = vector.broadcast %102 : vector<16x1xf32> to vector<16x128xf32>
    %104 = arith.subf %96, %103 : vector<16x128xf32>
    %105 = arith.mulf %104, %104 : vector<16x128xf32>
    %cst_48 = arith.constant dense<0.000000e+00> : vector<16xf32>
    %106 = vector.multi_reduction <add>, %105, %cst_48 [1] : vector<16x128xf32> to vector<16xf32>
    %107 = vector.shape_cast %106 : vector<16xf32> to vector<16x1xf32>
    %cst_49 = arith.constant 1.280000e+02 : f32
    %108 = vector.broadcast %cst_49 : f32 to vector<16x1xf32>
    %109 = arith.divf %107, %108 : vector<16x1xf32>
    %110 = vector.broadcast %102 : vector<16x1xf32> to vector<16x128xf32>
    %111 = arith.subf %96, %110 : vector<16x128xf32>
    %cst_50 = arith.constant 9.99999974E-6 : f32
    %112 = vector.broadcast %cst_50 : f32 to vector<16x1xf32>
    %113 = arith.addf %109, %112 : vector<16x1xf32>
    %114 = math.rsqrt %113 : vector<16x1xf32>
    %115 = vector.broadcast %114 : vector<16x1xf32> to vector<16x128xf32>
    %116 = arith.mulf %111, %115 : vector<16x128xf32>
    %117 = vector.broadcast %97 : vector<1x128xf32> to vector<16x128xf32>
    %118 = arith.mulf %116, %117 : vector<16x128xf32>
    %119 = vector.broadcast %98 : vector<1x128xf32> to vector<16x128xf32>
    %120 = arith.addf %118, %119 : vector<16x128xf32>
    %121 = arith.truncf %120 : vector<16x128xf32> to vector<16x128xbf16>
    %c0_51 = arith.constant 0 : index
    %c0_52 = arith.constant 0 : index
    %122 = vector.load %arg11[%c0_51, %c0_52] : memref<128x512xbf16, #tpu.memory_space<vmem>>, vector<128x512xbf16>
    %cst_53 = arith.constant dense<0.000000e+00> : vector<16x512xf32>
    %123 = tpu.matmul %121, %122, %cst_53 {dimension_numbers = #tpu.dot_dimension_numbers<[1], [0], [0], [1], [0, 0, 1, 1], [], []>} : vector<16x128xbf16>, vector<128x512xbf16>, vector<16x512xf32> -> vector<16x512xf32>
    %c0_54 = arith.constant 0 : index
    %c0_55 = arith.constant 0 : index
    %124 = vector.load %arg12[%c0_54, %c0_55] : memref<1x512xf32, #tpu.memory_space<vmem>>, vector<1x512xf32>
    %125 = vector.broadcast %124 : vector<1x512xf32> to vector<16x512xf32>
    %126 = arith.addf %123, %125 : vector<16x512xf32>
    %cst_56 = arith.constant 0.000000e+00 : f32
    %127 = vector.broadcast %cst_56 : f32 to vector<16x512xf32>
    %128 = arith.maximumf %126, %127 : vector<16x512xf32>
    %129 = arith.truncf %128 : vector<16x512xf32> to vector<16x512xbf16>
    %c0_57 = arith.constant 0 : index
    %c0_58 = arith.constant 0 : index
    %130 = vector.load %arg13[%c0_57, %c0_58] : memref<512x128xbf16, #tpu.memory_space<vmem>>, vector<512x128xbf16>
    %cst_59 = arith.constant dense<0.000000e+00> : vector<16x128xf32>
    %131 = tpu.matmul %129, %130, %cst_59 {dimension_numbers = #tpu.dot_dimension_numbers<[1], [0], [0], [1], [0, 0, 1, 1], [], []>} : vector<16x512xbf16>, vector<512x128xbf16>, vector<16x128xf32> -> vector<16x128xf32>
    %c0_60 = arith.constant 0 : index
    %c0_61 = arith.constant 0 : index
    %132 = vector.load %arg14[%c0_60, %c0_61] : memref<1x128xf32, #tpu.memory_space<vmem>>, vector<1x128xf32>
    %133 = vector.broadcast %132 : vector<1x128xf32> to vector<16x128xf32>
    %134 = arith.addf %131, %133 : vector<16x128xf32>
    %135 = arith.addf %96, %134 : vector<16x128xf32>
    %c0_62 = arith.constant 0 : index
    %c0_63 = arith.constant 0 : index
    %c0_64 = arith.constant 0 : index
    %136 = vector.load %arg15[%c0_62, %c0_63, %c0_64] : memref<1x16x128xf32, #tpu.memory_space<vmem>>, vector<1x16x128xf32>
    %137 = vector.shape_cast %136 : vector<1x16x128xf32> to vector<16x128xf32>
    %138 = vector.shape_cast %135 : vector<16x128xf32> to vector<1x16x128xf32>
    tpu.vector_store %arg15[%c0_62, %c0_63, %c0_64], %138 {strides = array<i32>} : memref<1x16x128xf32, #tpu.memory_space<vmem>>, vector<1x16x128xf32>,
    return
  }
  func.func @transform_0(%arg0: i32, %arg1: i32) -> (i32, i32, i32) {
    %c0_i32 = arith.constant 0 : i32
    %c0_i32_0 = arith.constant 0 : i32
    return %arg0, %arg1, %c0_i32 : i32, i32, i32
  }
  func.func @transform_1(%arg0: i32, %arg1: i32) -> (i32, i32) {
    %c0_i32 = arith.constant 0 : i32
    %c0_i32_0 = arith.constant 0 : i32
    %c0_i32_1 = arith.constant 0 : i32
    return %c0_i32, %c0_i32_0 : i32, i32
  }
  func.func @transform_2(%arg0: i32, %arg1: i32) -> (i32, i32) {
    %c0_i32 = arith.constant 0 : i32
    %c0_i32_0 = arith.constant 0 : i32
    %c0_i32_1 = arith.constant 0 : i32
    return %c0_i32, %c0_i32_0 : i32, i32
  }
  func.func @transform_3(%arg0: i32, %arg1: i32) -> (i32, i32) {
    %c0_i32 = arith.constant 0 : i32
    %c0_i32_0 = arith.constant 0 : i32
    %c0_i32_1 = arith.constant 0 : i32
    return %c0_i32, %c0_i32_0 : i32, i32
  }
  func.func @transform_4(%arg0: i32, %arg1: i32) -> (i32, i32) {
    %c0_i32 = arith.constant 0 : i32
    %c0_i32_0 = arith.constant 0 : i32
    %c0_i32_1 = arith.constant 0 : i32
    return %c0_i32, %c0_i32_0 : i32, i32
  }
  func.func @transform_5(%arg0: i32, %arg1: i32) -> (i32, i32) {
    %c0_i32 = arith.constant 0 : i32
    %c0_i32_0 = arith.constant 0 : i32
    %c0_i32_1 = arith.constant 0 : i32
    return %c0_i32, %c0_i32_0 : i32, i32
  }
  func.func @transform_6(%arg0: i32, %arg1: i32) -> (i32, i32) {
    %c0_i32 = arith.constant 0 : i32
    %c0_i32_0 = arith.constant 0 : i32
    %c0_i32_1 = arith.constant 0 : i32
    return %c0_i32, %c0_i32_0 : i32, i32
  }
  func.func @transform_7(%arg0: i32, %arg1: i32) -> (i32, i32) {
    %c0_i32 = arith.constant 0 : i32
    %c0_i32_0 = arith.constant 0 : i32
    %c0_i32_1 = arith.constant 0 : i32
    return %c0_i32, %c0_i32_0 : i32, i32
  }
  func.func @transform_8(%arg0: i32, %arg1: i32) -> (i32, i32) {
    %c0_i32 = arith.constant 0 : i32
    %c0_i32_0 = arith.constant 0 : i32
    %c0_i32_1 = arith.constant 0 : i32
    return %c0_i32, %c0_i32_0 : i32, i32
  }
  func.func @transform_9(%arg0: i32, %arg1: i32) -> (i32, i32) {
    %c0_i32 = arith.constant 0 : i32
    %c0_i32_0 = arith.constant 0 : i32
    %c0_i32_1 = arith.constant 0 : i32
    return %c0_i32, %c0_i32_0 : i32, i32
  }
  func.func @transform_10(%arg0: i32, %arg1: i32) -> (i32, i32) {
    %c0_i32 = arith.constant 0 : i32
    %c0_i32_0 = arith.constant 0 : i32
    %c0_i32_1 = arith.constant 0 : i32
    return %c0_i32, %c0_i32_0 : i32, i32
  }
  func.func @transform_11(%arg0: i32, %arg1: i32) -> (i32, i32) {
    %c0_i32 = arith.constant 0 : i32
    %c0_i32_0 = arith.constant 0 : i32
    %c0_i32_1 = arith.constant 0 : i32
    return %c0_i32, %c0_i32_0 : i32, i32
  }
  func.func @transform_12(%arg0: i32, %arg1: i32) -> (i32, i32) {
    %c0_i32 = arith.constant 0 : i32
    %c0_i32_0 = arith.constant 0 : i32
    %c0_i32_1 = arith.constant 0 : i32
    return %c0_i32, %c0_i32_0 : i32, i32
  }
  func.func @transform_13(%arg0: i32, %arg1: i32) -> (i32, i32, i32) {
    %c0_i32 = arith.constant 0 : i32
    %c0_i32_0 = arith.constant 0 : i32
    return %arg0, %arg1, %c0_i32 : i32, i32, i32
  }
}

module attributes {stable_mosaic.version = 11 : i64} {
  func.func @block_kernel(%arg0: i32, %arg1: i32, %arg2: memref<1x16x128xf32, #tpu.memory_space<vmem>>, %arg3: memref<1x128xf32, #tpu.memory_space<vmem>>, %arg4: memref<1x128xf32, #tpu.memory_space<vmem>>, %arg5: memref<128x384xbf16, #tpu.memory_space<vmem>>, %arg6: memref<1x384xf32, #tpu.memory_space<vmem>>, %arg7: memref<128x128xbf16, #tpu.memory_space<vmem>>, %arg8: memref<1x128xf32, #tpu.memory_space<vmem>>, %arg9: memref<1x128xf32, #tpu.memory_space<vmem>>, %arg10: memref<1x128xf32, #tpu.memory_space<vmem>>, %arg11: memref<128x512xbf16, #tpu.memory_space<vmem>>, %arg12: memref<1x512xf32, #tpu.memory_space<vmem>>, %arg13: memref<512x128xbf16, #tpu.memory_space<vmem>>, %arg14: memref<1x128xf32, #tpu.memory_space<vmem>>, %arg15: memref<1x16x128xf32, #tpu.memory_space<vmem>>, %arg16: memref<32x128xbf16, #tpu.memory_space<vmem>>, %arg17: memref<32x128xbf16, #tpu.memory_space<vmem>>) attributes {dimension_semantics = [#tpu.dimension_semantics<parallel>, #tpu.dimension_semantics<arbitrary>], iteration_bounds = array<i64: 2, 2>, scalar_prefetch = 0 : i64, scratch_operands = 2 : i64, tpu.core_type = #tpu.core_type<tc>, window_params = [{transform_indices = @transform_0, window_bounds = array<i64: 1, 16, 128>}, {pipeline_mode = #tpu.pipeline_mode<synchronous>, transform_indices = @transform_1, window_bounds = array<i64: 1, 128>}, {pipeline_mode = #tpu.pipeline_mode<synchronous>, transform_indices = @transform_2, window_bounds = array<i64: 1, 128>}, {pipeline_mode = #tpu.pipeline_mode<synchronous>, transform_indices = @transform_3, window_bounds = array<i64: 128, 384>}, {pipeline_mode = #tpu.pipeline_mode<synchronous>, transform_indices = @transform_4, window_bounds = array<i64: 1, 384>}, {pipeline_mode = #tpu.pipeline_mode<synchronous>, transform_indices = @transform_5, window_bounds = array<i64: 128, 128>}, {pipeline_mode = #tpu.pipeline_mode<synchronous>, transform_indices = @transform_6, window_bounds = array<i64: 1, 128>}, {pipeline_mode = #tpu.pipeline_mode<synchronous>, transform_indices = @transform_7, window_bounds = array<i64: 1, 128>}, {pipeline_mode = #tpu.pipeline_mode<synchronous>, transform_indices = @transform_8, window_bounds = array<i64: 1, 128>}, {pipeline_mode = #tpu.pipeline_mode<synchronous>, transform_indices = @transform_9, window_bounds = array<i64: 128, 512>}, {pipeline_mode = #tpu.pipeline_mode<synchronous>, transform_indices = @transform_10, window_bounds = array<i64: 1, 512>}, {pipeline_mode = #tpu.pipeline_mode<synchronous>, transform_indices = @transform_11, window_bounds = array<i64: 512, 128>}, {pipeline_mode = #tpu.pipeline_mode<synchronous>, transform_indices = @transform_12, window_bounds = array<i64: 1, 128>}, {transform_indices = @transform_13, window_bounds = array<i64: 1, 16, 128>}]} {
    %c16_i32 = arith.constant 16 : i32
    %0 = arith.muli %arg1, %c16_i32 : i32
    %1 = tpu.assume_multiple %0, 16 : i32
    %c0 = arith.constant 0 : index
    %c0_0 = arith.constant 0 : index
    %c0_1 = arith.constant 0 : index
    %2 = vector.load %arg2[%c0, %c0_0, %c0_1] : memref<1x16x128xf32, #tpu.memory_space<vmem>>, vector<1x16x128xf32>
    %3 = vector.shape_cast %2 : vector<1x16x128xf32> to vector<16x128xf32>
    %c0_2 = arith.constant 0 : index
    %c0_3 = arith.constant 0 : index
    %4 = vector.load %arg3[%c0_2, %c0_3] : memref<1x128xf32, #tpu.memory_space<vmem>>, vector<1x128xf32>
    %c0_4 = arith.constant 0 : index
    %c0_5 = arith.constant 0 : index
    %5 = vector.load %arg4[%c0_4, %c0_5] : memref<1x128xf32, #tpu.memory_space<vmem>>, vector<1x128xf32>
    %cst = arith.constant dense<0.000000e+00> : vector<16xf32>
    %6 = vector.multi_reduction <add>, %3, %cst [1] : vector<16x128xf32> to vector<16xf32>
    %7 = vector.shape_cast %6 : vector<16xf32> to vector<16x1xf32>
    %cst_6 = arith.constant 1.280000e+02 : f32
    %8 = vector.broadcast %cst_6 : f32 to vector<16x1xf32>
    %9 = arith.divf %7, %8 : vector<16x1xf32>
    %10 = vector.broadcast %9 : vector<16x1xf32> to vector<16x128xf32>
    %11 = arith.subf %3, %10 : vector<16x128xf32>
    %12 = arith.mulf %11, %11 : vector<16x128xf32>
    %cst_7 = arith.constant dense<0.000000e+00> : vector<16xf32>
    %13 = vector.multi_reduction <add>, %12, %cst_7 [1] : vector<16x128xf32> to vector<16xf32>
    %14 = vector.shape_cast %13 : vector<16xf32> to vector<16x1xf32>
    %cst_8 = arith.constant 1.280000e+02 : f32
    %15 = vector.broadcast %cst_8 : f32 to vector<16x1xf32>
    %16 = arith.divf %14, %15 : vector<16x1xf32>
    %17 = vector.broadcast %9 : vector<16x1xf32> to vector<16x128xf32>
    %18 = arith.subf %3, %17 : vector<16x128xf32>
    %cst_9 = arith.constant 9.99999974E-6 : f32
    %19 = vector.broadcast %cst_9 : f32 to vector<16x1xf32>
    %20 = arith.addf %16, %19 : vector<16x1xf32>
    %21 = math.rsqrt %20 : vector<16x1xf32>
    %22 = vector.broadcast %21 : vector<16x1xf32> to vector<16x128xf32>
    %23 = arith.mulf %18, %22 : vector<16x128xf32>
    %24 = vector.broadcast %4 : vector<1x128xf32> to vector<16x128xf32>
    %25 = arith.mulf %23, %24 : vector<16x128xf32>
    %26 = vector.broadcast %5 : vector<1x128xf32> to vector<16x128xf32>
    %27 = arith.addf %25, %26 : vector<16x128xf32>
    %28 = arith.truncf %27 : vector<16x128xf32> to vector<16x128xbf16>
    %c0_10 = arith.constant 0 : index
    %c0_11 = arith.constant 0 : index
    %29 = vector.load %arg5[%c0_10, %c0_11] : memref<128x384xbf16, #tpu.memory_space<vmem>>, vector<128x384xbf16>
    %cst_12 = arith.constant dense<0.000000e+00> : vector<16x384xf32>
    %30 = tpu.matmul %28, %29, %cst_12 {dimension_numbers = #tpu.dot_dimension_numbers<[1], [0], [0], [1], [0, 0, 1, 1], [], []>} : vector<16x128xbf16>, vector<128x384xbf16>, vector<16x384xf32> -> vector<16x384xf32>
    %c0_13 = arith.constant 0 : index
    %c0_14 = arith.constant 0 : index
    %31 = vector.load %arg6[%c0_13, %c0_14] : memref<1x384xf32, #tpu.memory_space<vmem>>, vector<1x384xf32>
    %32 = vector.broadcast %31 : vector<1x384xf32> to vector<16x384xf32>
    %33 = arith.addf %30, %32 : vector<16x384xf32>
    %34 = vector.extract_strided_slice %33 {offsets = [0, 0], sizes = [16, 128], strides = [1, 1]} : vector<16x384xf32> to vector<16x128xf32>
    %35 = arith.truncf %34 : vector<16x128xf32> to vector<16x128xbf16>
    %36 = vector.extract_strided_slice %33 {offsets = [0, 128], sizes = [16, 128], strides = [1, 1]} : vector<16x384xf32> to vector<16x128xf32>
    %37 = arith.truncf %36 : vector<16x128xf32> to vector<16x128xbf16>
    %38 = vector.extract_strided_slice %33 {offsets = [0, 256], sizes = [16, 128], strides = [1, 1]} : vector<16x384xf32> to vector<16x128xf32>
    %39 = arith.truncf %38 : vector<16x128xf32> to vector<16x128xbf16>
    %40 = arith.index_cast %1 : i32 to index
    %c0_15 = arith.constant 0 : index
    %41 = vector.load %arg16[%40, %c0_15] : memref<32x128xbf16, #tpu.memory_space<vmem>>, vector<16x128xbf16>
    tpu.vector_store %arg16[%40, %c0_15], %37 {strides = array<i32>} : memref<32x128xbf16, #tpu.memory_space<vmem>>, vector<16x128xbf16>,
    %42 = arith.index_cast %1 : i32 to index
    %c0_16 = arith.constant 0 : index
    %43 = vector.load %arg17[%42, %c0_16] : memref<32x128xbf16, #tpu.memory_space<vmem>>, vector<16x128xbf16>
    tpu.vector_store %arg17[%42, %c0_16], %39 {strides = array<i32>} : memref<32x128xbf16, #tpu.memory_space<vmem>>, vector<16x128xbf16>,
    %44 = tpu.iota {dimensions = array<i32: 0>} : vector<16x16xi32>
    %45 = vector.broadcast %1 : i32 to vector<16x16xi32>
    %46 = arith.addi %45, %44 : vector<16x16xi32>
    %47 = tpu.iota {dimensions = array<i32: 1>} : vector<16x16xi32>
    %cst_17 = arith.constant -1.000000e+30 : f32
    %48 = vector.broadcast %cst_17 : f32 to vector<16x1xf32>
    %cst_18 = arith.constant 0.000000e+00 : f32
    %49 = vector.broadcast %cst_18 : f32 to vector<16x1xf32>
    %cst_19 = arith.constant 0.000000e+00 : f32
    %50 = vector.broadcast %cst_19 : f32 to vector<16x32xf32>
    %cst_20 = arith.constant -1.000000e+30 : f32
    %51 = vector.broadcast %cst_20 : f32 to vector<16x1xf32>
    %cst_21 = arith.constant 0.000000e+00 : f32
    %52 = vector.broadcast %cst_21 : f32 to vector<16x1xf32>
    %cst_22 = arith.constant 0.000000e+00 : f32
    %53 = vector.broadcast %cst_22 : f32 to vector<16x32xf32>
    %cst_23 = arith.constant -1.000000e+30 : f32
    %54 = vector.broadcast %cst_23 : f32 to vector<16x1xf32>
    %cst_24 = arith.constant 0.000000e+00 : f32
    %55 = vector.broadcast %cst_24 : f32 to vector<16x1xf32>
    %cst_25 = arith.constant 0.000000e+00 : f32
    %56 = vector.broadcast %cst_25 : f32 to vector<16x32xf32>
    %cst_26 = arith.constant -1.000000e+30 : f32
    %57 = vector.broadcast %cst_26 : f32 to vector<16x1xf32>
    %cst_27 = arith.constant 0.000000e+00 : f32
    %58 = vector.broadcast %cst_27 : f32 to vector<16x1xf32>
    %cst_28 = arith.constant 0.000000e+00 : f32
    %59 = vector.broadcast %cst_28 : f32 to vector<16x32xf32>
    %c1_i32 = arith.constant 1 : i32
    %60 = arith.addi %arg1, %c1_i32 : i32
    %c0_i32 = arith.constant 0 : i32
    %61 = arith.subi %60, %c0_i32 : i32
    %62 = arith.addi %c0_i32, %61 : i32
    %c1_i32_29 = arith.constant 1 : i32
    %63:12 = scf.for %arg18 = %c0_i32 to %62 step %c1_i32_29 iter_args(%arg19 = %48, %arg20 = %49, %arg21 = %50, %arg22 = %51, %arg23 = %52, %arg24 = %53, %arg25 = %54, %arg26 = %55, %arg27 = %56, %arg28 = %57, %arg29 = %58, %arg30 = %59) -> (vector<16x1xf32>, vector<16x1xf32>, vector<16x32xf32>, vector<16x1xf32>, vector<16x1xf32>, vector<16x32xf32>, vector<16x1xf32>, vector<16x1xf32>, vector<16x32xf32>, vector<16x1xf32>, vector<16x1xf32>, vector<16x32xf32>)  : i32 {
      %c16_i32_65 = arith.constant 16 : i32
      %139 = arith.muli %arg18, %c16_i32_65 : i32
      %140 = tpu.assume_multiple %139, 16 : i32
      %141 = arith.index_cast %140 : i32 to index
      %c0_66 = arith.constant 0 : index
      %142 = vector.load %arg16[%141, %c0_66] : memref<32x128xbf16, #tpu.memory_space<vmem>>, vector<16x128xbf16>
      %143 = arith.index_cast %140 : i32 to index
      %c0_67 = arith.constant 0 : index
      %144 = vector.load %arg17[%143, %c0_67] : memref<32x128xbf16, #tpu.memory_space<vmem>>, vector<16x128xbf16>
      %145 = vector.broadcast %140 : i32 to vector<16x16xi32>
      %146 = arith.addi %145, %47 : vector<16x16xi32>
      %147 = arith.cmpi sge, %46, %146 : vector<16x16xi32>
      %148 = vector.extract_strided_slice %35 {offsets = [0, 0], sizes = [16, 32], strides = [1, 1]} : vector<16x128xbf16> to vector<16x32xbf16>
      %149 = vector.extract_strided_slice %142 {offsets = [0, 0], sizes = [16, 32], strides = [1, 1]} : vector<16x128xbf16> to vector<16x32xbf16>
      %cst_68 = arith.constant dense<0.000000e+00> : vector<16x16xf32>
      %150 = tpu.matmul %148, %149, %cst_68 {dimension_numbers = #tpu.dot_dimension_numbers<[1], [1], [0], [0], [0, 0, 1, 0], [], []>} : vector<16x32xbf16>, vector<16x32xbf16>, vector<16x16xf32> -> vector<16x16xf32>
      %cst_69 = arith.constant -1.000000e+30 : f32
      %151 = vector.broadcast %cst_69 : f32 to vector<16x16xf32>
      %152 = arith.select %147, %150, %151 : vector<16x16xi1>, vector<16x16xf32>
      %cst_70 = arith.constant dense<0xFF800000> : vector<16xf32>
      %153 = vector.multi_reduction <maximumf>, %152, %cst_70 [1] : vector<16x16xf32> to vector<16xf32>
      %154 = vector.shape_cast %153 : vector<16xf32> to vector<16x1xf32>
      %155 = arith.maximumf %arg19, %154 : vector<16x1xf32>
      %156 = arith.subf %arg19, %155 : vector<16x1xf32>
      %157 = math.exp %156 : vector<16x1xf32>
      %158 = vector.broadcast %155 : vector<16x1xf32> to vector<16x16xf32>
      %159 = arith.subf %152, %158 : vector<16x16xf32>
      %160 = math.exp %159 : vector<16x16xf32>
      %161 = arith.mulf %157, %arg20 : vector<16x1xf32>
      %cst_71 = arith.constant dense<0.000000e+00> : vector<16xf32>
      %162 = vector.multi_reduction <add>, %160, %cst_71 [1] : vector<16x16xf32> to vector<16xf32>
      %163 = vector.shape_cast %162 : vector<16xf32> to vector<16x1xf32>
      %164 = arith.addf %161, %163 : vector<16x1xf32>
      %165 = vector.broadcast %157 : vector<16x1xf32> to vector<16x32xf32>
      %166 = arith.mulf %165, %arg21 : vector<16x32xf32>
      %167 = arith.truncf %160 : vector<16x16xf32> to vector<16x16xbf16>
      %168 = vector.extract_strided_slice %144 {offsets = [0, 0], sizes = [16, 32], strides = [1, 1]} : vector<16x128xbf16> to vector<16x32xbf16>
      %cst_72 = arith.constant dense<0.000000e+00> : vector<16x32xf32>
      %169 = tpu.matmul %167, %168, %cst_72 {dimension_numbers = #tpu.dot_dimension_numbers<[1], [0], [0], [1], [0, 0, 1, 1], [], []>} : vector<16x16xbf16>, vector<16x32xbf16>, vector<16x32xf32> -> vector<16x32xf32>
      %170 = arith.addf %166, %169 : vector<16x32xf32>
      %171 = vector.extract_strided_slice %35 {offsets = [0, 32], sizes = [16, 32], strides = [1, 1]} : vector<16x128xbf16> to vector<16x32xbf16>
      %172 = vector.extract_strided_slice %142 {offsets = [0, 32], sizes = [16, 32], strides = [1, 1]} : vector<16x128xbf16> to vector<16x32xbf16>
      %cst_73 = arith.constant dense<0.000000e+00> : vector<16x16xf32>
      %173 = tpu.matmul %171, %172, %cst_73 {dimension_numbers = #tpu.dot_dimension_numbers<[1], [1], [0], [0], [0, 0, 1, 0], [], []>} : vector<16x32xbf16>, vector<16x32xbf16>, vector<16x16xf32> -> vector<16x16xf32>
      %cst_74 = arith.constant -1.000000e+30 : f32
      %174 = vector.broadcast %cst_74 : f32 to vector<16x16xf32>
      %175 = arith.select %147, %173, %174 : vector<16x16xi1>, vector<16x16xf32>
      %cst_75 = arith.constant dense<0xFF800000> : vector<16xf32>
      %176 = vector.multi_reduction <maximumf>, %175, %cst_75 [1] : vector<16x16xf32> to vector<16xf32>
      %177 = vector.shape_cast %176 : vector<16xf32> to vector<16x1xf32>
      %178 = arith.maximumf %arg22, %177 : vector<16x1xf32>
      %179 = arith.subf %arg22, %178 : vector<16x1xf32>
      %180 = math.exp %179 : vector<16x1xf32>
      %181 = vector.broadcast %178 : vector<16x1xf32> to vector<16x16xf32>
      %182 = arith.subf %175, %181 : vector<16x16xf32>
      %183 = math.exp %182 : vector<16x16xf32>
      %184 = arith.mulf %180, %arg23 : vector<16x1xf32>
      %cst_76 = arith.constant dense<0.000000e+00> : vector<16xf32>
      %185 = vector.multi_reduction <add>, %183, %cst_76 [1] : vector<16x16xf32> to vector<16xf32>
      %186 = vector.shape_cast %185 : vector<16xf32> to vector<16x1xf32>
      %187 = arith.addf %184, %186 : vector<16x1xf32>
      %188 = vector.broadcast %180 : vector<16x1xf32> to vector<16x32xf32>
      %189 = arith.mulf %188, %arg24 : vector<16x32xf32>
      %190 = arith.truncf %183 : vector<16x16xf32> to vector<16x16xbf16>
      %191 = vector.extract_strided_slice %144 {offsets = [0, 32], sizes = [16, 32], strides = [1, 1]} : vector<16x128xbf16> to vector<16x32xbf16>
      %cst_77 = arith.constant dense<0.000000e+00> : vector<16x32xf32>
      %192 = tpu.matmul %190, %191, %cst_77 {dimension_numbers = #tpu.dot_dimension_numbers<[1], [0], [0], [1], [0, 0, 1, 1], [], []>} : vector<16x16xbf16>, vector<16x32xbf16>, vector<16x32xf32> -> vector<16x32xf32>
      %193 = arith.addf %189, %192 : vector<16x32xf32>
      %194 = vector.extract_strided_slice %35 {offsets = [0, 64], sizes = [16, 32], strides = [1, 1]} : vector<16x128xbf16> to vector<16x32xbf16>
      %195 = vector.extract_strided_slice %142 {offsets = [0, 64], sizes = [16, 32], strides = [1, 1]} : vector<16x128xbf16> to vector<16x32xbf16>
      %cst_78 = arith.constant dense<0.000000e+00> : vector<16x16xf32>
      %196 = tpu.matmul %194, %195, %cst_78 {dimension_numbers = #tpu.dot_dimension_numbers<[1], [1], [0], [0], [0, 0, 1, 0], [], []>} : vector<16x32xbf16>, vector<16x32xbf16>, vector<16x16xf32> -> vector<16x16xf32>
      %cst_79 = arith.constant -1.000000e+30 : f32
      %197 = vector.broadcast %cst_79 : f32 to vector<16x16xf32>
      %198 = arith.select %147, %196, %197 : vector<16x16xi1>, vector<16x16xf32>
      %cst_80 = arith.constant dense<0xFF800000> : vector<16xf32>
      %199 = vector.multi_reduction <maximumf>, %198, %cst_80 [1] : vector<16x16xf32> to vector<16xf32>
      %200 = vector.shape_cast %199 : vector<16xf32> to vector<16x1xf32>
      %201 = arith.maximumf %arg25, %200 : vector<16x1xf32>
      %202 = arith.subf %arg25, %201 : vector<16x1xf32>
      %203 = math.exp %202 : vector<16x1xf32>
      %204 = vector.broadcast %201 : vector<16x1xf32> to vector<16x16xf32>
      %205 = arith.subf %198, %204 : vector<16x16xf32>
      %206 = math.exp %205 : vector<16x16xf32>
      %207 = arith.mulf %203, %arg26 : vector<16x1xf32>
      %cst_81 = arith.constant dense<0.000000e+00> : vector<16xf32>
      %208 = vector.multi_reduction <add>, %206, %cst_81 [1] : vector<16x16xf32> to vector<16xf32>
      %209 = vector.shape_cast %208 : vector<16xf32> to vector<16x1xf32>
      %210 = arith.addf %207, %209 : vector<16x1xf32>
      %211 = vector.broadcast %203 : vector<16x1xf32> to vector<16x32xf32>
      %212 = arith.mulf %211, %arg27 : vector<16x32xf32>
      %213 = arith.truncf %206 : vector<16x16xf32> to vector<16x16xbf16>
      %214 = vector.extract_strided_slice %144 {offsets = [0, 64], sizes = [16, 32], strides = [1, 1]} : vector<16x128xbf16> to vector<16x32xbf16>
      %cst_82 = arith.constant dense<0.000000e+00> : vector<16x32xf32>
      %215 = tpu.matmul %213, %214, %cst_82 {dimension_numbers = #tpu.dot_dimension_numbers<[1], [0], [0], [1], [0, 0, 1, 1], [], []>} : vector<16x16xbf16>, vector<16x32xbf16>, vector<16x32xf32> -> vector<16x32xf32>
      %216 = arith.addf %212, %215 : vector<16x32xf32>
      %217 = vector.extract_strided_slice %35 {offsets = [0, 96], sizes = [16, 32], strides = [1, 1]} : vector<16x128xbf16> to vector<16x32xbf16>
      %218 = vector.extract_strided_slice %142 {offsets = [0, 96], sizes = [16, 32], strides = [1, 1]} : vector<16x128xbf16> to vector<16x32xbf16>
      %cst_83 = arith.constant dense<0.000000e+00> : vector<16x16xf32>
      %219 = tpu.matmul %217, %218, %cst_83 {dimension_numbers = #tpu.dot_dimension_numbers<[1], [1], [0], [0], [0, 0, 1, 0], [], []>} : vector<16x32xbf16>, vector<16x32xbf16>, vector<16x16xf32> -> vector<16x16xf32>
      %cst_84 = arith.constant -1.000000e+30 : f32
      %220 = vector.broadcast %cst_84 : f32 to vector<16x16xf32>
      %221 = arith.select %147, %219, %220 : vector<16x16xi1>, vector<16x16xf32>
      %cst_85 = arith.constant dense<0xFF800000> : vector<16xf32>
      %222 = vector.multi_reduction <maximumf>, %221, %cst_85 [1] : vector<16x16xf32> to vector<16xf32>
      %223 = vector.shape_cast %222 : vector<16xf32> to vector<16x1xf32>
      %224 = arith.maximumf %arg28, %223 : vector<16x1xf32>
      %225 = arith.subf %arg28, %224 : vector<16x1xf32>
      %226 = math.exp %225 : vector<16x1xf32>
      %227 = vector.broadcast %224 : vector<16x1xf32> to vector<16x16xf32>
      %228 = arith.subf %221, %227 : vector<16x16xf32>
      %229 = math.exp %228 : vector<16x16xf32>
      %230 = arith.mulf %226, %arg29 : vector<16x1xf32>
      %cst_86 = arith.constant dense<0.000000e+00> : vector<16xf32>
      %231 = vector.multi_reduction <add>, %229, %cst_86 [1] : vector<16x16xf32> to vector<16xf32>
      %232 = vector.shape_cast %231 : vector<16xf32> to vector<16x1xf32>
      %233 = arith.addf %230, %232 : vector<16x1xf32>
      %234 = vector.broadcast %226 : vector<16x1xf32> to vector<16x32xf32>
      %235 = arith.mulf %234, %arg30 : vector<16x32xf32>
      %236 = arith.truncf %229 : vector<16x16xf32> to vector<16x16xbf16>
      %237 = vector.extract_strided_slice %144 {offsets = [0, 96], sizes = [16, 32], strides = [1, 1]} : vector<16x128xbf16> to vector<16x32xbf16>
      %cst_87 = arith.constant dense<0.000000e+00> : vector<16x32xf32>
      %238 = tpu.matmul %236, %237, %cst_87 {dimension_numbers = #tpu.dot_dimension_numbers<[1], [0], [0], [1], [0, 0, 1, 1], [], []>} : vector<16x16xbf16>, vector<16x32xbf16>, vector<16x32xf32> -> vector<16x32xf32>
      %239 = arith.addf %235, %238 : vector<16x32xf32>
      scf.yield %155, %164, %170, %178, %187, %193, %201, %210, %216, %224, %233, %239 : vector<16x1xf32>, vector<16x1xf32>, vector<16x32xf32>, vector<16x1xf32>, vector<16x1xf32>, vector<16x32xf32>, vector<16x1xf32>, vector<16x1xf32>, vector<16x32xf32>, vector<16x1xf32>, vector<16x1xf32>, vector<16x32xf32>
    }
    %cst_30 = arith.constant 0.000000e+00 : f32
    %64 = vector.broadcast %cst_30 : f32 to vector<16x128xf32>
    %65 = tpu.reciprocal %63#1 {approx = true} : vector<16x1xf32> -> vector<16x1xf32>
    %66 = vector.broadcast %65 : vector<16x1xf32> to vector<16x32xf32>
    %67 = arith.mulf %63#2, %66 : vector<16x32xf32>
    %68 = arith.truncf %67 : vector<16x32xf32> to vector<16x32xbf16>
    %c0_31 = arith.constant 0 : index
    %c0_32 = arith.constant 0 : index
    %69 = vector.load %arg7[%c0_31, %c0_32] : memref<128x128xbf16, #tpu.memory_space<vmem>>, vector<32x128xbf16>
    %cst_33 = arith.constant dense<0.000000e+00> : vector<16x128xf32>
    %70 = tpu.matmul %68, %69, %cst_33 {dimension_numbers = #tpu.dot_dimension_numbers<[1], [0], [0], [1], [0, 0, 1, 1], [], []>} : vector<16x32xbf16>, vector<32x128xbf16>, vector<16x128xf32> -> vector<16x128xf32>
    %71 = arith.addf %64, %70 : vector<16x128xf32>
    %72 = tpu.reciprocal %63#4 {approx = true} : vector<16x1xf32> -> vector<16x1xf32>
    %73 = vector.broadcast %72 : vector<16x1xf32> to vector<16x32xf32>
    %74 = arith.mulf %63#5, %73 : vector<16x32xf32>
    %75 = arith.truncf %74 : vector<16x32xf32> to vector<16x32xbf16>
    %c32 = arith.constant 32 : index
    %c0_34 = arith.constant 0 : index
    %76 = vector.load %arg7[%c32, %c0_34] : memref<128x128xbf16, #tpu.memory_space<vmem>>, vector<32x128xbf16>
    %cst_35 = arith.constant dense<0.000000e+00> : vector<16x128xf32>
    %77 = tpu.matmul %75, %76, %cst_35 {dimension_numbers = #tpu.dot_dimension_numbers<[1], [0], [0], [1], [0, 0, 1, 1], [], []>} : vector<16x32xbf16>, vector<32x128xbf16>, vector<16x128xf32> -> vector<16x128xf32>
    %78 = arith.addf %71, %77 : vector<16x128xf32>
    %79 = tpu.reciprocal %63#7 {approx = true} : vector<16x1xf32> -> vector<16x1xf32>
    %80 = vector.broadcast %79 : vector<16x1xf32> to vector<16x32xf32>
    %81 = arith.mulf %63#8, %80 : vector<16x32xf32>
    %82 = arith.truncf %81 : vector<16x32xf32> to vector<16x32xbf16>
    %c64 = arith.constant 64 : index
    %c0_36 = arith.constant 0 : index
    %83 = vector.load %arg7[%c64, %c0_36] : memref<128x128xbf16, #tpu.memory_space<vmem>>, vector<32x128xbf16>
    %cst_37 = arith.constant dense<0.000000e+00> : vector<16x128xf32>
    %84 = tpu.matmul %82, %83, %cst_37 {dimension_numbers = #tpu.dot_dimension_numbers<[1], [0], [0], [1], [0, 0, 1, 1], [], []>} : vector<16x32xbf16>, vector<32x128xbf16>, vector<16x128xf32> -> vector<16x128xf32>
    %85 = arith.addf %78, %84 : vector<16x128xf32>
    %86 = tpu.reciprocal %63#10 {approx = true} : vector<16x1xf32> -> vector<16x1xf32>
    %87 = vector.broadcast %86 : vector<16x1xf32> to vector<16x32xf32>
    %88 = arith.mulf %63#11, %87 : vector<16x32xf32>
    %89 = arith.truncf %88 : vector<16x32xf32> to vector<16x32xbf16>
    %c96 = arith.constant 96 : index
    %c0_38 = arith.constant 0 : index
    %90 = vector.load %arg7[%c96, %c0_38] : memref<128x128xbf16, #tpu.memory_space<vmem>>, vector<32x128xbf16>
    %cst_39 = arith.constant dense<0.000000e+00> : vector<16x128xf32>
    %91 = tpu.matmul %89, %90, %cst_39 {dimension_numbers = #tpu.dot_dimension_numbers<[1], [0], [0], [1], [0, 0, 1, 1], [], []>} : vector<16x32xbf16>, vector<32x128xbf16>, vector<16x128xf32> -> vector<16x128xf32>
    %92 = arith.addf %85, %91 : vector<16x128xf32>
    %93 = arith.addf %3, %92 : vector<16x128xf32>
    %c0_40 = arith.constant 0 : index
    %c0_41 = arith.constant 0 : index
    %94 = vector.load %arg8[%c0_40, %c0_41] : memref<1x128xf32, #tpu.memory_space<vmem>>, vector<1x128xf32>
    %95 = vector.broadcast %94 : vector<1x128xf32> to vector<16x128xf32>
    %96 = arith.addf %93, %95 : vector<16x128xf32>
    %c0_42 = arith.constant 0 : index
    %c0_43 = arith.constant 0 : index
    %97 = vector.load %arg9[%c0_42, %c0_43] : memref<1x128xf32, #tpu.memory_space<vmem>>, vector<1x128xf32>
    %c0_44 = arith.constant 0 : index
    %c0_45 = arith.constant 0 : index
    %98 = vector.load %arg10[%c0_44, %c0_45] : memref<1x128xf32, #tpu.memory_space<vmem>>, vector<1x128xf32>
    %cst_46 = arith.constant dense<0.000000e+00> : vector<16xf32>
    %99 = vector.multi_reduction <add>, %96, %cst_46 [1] : vector<16x128xf32> to vector<16xf32>
    %100 = vector.shape_cast %99 : vector<16xf32> to vector<16x1xf32>
    %cst_47 = arith.constant 1.280000e+02 : f32
    %101 = vector.broadcast %cst_47 : f32 to vector<16x1xf32>
    %102 = arith.divf %100, %101 : vector<16x1xf32>
    %103 = vector.broadcast %102 : vector<16x1xf32> to vector<16x128xf32>
    %104 = arith.subf %96, %103 : vector<16x128xf32>
    %105 = arith.mulf %104, %104 : vector<16x128xf32>
    %cst_48 = arith.constant dense<0.000000e+00> : vector<16xf32>
    %106 = vector.multi_reduction <add>, %105, %cst_48 [1] : vector<16x128xf32> to vector<16xf32>
    %107 = vector.shape_cast %106 : vector<16xf32> to vector<16x1xf32>
    %cst_49 = arith.constant 1.280000e+02 : f32
    %108 = vector.broadcast %cst_49 : f32 to vector<16x1xf32>
    %109 = arith.divf %107, %108 : vector<16x1xf32>
    %110 = vector.broadcast %102 : vector<16x1xf32> to vector<16x128xf32>
    %111 = arith.subf %96, %110 : vector<16x128xf32>
    %cst_50 = arith.constant 9.99999974E-6 : f32
    %112 = vector.broadcast %cst_50 : f32 to vector<16x1xf32>
    %113 = arith.addf %109, %112 : vector<16x1xf32>
    %114 = math.rsqrt %113 : vector<16x1xf32>
    %115 = vector.broadcast %114 : vector<16x1xf32> to vector<16x128xf32>
    %116 = arith.mulf %111, %115 : vector<16x128xf32>
    %117 = vector.broadcast %97 : vector<1x128xf32> to vector<16x128xf32>
    %118 = arith.mulf %116, %117 : vector<16x128xf32>
    %119 = vector.broadcast %98 : vector<1x128xf32> to vector<16x128xf32>
    %120 = arith.addf %118, %119 : vector<16x128xf32>
    %121 = arith.truncf %120 : vector<16x128xf32> to vector<16x128xbf16>
    %c0_51 = arith.constant 0 : index
    %c0_52 = arith.constant 0 : index
    %122 = vector.load %arg11[%c0_51, %c0_52] : memref<128x512xbf16, #tpu.memory_space<vmem>>, vector<128x512xbf16>
    %cst_53 = arith.constant dense<0.000000e+00> : vector<16x512xf32>
    %123 = tpu.matmul %121, %122, %cst_53 {dimension_numbers = #tpu.dot_dimension_numbers<[1], [0], [0], [1], [0, 0, 1, 1], [], []>} : vector<16x128xbf16>, vector<128x512xbf16>, vector<16x512xf32> -> vector<16x512xf32>
    %c0_54 = arith.constant 0 : index
    %c0_55 = arith.constant 0 : index
    %124 = vector.load %arg12[%c0_54, %c0_55] : memref<1x512xf32, #tpu.memory_space<vmem>>, vector<1x512xf32>
    %125 = vector.broadcast %124 : vector<1x512xf32> to vector<16x512xf32>
    %126 = arith.addf %123, %125 : vector<16x512xf32>
    %cst_56 = arith.constant 0.000000e+00 : f32
    %127 = vector.broadcast %cst_56 : f32 to vector<16x512xf32>
    %128 = arith.maximumf %126, %127 : vector<16x512xf32>
    %129 = arith.truncf %128 : vector<16x512xf32> to vector<16x512xbf16>
    %c0_57 = arith.constant 0 : index
    %c0_58 = arith.constant 0 : index
    %130 = vector.load %arg13[%c0_57, %c0_58] : memref<512x128xbf16, #tpu.memory_space<vmem>>, vector<512x128xbf16>
    %cst_59 = arith.constant dense<0.000000e+00> : vector<16x128xf32>
    %131 = tpu.matmul %129, %130, %cst_59 {dimension_numbers = #tpu.dot_dimension_numbers<[1], [0], [0], [1], [0, 0, 1, 1], [], []>} : vector<16x512xbf16>, vector<512x128xbf16>, vector<16x128xf32> -> vector<16x128xf32>
    %c0_60 = arith.constant 0 : index
    %c0_61 = arith.constant 0 : index
    %132 = vector.load %arg14[%c0_60, %c0_61] : memref<1x128xf32, #tpu.memory_space<vmem>>, vector<1x128xf32>
    %133 = vector.broadcast %132 : vector<1x128xf32> to vector<16x128xf32>
    %134 = arith.addf %131, %133 : vector<16x128xf32>
    %135 = arith.addf %96, %134 : vector<16x128xf32>
    %c0_62 = arith.constant 0 : index
    %c0_63 = arith.constant 0 : index
    %c0_64 = arith.constant 0 : index
    %136 = vector.load %arg15[%c0_62, %c0_63, %c0_64] : memref<1x16x128xf32, #tpu.memory_space<vmem>>, vector<1x16x128xf32>
    %137 = vector.shape_cast %136 : vector<1x16x128xf32> to vector<16x128xf32>
    %138 = vector.shape_cast %135 : vector<16x128xf32> to vector<1x16x128xf32>
    tpu.vector_store %arg15[%c0_62, %c0_63, %c0_64], %138 {strides = array<i32>} : memref<1x16x128xf32, #tpu.memory_space<vmem>>, vector<1x16x128xf32>,
    return
  }
  func.func @transform_0(%arg0: i32, %arg1: i32) -> (i32, i32, i32) {
    %c0_i32 = arith.constant 0 : i32
    %c0_i32_0 = arith.constant 0 : i32
    return %arg0, %arg1, %c0_i32 : i32, i32, i32
  }
  func.func @transform_1(%arg0: i32, %arg1: i32) -> (i32, i32) {
    %c0_i32 = arith.constant 0 : i32
    %c0_i32_0 = arith.constant 0 : i32
    %c0_i32_1 = arith.constant 0 : i32
    return %c0_i32, %c0_i32_0 : i32, i32
  }
  func.func @transform_2(%arg0: i32, %arg1: i32) -> (i32, i32) {
    %c0_i32 = arith.constant 0 : i32
    %c0_i32_0 = arith.constant 0 : i32
    %c0_i32_1 = arith.constant 0 : i32
    return %c0_i32, %c0_i32_0 : i32, i32
  }
  func.func @transform_3(%arg0: i32, %arg1: i32) -> (i32, i32) {
    %c0_i32 = arith.constant 0 : i32
    %c0_i32_0 = arith.constant 0 : i32
    %c0_i32_1 = arith.constant 0 : i32
    return %c0_i32, %c0_i32_0 : i32, i32
  }
  func.func @transform_4(%arg0: i32, %arg1: i32) -> (i32, i32) {
    %c0_i32 = arith.constant 0 : i32
    %c0_i32_0 = arith.constant 0 : i32
    %c0_i32_1 = arith.constant 0 : i32
    return %c0_i32, %c0_i32_0 : i32, i32
  }
  func.func @transform_5(%arg0: i32, %arg1: i32) -> (i32, i32) {
    %c0_i32 = arith.constant 0 : i32
    %c0_i32_0 = arith.constant 0 : i32
    %c0_i32_1 = arith.constant 0 : i32
    return %c0_i32, %c0_i32_0 : i32, i32
  }
  func.func @transform_6(%arg0: i32, %arg1: i32) -> (i32, i32) {
    %c0_i32 = arith.constant 0 : i32
    %c0_i32_0 = arith.constant 0 : i32
    %c0_i32_1 = arith.constant 0 : i32
    return %c0_i32, %c0_i32_0 : i32, i32
  }
  func.func @transform_7(%arg0: i32, %arg1: i32) -> (i32, i32) {
    %c0_i32 = arith.constant 0 : i32
    %c0_i32_0 = arith.constant 0 : i32
    %c0_i32_1 = arith.constant 0 : i32
    return %c0_i32, %c0_i32_0 : i32, i32
  }
  func.func @transform_8(%arg0: i32, %arg1: i32) -> (i32, i32) {
    %c0_i32 = arith.constant 0 : i32
    %c0_i32_0 = arith.constant 0 : i32
    %c0_i32_1 = arith.constant 0 : i32
    return %c0_i32, %c0_i32_0 : i32, i32
  }
  func.func @transform_9(%arg0: i32, %arg1: i32) -> (i32, i32) {
    %c0_i32 = arith.constant 0 : i32
    %c0_i32_0 = arith.constant 0 : i32
    %c0_i32_1 = arith.constant 0 : i32
    return %c0_i32, %c0_i32_0 : i32, i32
  }
  func.func @transform_10(%arg0: i32, %arg1: i32) -> (i32, i32) {
    %c0_i32 = arith.constant 0 : i32
    %c0_i32_0 = arith.constant 0 : i32
    %c0_i32_1 = arith.constant 0 : i32
    return %c0_i32, %c0_i32_0 : i32, i32
  }
  func.func @transform_11(%arg0: i32, %arg1: i32) -> (i32, i32) {
    %c0_i32 = arith.constant 0 : i32
    %c0_i32_0 = arith.constant 0 : i32
    %c0_i32_1 = arith.constant 0 : i32
    return %c0_i32, %c0_i32_0 : i32, i32
  }
  func.func @transform_12(%arg0: i32, %arg1: i32) -> (i32, i32) {
    %c0_i32 = arith.constant 0 : i32
    %c0_i32_0 = arith.constant 0 : i32
    %c0_i32_1 = arith.constant 0 : i32
    return %c0_i32, %c0_i32_0 : i32, i32
  }
  func.func @transform_13(%arg0: i32, %arg1: i32) -> (i32, i32, i32) {
    %c0_i32 = arith.constant 0 : i32
    %c0_i32_0 = arith.constant 0 : i32
    return %arg0, %arg1, %c0_i32 : i32, i32, i32
  }
}

</mosaic_0001>

<llo_original>
// kernel: tpu_custom_call.1
$region0: #{tpu_custom_call.1}
  #allocation0 [shape = 'u32[]', space=smem, size = 0x4, offset = 0x4, fixed_abs, tag = 'smem constant byte address 0x4 - core index']
  #allocation1 [shape = 'u32[144,128]{1,0:T(1,128)}', space=vmem, size = 0x12000, scoped, tag = 'internal scratch']
  #allocation2 [shape = 'bf16[32,128]{1,0:T(16,128)(2,1)}', space=vmem, size = 0x2000, scoped, tag = 'scratch operand']
  #allocation3 [shape = 'bf16[32,128]{1,0:T(16,128)(2,1)}', space=vmem, size = 0x2000, scoped, tag = 'scratch operand']
  %s0 = inlined_call_operand.hbm [shape: f32[2,32,128], index: 0, kind: input, shape index: {}]
  %s1 = inlined_call_operand.hbm [shape: f32[1,128], index: 1, kind: input, shape index: {}]
  %s2 = inlined_call_operand.hbm [shape: f32[1,128], index: 2, kind: input, shape index: {}]
  %s3 = inlined_call_operand.hbm [shape: bf16[128,384], index: 3, kind: input, shape index: {}]
  %s4 = inlined_call_operand.vmem [shape: f32[1,384], index: 4, kind: input, shape index: {}]
  %s5 = inlined_call_operand.hbm [shape: bf16[128,128], index: 5, kind: input, shape index: {}]
  %s6 = inlined_call_operand.vmem [shape: f32[1,128], index: 6, kind: input, shape index: {}]
  %s7 = inlined_call_operand.vmem [shape: f32[1,128], index: 7, kind: input, shape index: {}]
  %s8 = inlined_call_operand.vmem [shape: f32[1,128], index: 8, kind: input, shape index: {}]
  %s9 = inlined_call_operand.hbm [shape: bf16[128,512], index: 9, kind: input, shape index: {}]
  %s10 = inlined_call_operand.vmem [shape: f32[1,512], index: 10, kind: input, shape index: {}]
  %s11 = inlined_call_operand.hbm [shape: bf16[512,128], index: 11, kind: input, shape index: {}]
  %s12 = inlined_call_operand.vmem [shape: f32[1,128], index: 12, kind: input, shape index: {}]
  %s13 = inlined_call_operand.hbm [shape: f32[2,32,128], index: 13, kind: output, shape index: {}]
  %s14 = sld [smem:[#allocation0]]
  $region120: #{tpu_custom_call.1} parent=0
    _
  %s16 = ssub.s32 1, %s14
  %s17 = scalar_select 0, %s16, %s14
  $region1: #{tpu_custom_call.1} parent=0
    #allocation4 [shape = 'u8[16384]{0}', space=vmem, size = 0x4000, scoped, tag = 'input window, operand 0']
    #allocation5 [shape = 's32[2]{0}', space=sflag, size = 0x8, scoped, tag = 'scoped memory for tpu_custom_call.1']
    #allocation6 [shape = 's32[2]{0}', space=sflag, size = 0x8, scoped, tag = 'scoped memory for tpu_custom_call.1']
    #allocation7 [shape = 'u8[512]{0}', space=vmem, size = 0x400, scoped, tag = 'input window, operand 1, single buffered']
    #allocation8 [shape = 's32[1]{0}', space=sflag, size = 0x4, scoped, tag = 'scoped memory for tpu_custom_call.1']
    #allocation9 [shape = 'u8[512]{0}', space=vmem, size = 0x400, scoped, tag = 'input window, operand 2, single buffered']
    #allocation10 [shape = 'u8[98304]{0}', space=vmem, size = 0x18000, scoped, tag = 'input window, operand 3, single buffered']
    #allocation11 [shape = 's32[1]{0}', space=sflag, size = 0x4, scoped, tag = 'scoped memory for tpu_custom_call.1']
    #allocation12 [shape = 'u8[32768]{0}', space=vmem, size = 0x8000, scoped, tag = 'input window, operand 5, single buffered']
    #allocation13 [shape = 'u8[131072]{0}', space=vmem, size = 0x20000, scoped, tag = 'input window, operand 9, single buffered']
    #allocation14 [shape = 's32[1]{0}', space=sflag, size = 0x4, scoped, tag = 'scoped memory for tpu_custom_call.1']
    #allocation15 [shape = 'u8[131072]{0}', space=vmem, size = 0x20000, scoped, tag = 'input window, operand 11, single buffered']
    #allocation16 [shape = 'u8[16384]{0}', space=vmem, size = 0x4000, scoped, tag = 'output window, operand 0']
    %18 = vsyncpa [#allocation5], 0
    %s19 = scalar_lea.sflag [#allocation5], 1
    %20 = vsyncpa %s19, 0
    %21 = vsyncpa [#allocation8], 0
    %22 = vsyncpa [#allocation11], 0
    %23 = vsyncpa [#allocation14], 0
    %24 = vsyncpa [#allocation6], 0
    %s25 = scalar_lea.sflag [#allocation6], 1
    %26 = vsyncpa %s25, 0
    loop: start=0, step=1, limit=6
    $region2: #{tpu_custom_call.1} parent=1 // loop_pre_header
      _
    $region3: #{tpu_custom_call.1} parent=1 // loop_header
      %s28 = sphi 0, %s32
      %p29 = scmp.ge.s32.totalorder %s28, 6
      %s35 = sphi 0, %s47
      %s36 = sphi 0, %s43
      %s37 = sphi 0, %s35
      %s38 = sphi 0, %s36
      %s39 = sphi 0, %s37
      %s40 = sphi 0, %s38
      %s52 = sphi 0, %s54
      %s55 = sphi 0, %s52
      %s56 = sphi 0, %s55
      %s72 = sphi 0, %s56
      %s76 = sphi 0, %s76
      %s78 = sphi 0, %s76
      %s79 = sphi 0, %s78
      %s93 = sphi 0, %s79
      %s97 = sphi 0, %s97
      %s99 = sphi 0, %s97
      %s100 = sphi 0, %s99
      %s114 = sphi 0, %s100
      %s118 = sphi 0, %s118
      %s120 = sphi 0, %s118
      %s121 = sphi 0, %s120
      %s135 = sphi 0, %s121
      %s139 = sphi 0, %s139
      %s141 = sphi 0, %s139
      %s142 = sphi 0, %s141
      %s156 = sphi 0, %s142
      %s160 = sphi 0, %s160
      %s162 = sphi 0, %s160
      %s163 = sphi 0, %s162
      %s177 = sphi 0, %s163
      %s181 = sphi 0, %s181
      %s183 = sphi 0, %s181
      %s184 = sphi 0, %s183
      %s198 = sphi 0, %s184
      %s202 = sphi 0, %s202
      %s204 = sphi 0, %s202
      %s205 = sphi 0, %s204
      %s219 = sphi 0, %s205
      %s223 = sphi 0, %s223
      %s225 = sphi 0, %s223
      %s226 = sphi 0, %s225
      %s240 = sphi 0, %s226
      %s244 = sphi 0, %s244
      %s246 = sphi 0, %s244
      %s247 = sphi 0, %s246
      %s261 = sphi 0, %s247
      %s265 = sphi 0, %s265
      %s267 = sphi 0, %s265
      %s268 = sphi 0, %s267
      %s282 = sphi 0, %s268
      %s286 = sphi 0, %s286
      %s288 = sphi 0, %s286
      %s289 = sphi 0, %s288
      %s303 = sphi 0, %s289
      %s307 = sphi 0, %s307
      %s309 = sphi 0, %s307
      %s310 = sphi 0, %s309
      %s324 = sphi 0, %s310
      %s332 = sphi 0, %s334
      %s335 = sphi 0, %s332
      %s336 = sphi 0, %s335
      %s352 = sphi 0, %s336
    $region4: #{tpu_custom_call.1} parent=1 // loop_header_branch
      %31 = sbr.rel (%p29) target = $region8
    $region5: #{tpu_custom_call.1} parent=1 // loop_body
      %s33 = ssub.s32 %s28, 1
      %s34 = ssub.s32 %s28, 2
      %s41 = sadd.s32 1, %s36
      %p42 = scmp.ge.s32.totalorder %s41, 2
      %s43 = scalar_select %p42, 0, %s41
      %s44 = sadd.s32 1, %s35
      %s45 = scalar_select %p42, %s44, %s35
      %p46 = scmp.ge.s32.totalorder %s45, 2
      %s47 = scalar_select %p46, 0, %s45
      %s48 = ssub.s32 %s35, %s47
      %s49 = ssub.s32 %s36, %s43
      %s50 = sor.u32 %s48, %s49
      %p51 = scmp.eq.s32.totalorder %s50, 0
      %s53 = sadd.s32 %s52, 1
      %s54 = scalar_select %p51, %s52, %s53
      %p57 = pneg %p51
      %p58 = scmp.eq.s32.totalorder %s28, 3
      %p59 = por %p57, %p58
      %p60 = scmp.ne.s32.totalorder %s52, %s55
      %p61 = scmp.eq.s32.totalorder %s28, 0
      %p62 = por %p60, %p61
      %p63 = scmp.ne.s32.totalorder %s52, %s55
      %p64 = scmp.eq.s32.totalorder %s33, 3
      %p65 = por %p63, %p64
      %p66 = scmp.ne.s32.totalorder %s55, %s56
      %p67 = scmp.eq.s32.totalorder %s33, 0
      %p68 = por %p66, %p67
      %p69 = scmp.ne.s32.totalorder %s55, %s56
      %p70 = scmp.eq.s32.totalorder %s34, 3
      %p71 = por %p69, %p70
      %p73 = scmp.ne.s32.totalorder %s56, %s72
      %p74 = scmp.eq.s32.totalorder %s34, 0
      %p75 = por %p73, %p74
      %s77 = sadd.s32 %s76, 1
      %p80 = scmp.eq.s32.totalorder %s28, 3
      %p81 = scmp.ne.s32.totalorder %s76, %s78
      %p82 = scmp.eq.s32.totalorder %s28, 0
      %p83 = por %p81, %p82
      %p84 = scmp.ne.s32.totalorder %s76, %s78
      %p85 = scmp.eq.s32.totalorder %s33, 3
      %p86 = por %p84, %p85
      %p87 = scmp.ne.s32.totalorder %s78, %s79
      %p88 = scmp.eq.s32.totalorder %s33, 0
      %p89 = por %p87, %p88
      %p90 = scmp.ne.s32.totalorder %s78, %s79
      %p91 = scmp.eq.s32.totalorder %s34, 3
      %p92 = por %p90, %p91
      %p94 = scmp.ne.s32.totalorder %s79, %s93
      %p95 = scmp.eq.s32.totalorder %s34, 0
      %p96 = por %p94, %p95
      %s98 = sadd.s32 %s97, 1
      %p101 = scmp.eq.s32.totalorder %s28, 3
      %p102 = scmp.ne.s32.totalorder %s97, %s99
      %p103 = scmp.eq.s32.totalorder %s28, 0
      %p104 = por %p102, %p103
      %p105 = scmp.ne.s32.totalorder %s97, %s99
      %p106 = scmp.eq.s32.totalorder %s33, 3
      %p107 = por %p105, %p106
      %p108 = scmp.ne.s32.totalorder %s99, %s100
      %p109 = scmp.eq.s32.totalorder %s33, 0
      %p110 = por %p108, %p109
      %p111 = scmp.ne.s32.totalorder %s99, %s100
      %p112 = scmp.eq.s32.totalorder %s34, 3
      %p113 = por %p111, %p112
      %p115 = scmp.ne.s32.totalorder %s100, %s114
      %p116 = scmp.eq.s32.totalorder %s34, 0
      %p117 = por %p115, %p116
      %s119 = sadd.s32 %s118, 1
      %p122 = scmp.eq.s32.totalorder %s28, 3
      %p123 = scmp.ne.s32.totalorder %s118, %s120
      %p124 = scmp.eq.s32.totalorder %s28, 0
      %p125 = por %p123, %p124
      %p126 = scmp.ne.s32.totalorder %s118, %s120
      %p127 = scmp.eq.s32.totalorder %s33, 3
      %p128 = por %p126, %p127
      %p129 = scmp.ne.s32.totalorder %s120, %s121
      %p130 = scmp.eq.s32.totalorder %s33, 0
      %p131 = por %p129, %p130
      %p132 = scmp.ne.s32.totalorder %s120, %s121
      %p133 = scmp.eq.s32.totalorder %s34, 3
      %p134 = por %p132, %p133
      %p136 = scmp.ne.s32.totalorder %s121, %s135
      %p137 = scmp.eq.s32.totalorder %s34, 0
      %p138 = por %p136, %p137
      %s140 = sadd.s32 %s139, 1
      %p143 = scmp.eq.s32.totalorder %s28, 3
      %p144 = scmp.ne.s32.totalorder %s139, %s141
      %p145 = scmp.eq.s32.totalorder %s28, 0
      %p146 = por %p144, %p145
      %p147 = scmp.ne.s32.totalorder %s139, %s141
      %p148 = scmp.eq.s32.totalorder %s33, 3
      %p149 = por %p147, %p148
      %p150 = scmp.ne.s32.totalorder %s141, %s142
      %p151 = scmp.eq.s32.totalorder %s33, 0
      %p152 = por %p150, %p151
      %p153 = scmp.ne.s32.totalorder %s141, %s142
      %p154 = scmp.eq.s32.totalorder %s34, 3
      %p155 = por %p153, %p154
      %p157 = scmp.ne.s32.totalorder %s142, %s156
      %p158 = scmp.eq.s32.totalorder %s34, 0
      %p159 = por %p157, %p158
      %s161 = sadd.s32 %s160, 1
      %p164 = scmp.eq.s32.totalorder %s28, 3
      %p165 = scmp.ne.s32.totalorder %s160, %s162
      %p166 = scmp.eq.s32.totalorder %s28, 0
      %p167 = por %p165, %p166
      %p168 = scmp.ne.s32.totalorder %s160, %s162
      %p169 = scmp.eq.s32.totalorder %s33, 3
      %p170 = por %p168, %p169
      %p171 = scmp.ne.s32.totalorder %s162, %s163
      %p172 = scmp.eq.s32.totalorder %s33, 0
      %p173 = por %p171, %p172
      %p174 = scmp.ne.s32.totalorder %s162, %s163
      %p175 = scmp.eq.s32.totalorder %s34, 3
      %p176 = por %p174, %p175
      %p178 = scmp.ne.s32.totalorder %s163, %s177
      %p179 = scmp.eq.s32.totalorder %s34, 0
      %p180 = por %p178, %p179
      %s182 = sadd.s32 %s181, 1
      %p185 = scmp.eq.s32.totalorder %s28, 3
      %p186 = scmp.ne.s32.totalorder %s181, %s183
      %p187 = scmp.eq.s32.totalorder %s28, 0
      %p188 = por %p186, %p187
      %p189 = scmp.ne.s32.totalorder %s181, %s183
      %p190 = scmp.eq.s32.totalorder %s33, 3
      %p191 = por %p189, %p190
      %p192 = scmp.ne.s32.totalorder %s183, %s184
      %p193 = scmp.eq.s32.totalorder %s33, 0
      %p194 = por %p192, %p193
      %p195 = scmp.ne.s32.totalorder %s183, %s184
      %p196 = scmp.eq.s32.totalorder %s34, 3
      %p197 = por %p195, %p196
      %p199 = scmp.ne.s32.totalorder %s184, %s198
      %p200 = scmp.eq.s32.totalorder %s34, 0
      %p201 = por %p199, %p200
      %s203 = sadd.s32 %s202, 1
      %p206 = scmp.eq.s32.totalorder %s28, 3
      %p207 = scmp.ne.s32.totalorder %s202, %s204
      %p208 = scmp.eq.s32.totalorder %s28, 0
      %p209 = por %p207, %p208
      %p210 = scmp.ne.s32.totalorder %s202, %s204
      %p211 = scmp.eq.s32.totalorder %s33, 3
      %p212 = por %p210, %p211
      %p213 = scmp.ne.s32.totalorder %s204, %s205
      %p214 = scmp.eq.s32.totalorder %s33, 0
      %p215 = por %p213, %p214
      %p216 = scmp.ne.s32.totalorder %s204, %s205
      %p217 = scmp.eq.s32.totalorder %s34, 3
      %p218 = por %p216, %p217
      %p220 = scmp.ne.s32.totalorder %s205, %s219
      %p221 = scmp.eq.s32.totalorder %s34, 0
      %p222 = por %p220, %p221
      %s224 = sadd.s32 %s223, 1
      %p227 = scmp.eq.s32.totalorder %s28, 3
      %p228 = scmp.ne.s32.totalorder %s223, %s225
      %p229 = scmp.eq.s32.totalorder %s28, 0
      %p230 = por %p228, %p229
      %p231 = scmp.ne.s32.totalorder %s223, %s225
      %p232 = scmp.eq.s32.totalorder %s33, 3
      %p233 = por %p231, %p232
      %p234 = scmp.ne.s32.totalorder %s225, %s226
      %p235 = scmp.eq.s32.totalorder %s33, 0
      %p236 = por %p234, %p235
      %p237 = scmp.ne.s32.totalorder %s225, %s226
      %p238 = scmp.eq.s32.totalorder %s34, 3
      %p239 = por %p237, %p238
      %p241 = scmp.ne.s32.totalorder %s226, %s240
      %p242 = scmp.eq.s32.totalorder %s34, 0
      %p243 = por %p241, %p242
      %s245 = sadd.s32 %s244, 1
      %p248 = scmp.eq.s32.totalorder %s28, 3
      %p249 = scmp.ne.s32.totalorder %s244, %s246
      %p250 = scmp.eq.s32.totalorder %s28, 0
      %p251 = por %p249, %p250
      %p252 = scmp.ne.s32.totalorder %s244, %s246
      %p253 = scmp.eq.s32.totalorder %s33, 3
      %p254 = por %p252, %p253
      %p255 = scmp.ne.s32.totalorder %s246, %s247
      %p256 = scmp.eq.s32.totalorder %s33, 0
      %p257 = por %p255, %p256
      %p258 = scmp.ne.s32.totalorder %s246, %s247
      %p259 = scmp.eq.s32.totalorder %s34, 3
      %p260 = por %p258, %p259
      %p262 = scmp.ne.s32.totalorder %s247, %s261
      %p263 = scmp.eq.s32.totalorder %s34, 0
      %p264 = por %p262, %p263
      %s266 = sadd.s32 %s265, 1
      %p269 = scmp.eq.s32.totalorder %s28, 3
      %p270 = scmp.ne.s32.totalorder %s265, %s267
      %p271 = scmp.eq.s32.totalorder %s28, 0
      %p272 = por %p270, %p271
      %p273 = scmp.ne.s32.totalorder %s265, %s267
      %p274 = scmp.eq.s32.totalorder %s33, 3
      %p275 = por %p273, %p274
      %p276 = scmp.ne.s32.totalorder %s267, %s268
      %p277 = scmp.eq.s32.totalorder %s33, 0
      %p278 = por %p276, %p277
      %p279 = scmp.ne.s32.totalorder %s267, %s268
      %p280 = scmp.eq.s32.totalorder %s34, 3
      %p281 = por %p279, %p280
      %p283 = scmp.ne.s32.totalorder %s268, %s282
      %p284 = scmp.eq.s32.totalorder %s34, 0
      %p285 = por %p283, %p284
      %s287 = sadd.s32 %s286, 1
      %p290 = scmp.eq.s32.totalorder %s28, 3
      %p291 = scmp.ne.s32.totalorder %s286, %s288
      %p292 = scmp.eq.s32.totalorder %s28, 0
      %p293 = por %p291, %p292
      %p294 = scmp.ne.s32.totalorder %s286, %s288
      %p295 = scmp.eq.s32.totalorder %s33, 3
      %p296 = por %p294, %p295
      %p297 = scmp.ne.s32.totalorder %s288, %s289
      %p298 = scmp.eq.s32.totalorder %s33, 0
      %p299 = por %p297, %p298
      %p300 = scmp.ne.s32.totalorder %s288, %s289
      %p301 = scmp.eq.s32.totalorder %s34, 3
      %p302 = por %p300, %p301
      %p304 = scmp.ne.s32.totalorder %s289, %s303
      %p305 = scmp.eq.s32.totalorder %s34, 0
      %p306 = por %p304, %p305
      %s308 = sadd.s32 %s307, 1
      %p311 = scmp.eq.s32.totalorder %s28, 3
      %p312 = scmp.ne.s32.totalorder %s307, %s309
      %p313 = scmp.eq.s32.totalorder %s28, 0
      %p314 = por %p312, %p313
      %p315 = scmp.ne.s32.totalorder %s307, %s309
      %p316 = scmp.eq.s32.totalorder %s33, 3
      %p317 = por %p315, %p316
      %p318 = scmp.ne.s32.totalorder %s309, %s310
      %p319 = scmp.eq.s32.totalorder %s33, 0
      %p320 = por %p318, %p319
      %p321 = scmp.ne.s32.totalorder %s309, %s310
      %p322 = scmp.eq.s32.totalorder %s34, 3
      %p323 = por %p321, %p322
      %p325 = scmp.ne.s32.totalorder %s310, %s324
      %p326 = scmp.eq.s32.totalorder %s34, 0
      %p327 = por %p325, %p326
      %s328 = ssub.s32 %s35, %s47
      %s329 = ssub.s32 %s36, %s43
      %s330 = sor.u32 %s328, %s329
      %p331 = scmp.eq.s32.totalorder %s330, 0
      %s333 = sadd.s32 %s332, 1
      %s334 = scalar_select %p331, %s332, %s333
      %p337 = pneg %p331
      %p338 = scmp.eq.s32.totalorder %s28, 3
      %p339 = por %p337, %p338
      %p340 = scmp.ne.s32.totalorder %s332, %s335
      %p341 = scmp.eq.s32.totalorder %s28, 0
      %p342 = por %p340, %p341
      %p343 = scmp.ne.s32.totalorder %s332, %s335
      %p344 = scmp.eq.s32.totalorder %s33, 3
      %p345 = por %p343, %p344
      %p346 = scmp.ne.s32.totalorder %s335, %s336
      %p347 = scmp.eq.s32.totalorder %s33, 0
      %p348 = por %p346, %p347
      %p349 = scmp.ne.s32.totalorder %s335, %s336
      %p350 = scmp.eq.s32.totalorder %s34, 3
      %p351 = por %p349, %p350
      %p353 = scmp.ne.s32.totalorder %s336, %s352
      %p354 = scmp.eq.s32.totalorder %s34, 0
      %p355 = por %p353, %p354
      %p356 = scmp.le.s32.totalorder 1, %s28
      %p357 = scmp.lt.s32.totalorder %s28, 5
      %p358 = pnand %p356, %p357
      %p359 = pneg %p358
      // Predicated region
      $region9: #{tpu_custom_call.1} parent=5 // pred_check
        _
      $region10: #{tpu_custom_call.1} parent=5 // pred_check_branch
        %361 = sbr.rel (%p358) target = $region12
      $region11: #{tpu_custom_call.1} parent=5 // pred_region
        %s362 = ssub.s32 %s28, 1
        // Predicated region
        $region13: #{tpu_custom_call.1} parent=11 // pred_check
          %p363 = pneg %p89
        $region14: #{tpu_custom_call.1} parent=11 // pred_check_branch
          %365 = sbr.rel (%p363) target = $region16
        $region15: #{tpu_custom_call.1} parent=11 // pred_region
          %s367 = ssub.s32 16, 16
          %368 = vsyncadd [#allocation8], %s367
          %s370 = sshll.u32 [#allocation7], 4
          %s371 = int_to_ptr.vmem [resolvable:$true] %s370
          %373 = dma.hbm_to_vmem [thread:$0]  %s1, 16, %s371, [#allocation8]
        $region16: #{tpu_custom_call.1} parent=11 // pred_fallthru
          _
        // Predicated region
        $region17: #{tpu_custom_call.1} parent=11 // pred_check
          %p374 = pneg %p110
        $region18: #{tpu_custom_call.1} parent=11 // pred_check_branch
          %376 = sbr.rel (%p374) target = $region20
        $region19: #{tpu_custom_call.1} parent=11 // pred_region
          %s378 = ssub.s32 16, 16
          %379 = vsyncadd [#allocation8], %s378
          %s381 = sshll.u32 [#allocation9], 4
          %s382 = int_to_ptr.vmem [resolvable:$true] %s381
          %384 = dma.hbm_to_vmem [thread:$0]  %s2, 16, %s382, [#allocation8]
        $region20: #{tpu_custom_call.1} parent=11 // pred_fallthru
          _
        // Predicated region
        $region21: #{tpu_custom_call.1} parent=11 // pred_check
          %p385 = pneg %p131
        $region22: #{tpu_custom_call.1} parent=11 // pred_check_branch
          %387 = sbr.rel (%p385) target = $region24
        $region23: #{tpu_custom_call.1} parent=11 // pred_region
          %s389 = ssub.s32 3072, 3072
          %390 = vsyncadd [#allocation11], %s389
          %s391 = sshll.u32 [#allocation10], 4
          %s392 = int_to_ptr.vmem [resolvable:$true] %s391
          %397 = dma.hbm_to_vmem [thread:$0]  %s3, 3072, %s392, [#allocation11], 192, 192, 12
        $region24: #{tpu_custom_call.1} parent=11 // pred_fallthru
          _
        // Predicated region
        $region25: #{tpu_custom_call.1} parent=11 // pred_check
          %p398 = pneg %p152
        $region26: #{tpu_custom_call.1} parent=11 // pred_check_branch
          %400 = sbr.rel (%p398) target = $region28
        $region27: #{tpu_custom_call.1} parent=11 // pred_region
          _
        $region28: #{tpu_custom_call.1} parent=11 // pred_fallthru
          _
        // Predicated region
        $region29: #{tpu_custom_call.1} parent=11 // pred_check
          %p401 = pneg %p173
        $region30: #{tpu_custom_call.1} parent=11 // pred_check_branch
          %403 = sbr.rel (%p401) target = $region32
        $region31: #{tpu_custom_call.1} parent=11 // pred_region
          %s405 = ssub.s32 1024, 1024
          %406 = vsyncadd [#allocation11], %s405
          %s407 = sshll.u32 [#allocation12], 4
          %s408 = int_to_ptr.vmem [resolvable:$true] %s407
          %413 = dma.hbm_to_vmem [thread:$0]  %s5, 1024, %s408, [#allocation11], 64, 64, 4
        $region32: #{tpu_custom_call.1} parent=11 // pred_fallthru
          _
        // Predicated region
        $region33: #{tpu_custom_call.1} parent=11 // pred_check
          %p414 = pneg %p194
        $region34: #{tpu_custom_call.1} parent=11 // pred_check_branch
          %416 = sbr.rel (%p414) target = $region36
        $region35: #{tpu_custom_call.1} parent=11 // pred_region
          _
        $region36: #{tpu_custom_call.1} parent=11 // pred_fallthru
          _
        // Predicated region
        $region37: #{tpu_custom_call.1} parent=11 // pred_check
          %p417 = pneg %p215
        $region38: #{tpu_custom_call.1} parent=11 // pred_check_branch
          %419 = sbr.rel (%p417) target = $region40
        $region39: #{tpu_custom_call.1} parent=11 // pred_region
          _
        $region40: #{tpu_custom_call.1} parent=11 // pred_fallthru
          _
        // Predicated region
        $region41: #{tpu_custom_call.1} parent=11 // pred_check
          %p420 = pneg %p236
        $region42: #{tpu_custom_call.1} parent=11 // pred_check_branch
          %422 = sbr.rel (%p420) target = $region44
        $region43: #{tpu_custom_call.1} parent=11 // pred_region
          _
        $region44: #{tpu_custom_call.1} parent=11 // pred_fallthru
          _
        // Predicated region
        $region45: #{tpu_custom_call.1} parent=11 // pred_check
          %p423 = pneg %p257
        $region46: #{tpu_custom_call.1} parent=11 // pred_check_branch
          %425 = sbr.rel (%p423) target = $region48
        $region47: #{tpu_custom_call.1} parent=11 // pred_region
          %s427 = ssub.s32 4096, 4096
          %428 = vsyncadd [#allocation14], %s427
          %s429 = sshll.u32 [#allocation13], 4
          %s430 = int_to_ptr.vmem [resolvable:$true] %s429
          %435 = dma.hbm_to_vmem [thread:$0]  %s9, 4096, %s430, [#allocation14], 256, 256, 16
        $region48: #{tpu_custom_call.1} parent=11 // pred_fallthru
          _
        // Predicated region
        $region49: #{tpu_custom_call.1} parent=11 // pred_check
          %p436 = pneg %p278
        $region50: #{tpu_custom_call.1} parent=11 // pred_check_branch
          %438 = sbr.rel (%p436) target = $region52
        $region51: #{tpu_custom_call.1} parent=11 // pred_region
          _
        $region52: #{tpu_custom_call.1} parent=11 // pred_fallthru
          _
        // Predicated region
        $region53: #{tpu_custom_call.1} parent=11 // pred_check
          %p439 = pneg %p299
        $region54: #{tpu_custom_call.1} parent=11 // pred_check_branch
          %441 = sbr.rel (%p439) target = $region56
        $region55: #{tpu_custom_call.1} parent=11 // pred_region
          %s443 = ssub.s32 4096, 4096
          %444 = vsyncadd [#allocation14], %s443
          %s445 = sshll.u32 [#allocation15], 4
          %s446 = int_to_ptr.vmem [resolvable:$true] %s445
          %451 = dma.hbm_to_vmem [thread:$0]  %s11, 4096, %s446, [#allocation14], 64, 64, 4
        $region56: #{tpu_custom_call.1} parent=11 // pred_fallthru
          _
        // Predicated region
        $region57: #{tpu_custom_call.1} parent=11 // pred_check
          %p452 = pneg %p320
        $region58: #{tpu_custom_call.1} parent=11 // pred_check_branch
          %454 = sbr.rel (%p452) target = $region60
        $region59: #{tpu_custom_call.1} parent=11 // pred_region
          _
        $region60: #{tpu_custom_call.1} parent=11 // pred_fallthru
          _
      $region12: #{tpu_custom_call.1} parent=5 // pred_fallthru
        _
      %p455 = scmp.lt.s32.totalorder %s28, 4
      // Predicated region
      $region61: #{tpu_custom_call.1} parent=5 // pred_check
        %p456 = pneg %p455
      $region62: #{tpu_custom_call.1} parent=5 // pred_check_branch
        %458 = sbr.rel (%p456) target = $region64
      $region63: #{tpu_custom_call.1} parent=5 // pred_region
        // Predicated region
        $region65: #{tpu_custom_call.1} parent=63 // pred_check
          %p459 = pneg %p62
        $region66: #{tpu_custom_call.1} parent=63 // pred_check_branch
          %461 = sbr.rel (%p459) target = $region68
        $region67: #{tpu_custom_call.1} parent=63 // pred_region
          %s462 = sand.u32 %s52, 1
          %s463 = scalar_lea.sflag [#allocation5], %s462
          %s464 = sand.u32 %s52, 1
          %s465 = smul.addr %s464, 16
          %s466 = scalar_lea.vmem [#allocation4], %s465
          %s467 = smul.u32 2, %s36
          %s469 = ssub.s32 256, 256
          %470 = vsyncadd %s463, %s469
          %s471 = smul.addr %s35, 4
          %s472 = sadd.s32 %s467, %s471
          %s473 = smul.addr %s472, 128
          %s474 = scalar_lea.hbm %s0, %s473
          %s475 = sshll.u32 %s466, 4
          %s476 = int_to_ptr.vmem [resolvable:$true] %s475
          %481 = dma.hbm_to_vmem [thread:$0]  %s474, 256, %s476, %s463, 128, 128, 8
        $region68: #{tpu_custom_call.1} parent=63 // pred_fallthru
          _
      $region64: #{tpu_custom_call.1} parent=5 // pred_fallthru
        _
      %p482 = scmp.le.s32.totalorder 1, %s28
      %p483 = scmp.lt.s32.totalorder %s28, 5
      %p484 = pnand %p482, %p483
      %p485 = pneg %p484
      // Predicated region
      $region69: #{tpu_custom_call.1} parent=5 // pred_check
        _
      $region70: #{tpu_custom_call.1} parent=5 // pred_check_branch
        %487 = sbr.rel (%p484) target = $region72
      $region71: #{tpu_custom_call.1} parent=5 // pred_region
        %s488 = ssub.s32 %s28, 1
        %s489 = sand.u32 %s55, 1
        %s490 = scalar_lea.sflag [#allocation5], %s489
        %s491 = sand.u32 %s55, 1
        %s492 = smul.addr %s491, 16
        %s493 = scalar_lea.vmem [#allocation4], %s492
        // Predicated region
        $region73: #{tpu_custom_call.1} parent=71 // pred_check
          %p494 = pneg %p68
        $region74: #{tpu_custom_call.1} parent=71 // pred_check_branch
          %496 = sbr.rel (%p494) target = $region76
        $region75: #{tpu_custom_call.1} parent=71 // pred_region
          %497 = dma.done %s490, 256
        $region76: #{tpu_custom_call.1} parent=71 // pred_fallthru
          _
        // Predicated region
        $region77: #{tpu_custom_call.1} parent=71 // pred_check
          %p498 = pneg %p89
        $region78: #{tpu_custom_call.1} parent=71 // pred_check_branch
          %500 = sbr.rel (%p498) target = $region80
        $region79: #{tpu_custom_call.1} parent=71 // pred_region
          %501 = dma.done [#allocation8], 16
        $region80: #{tpu_custom_call.1} parent=71 // pred_fallthru
          _
        // Predicated region
        $region81: #{tpu_custom_call.1} parent=71 // pred_check
          %p502 = pneg %p110
        $region82: #{tpu_custom_call.1} parent=71 // pred_check_branch
          %504 = sbr.rel (%p502) target = $region84
        $region83: #{tpu_custom_call.1} parent=71 // pred_region
          %505 = dma.done [#allocation8], 16
        $region84: #{tpu_custom_call.1} parent=71 // pred_fallthru
          _
        // Predicated region
        $region85: #{tpu_custom_call.1} parent=71 // pred_check
          %p506 = pneg %p131
        $region86: #{tpu_custom_call.1} parent=71 // pred_check_branch
          %508 = sbr.rel (%p506) target = $region88
        $region87: #{tpu_custom_call.1} parent=71 // pred_region
          %509 = dma.done [#allocation11], 3072
        $region88: #{tpu_custom_call.1} parent=71 // pred_fallthru
          _
        // Predicated region
        $region89: #{tpu_custom_call.1} parent=71 // pred_check
          %p510 = pneg %p173
        $region90: #{tpu_custom_call.1} parent=71 // pred_check_branch
          %512 = sbr.rel (%p510) target = $region92
        $region91: #{tpu_custom_call.1} parent=71 // pred_region
          %513 = dma.done [#allocation11], 1024
        $region92: #{tpu_custom_call.1} parent=71 // pred_fallthru
          _
        // Predicated region
        $region93: #{tpu_custom_call.1} parent=71 // pred_check
          %p514 = pneg %p257
        $region94: #{tpu_custom_call.1} parent=71 // pred_check_branch
          %516 = sbr.rel (%p514) target = $region96
        $region95: #{tpu_custom_call.1} parent=71 // pred_region
          %517 = dma.done [#allocation14], 4096
        $region96: #{tpu_custom_call.1} parent=71 // pred_fallthru
          _
        // Predicated region
        $region97: #{tpu_custom_call.1} parent=71 // pred_check
          %p518 = pneg %p299
        $region98: #{tpu_custom_call.1} parent=71 // pred_check_branch
          %520 = sbr.rel (%p518) target = $region100
        $region99: #{tpu_custom_call.1} parent=71 // pred_region
          %521 = dma.done [#allocation14], 4096
        $region100: #{tpu_custom_call.1} parent=71 // pred_fallthru
          _
        %s522 = sand.u32 %s55, 1
        %s523 = scalar_lea.sflag [#allocation5], %s522
        %s524 = sand.u32 %s55, 1
        %s525 = smul.addr %s524, 16
        %s526 = scalar_lea.vmem [#allocation4], %s525
        %p527 = pneg %p68
        %p528 = pneg %p65
        %p529 = pneg %p89
        %p530 = pneg %p86
        %p531 = pneg %p110
        %p532 = pneg %p107
        %p533 = pneg %p131
        %p534 = pneg %p128
        %p535 = pneg %p152
        %p536 = pneg %p149
        %p537 = pneg %p173
        %p538 = pneg %p170
        %p539 = pneg %p194
        %p540 = pneg %p191
        %p541 = pneg %p215
        %p542 = pneg %p212
        %p543 = pneg %p236
        %p544 = pneg %p233
        %p545 = pneg %p257
        %p546 = pneg %p254
        %p547 = pneg %p278
        %p548 = pneg %p275
        %p549 = pneg %p299
        %p550 = pneg %p296
        %p551 = pneg %p320
        %p552 = pneg %p317
        %p553 = pneg %p348
        %p554 = pneg %p345
        %s555 = sand.u32 %s335, 1
        %s556 = scalar_lea.sflag [#allocation6], %s555
        %s557 = sand.u32 %s335, 1
        %s558 = smul.addr %s557, 16
        %s559 = scalar_lea.vmem [#allocation16], %s558
        %s560 = smul.u32 2, %s38
        %s561 = smul.u32 2, %s38
        %s563 = smul.u32 %s38, 16
        %v564 = vld [vmem:[%s493] sm:$0xff]
        %v565 = vld [vmem:[%s493 + $0x8] sm:$0xff]
        %v566 = vld [vmem:[#allocation7] sm:$0x1]
        %v567 = vld [vmem:[#allocation9] sm:$0x1]
        %568 = vadd.xlane.f32.xlu0 %v564
        %v569 = vpop.xlane.xlu0 %568
        %570 = vadd.xlane.f32.xlu0 %v565
        %v571 = vpop.xlane.xlu0 %570
        %v572 = vrcp.pop 128.0
        %v573 = vmul.f32 %v569, %v572
        %v574 = vmul.f32 %v571, %v572
        %v575 = vsub.f32 %v564, %v573
        %v576 = vsub.f32 %v565, %v574
        %v577 = vmul.f32 %v575, %v575
        %v578 = vmul.f32 %v576, %v576
        %579 = vadd.xlane.f32.xlu0 %v577
        %v580 = vpop.xlane.xlu0 %579
        %581 = vadd.xlane.f32.xlu0 %v578
        %v582 = vpop.xlane.xlu0 %581
        %v583 = vmul.f32 %v580, %v572
        %v584 = vmul.f32 %v582, %v572
        %v585 = vadd.f32 %v583, 1e-05
        %v586 = vadd.f32 %v584, 1e-05
        %v587 = vrsqrt.pop %v585
        %v588 = vrsqrt.pop %v586
        %v589 = vmul.f32 %v575, %v587
        %v590 = vmul.f32 %v576, %v588
        %v592 = vlaneseq
        %v593 = vshrl.u32 %v592, 7
        %v594 = vsub.s32 0, %v593
        %v595 = vrot.slane %v566, %v594
        %v597 = vmul.f32 %v589, %v595
        %v598 = vmul.f32 %v590, %v595
        %v600 = vlaneseq
        %v601 = vshrl.u32 %v600, 7
        %v602 = vsub.s32 0, %v601
        %v603 = vrot.slane %v567, %v602
        %v605 = vadd.f32 %v597, %v603
        %v606 = vadd.f32 %v598, %v603
        %v607 = vpack.c.bf16 %v606, %v605
        %v608 = vld [vmem:[#allocation10] sm:$0xff]
        %v609 = vld [vmem:[#allocation10 + $0x8] sm:$0xf]
        %v610 = vld [vmem:[#allocation10 + $0xc] sm:$0xff]
        %v611 = vld [vmem:[#allocation10 + $0x14] sm:$0xf]
        %v612 = vld [vmem:[#allocation10 + $0x18] sm:$0xff]
        %v613 = vld [vmem:[#allocation10 + $0x20] sm:$0xf]
        %v614 = vld [vmem:[#allocation10 + $0x24] sm:$0xff]
        %v615 = vld [vmem:[#allocation10 + $0x2c] sm:$0xf]
        %v616 = vld [vmem:[#allocation10 + $0x30] sm:$0xff]
        %v617 = vld [vmem:[#allocation10 + $0x38] sm:$0xf]
        %v618 = vld [vmem:[#allocation10 + $0x3c] sm:$0xff]
        %v619 = vld [vmem:[#allocation10 + $0x44] sm:$0xf]
        %v620 = vld [vmem:[#allocation10 + $0x48] sm:$0xff]
        %v621 = vld [vmem:[#allocation10 + $0x50] sm:$0xf]
        %v622 = vld [vmem:[#allocation10 + $0x54] sm:$0xff]
        %v623 = vld [vmem:[#allocation10 + $0x5c] sm:$0xf]
        %v624 = vld [vmem:[#allocation10 + $0x60] sm:$0xff]
        %v625 = vld [vmem:[#allocation10 + $0x68] sm:$0xf]
        %v626 = vld [vmem:[#allocation10 + $0x6c] sm:$0xff]
        %v627 = vld [vmem:[#allocation10 + $0x74] sm:$0xf]
        %v628 = vld [vmem:[#allocation10 + $0x78] sm:$0xff]
        %v629 = vld [vmem:[#allocation10 + $0x80] sm:$0xf]
        %v630 = vld [vmem:[#allocation10 + $0x84] sm:$0xff]
        %v631 = vld [vmem:[#allocation10 + $0x8c] sm:$0xf]
        %v632 = vld [vmem:[#allocation10 + $0x90] sm:$0xff]
        %v633 = vld [vmem:[#allocation10 + $0x98] sm:$0xf]
        %v634 = vld [vmem:[#allocation10 + $0x9c] sm:$0xff]
        %v635 = vld [vmem:[#allocation10 + $0xa4] sm:$0xf]
        %v636 = vld [vmem:[#allocation10 + $0xa8] sm:$0xff]
        %v637 = vld [vmem:[#allocation10 + $0xb0] sm:$0xf]
        %v638 = vld [vmem:[#allocation10 + $0xb4] sm:$0xff]
        %v639 = vld [vmem:[#allocation10 + $0xbc] sm:$0xf]
        %v640 = vld [vmem:[%s4] sm:$0x7]
        %v642 = vlaneseq
        %v643 = vshrl.u32 %v642, 7
        %v644 = vsub.s32 0, %v643
        %v645 = vrot.slane %v640, %v644
        %v646 = vlaneseq
        %v647 = vshrl.u32 %v646, 7
        %v648 = vsub.s32 1, %v647
        %v649 = vrot.slane %v640, %v648
        %v650 = vlaneseq
        %v651 = vshrl.u32 %v650, 7
        %v652 = vsub.s32 2, %v651
        %v653 = vrot.slane %v640, %v652
        %v689 = vunpack.c.l.b16 %v608
        %v690 = vunpack.c.h.b16 %v608
        %v691 = vunpack.c.l.b16 %v609
        %v692 = vunpack.c.l.b16 %v610
        %v693 = vunpack.c.h.b16 %v610
        %v694 = vunpack.c.l.b16 %v611
        %v695 = vunpack.c.l.b16 %v612
        %v696 = vunpack.c.h.b16 %v612
        %v697 = vunpack.c.l.b16 %v613
        %v698 = vunpack.c.l.b16 %v614
        %v699 = vunpack.c.h.b16 %v614
        %v700 = vunpack.c.l.b16 %v615
        %v701 = vunpack.c.l.b16 %v616
        %v702 = vunpack.c.h.b16 %v616
        %v703 = vunpack.c.l.b16 %v617
        %v704 = vunpack.c.l.b16 %v618
        %v705 = vunpack.c.h.b16 %v618
        %v706 = vunpack.c.l.b16 %v619
        %v707 = vunpack.c.l.b16 %v620
        %v708 = vunpack.c.h.b16 %v620
        %v709 = vunpack.c.l.b16 %v621
        %v710 = vunpack.c.l.b16 %v622
        %v711 = vunpack.c.h.b16 %v622
        %v712 = vunpack.c.l.b16 %v623
        %v713 = vunpack.c.l.b16 %v624
        %v714 = vunpack.c.h.b16 %v624
        %v715 = vunpack.c.l.b16 %v625
        %v716 = vunpack.c.l.b16 %v626
        %v717 = vunpack.c.h.b16 %v626
        %v718 = vunpack.c.l.b16 %v627
        %v719 = vunpack.c.l.b16 %v628
        %v720 = vunpack.c.h.b16 %v628
        %v721 = vunpack.c.l.b16 %v629
        %v722 = vunpack.c.l.b16 %v630
        %v723 = vunpack.c.h.b16 %v630
        %v724 = vunpack.c.l.b16 %v631
        %v725 = vunpack.c.l.b16 %v632
        %v726 = vunpack.c.h.b16 %v632
        %v727 = vunpack.c.l.b16 %v633
        %v728 = vunpack.c.l.b16 %v634
        %v729 = vunpack.c.h.b16 %v634
        %v730 = vunpack.c.l.b16 %v635
        %v731 = vunpack.c.l.b16 %v636
        %v732 = vunpack.c.h.b16 %v636
        %v733 = vunpack.c.l.b16 %v637
        %v734 = vunpack.c.l.b16 %v638
        %v735 = vunpack.c.h.b16 %v638
        %v736 = vunpack.c.l.b16 %v639
        %v737 = vpack.c.b16 %v692, %v689
        %v738 = vpack.c.b16 %v693, %v690
        %v739 = vpack.c.b16 %v694, %v691
        %v740 = vpack.c.b16 %v698, %v695
        %v741 = vpack.c.b16 %v699, %v696
        %v742 = vpack.c.b16 %v700, %v697
        %v743 = vpack.c.b16 %v704, %v701
        %v744 = vpack.c.b16 %v705, %v702
        %v745 = vpack.c.b16 %v706, %v703
        %v746 = vpack.c.b16 %v710, %v707
        %v747 = vpack.c.b16 %v711, %v708
        %v748 = vpack.c.b16 %v712, %v709
        %v749 = vpack.c.b16 %v716, %v713
        %v750 = vpack.c.b16 %v717, %v714
        %v751 = vpack.c.b16 %v718, %v715
        %v752 = vpack.c.b16 %v722, %v719
        %v753 = vpack.c.b16 %v723, %v720
        %v754 = vpack.c.b16 %v724, %v721
        %v755 = vpack.c.b16 %v728, %v725
        %v756 = vpack.c.b16 %v729, %v726
        %v757 = vpack.c.b16 %v730, %v727
        %v758 = vpack.c.b16 %v734, %v731
        %v759 = vpack.c.b16 %v735, %v732
        %v760 = vpack.c.b16 %v736, %v733
        %785 = vmatprep.subr.bf16.mxu0 %v738
        %786 = vmatpush1.bf16.msra.mxu0 %v737
        %787 = vmatprep.subr.bf16.mxu0 %v741
        %788 = vmatpush1.bf16.msra.mxu0 %v740
        %789 = vmatprep.subr.bf16.mxu0 %v744
        %790 = vmatpush1.bf16.msra.mxu0 %v743
        %791 = vmatprep.subr.bf16.mxu0 %v747
        %792 = vmatpush1.bf16.msra.mxu0 %v746
        %793 = vmatprep.subr.bf16.mxu0 %v750
        %794 = vmatpush1.bf16.msra.mxu0 %v749
        %795 = vmatprep.subr.bf16.mxu0 %v753
        %796 = vmatpush1.bf16.msra.mxu0 %v752
        %797 = vmatprep.subr.bf16.mxu0 %v756
        %798 = vmatpush1.bf16.msra.mxu0 %v755
        %799 = vmatprep.subr.bf16.mxu0 %v759
        %800 = vmatpush1.bf16.msra.mxu0 %v758
        %801 = vmatprep.subr.bf16.mxu0 0
        %802 = vmatpush1.bf16.msra.mxu0 0
        %803 = vmatprep.subr.bf16.mxu0 0
        %804 = vmatpush1.bf16.msra.mxu0 0
        %805 = vmatprep.subr.bf16.mxu0 0
        %806 = vmatpush1.bf16.msra.mxu0 0
        %807 = vmatprep.subr.bf16.mxu0 0
        %808 = vmatpush1.bf16.msra.mxu0 0
        %809 = vmatprep.subr.bf16.mxu0 0
        %810 = vmatpush1.bf16.msra.mxu0 0
        %811 = vmatprep.subr.bf16.mxu0 0
        %812 = vmatpush1.bf16.msra.mxu0 0
        %813 = vmatprep.subr.bf16.mxu0 0
        %814 = vmatpush1.bf16.msra.mxu0 0
        %815 = vmatprep.subr.bf16.mxu0 0
        %816 = vmatpush1.bf16.msra.mxu0 0
        %817 = vmatprep.mubr.bf16.mxu0 0
        %818 = vmatmul.mubr.bf16.gmra.mrb[0].mxu0 %v607
        %v819 = vpop.f32.mrb[0].mxu0
        %v820 = vadd.f32 %v645, %v819
        %v821 = vpop.f32.mrb[0].mxu0
        %v822 = vadd.f32 %v649, %v821
        %v823 = vpop.f32.mrb[0].mxu0
        %v824 = vadd.f32 %v645, %v823
        %v825 = vpop.f32.mrb[0].mxu0
        %v826 = vadd.f32 %v649, %v825
        %827 = vdwg.mxu0
        %828 = vmatprep.subr.bf16.mxu0 0
        %829 = vmatpush1.bf16.msra.mxu0 %v739
        %830 = vmatprep.subr.bf16.mxu0 0
        %831 = vmatpush1.bf16.msra.mxu0 %v742
        %832 = vmatprep.subr.bf16.mxu0 0
        %833 = vmatpush1.bf16.msra.mxu0 %v745
        %834 = vmatprep.subr.bf16.mxu0 0
        %835 = vmatpush1.bf16.msra.mxu0 %v748
        %836 = vmatprep.subr.bf16.mxu0 0
        %837 = vmatpush1.bf16.msra.mxu0 %v751
        %838 = vmatprep.subr.bf16.mxu0 0
        %839 = vmatpush1.bf16.msra.mxu0 %v754
        %840 = vmatprep.subr.bf16.mxu0 0
        %841 = vmatpush1.bf16.msra.mxu0 %v757
        %842 = vmatprep.subr.bf16.mxu0 0
        %843 = vmatpush1.bf16.msra.mxu0 %v760
        %844 = vmatprep.subr.bf16.mxu0 0
        %845 = vmatpush1.bf16.msra.mxu0 0
        %846 = vmatprep.subr.bf16.mxu0 0
        %847 = vmatpush1.bf16.msra.mxu0 0
        %848 = vmatprep.subr.bf16.mxu0 0
        %849 = vmatpush1.bf16.msra.mxu0 0
        %850 = vmatprep.subr.bf16.mxu0 0
        %851 = vmatpush1.bf16.msra.mxu0 0
        %852 = vmatprep.subr.bf16.mxu0 0
        %853 = vmatpush1.bf16.msra.mxu0 0
        %854 = vmatprep.subr.bf16.mxu0 0
        %855 = vmatpush1.bf16.msra.mxu0 0
        %856 = vmatprep.subr.bf16.mxu0 0
        %857 = vmatpush1.bf16.msra.mxu0 0
        %858 = vmatprep.subr.bf16.mxu0 0
        %859 = vmatpush1.bf16.msra.mxu0 0
        %860 = vmatprep.mubr.bf16.mxu0 0
        %861 = vmatmul.mubr.bf16.gmra.mrb[0].mxu0 %v607
        %v862 = vpop.f32.mrb[0].mxu0
        %v863 = vadd.f32 %v653, %v862
        %v864 = vpop.f32.mrb[0].mxu0
        %v865 = vpop.f32.mrb[0].mxu0
        %v866 = vadd.f32 %v653, %v865
        %v867 = vpop.f32.mrb[0].mxu0
        %868 = vdwg.mxu0
        %v869 = vpack.c.bf16 %v824, %v820
        %v870 = vpack.c.bf16 %v826, %v822
        %v871 = vpack.c.bf16 %v866, %v863
        %s872 = sshra.s32 %s563, 4
        %s873 = sand.u32 %s563, 15
        %s874 = smul.addr %s872, 8
        %s875 = scalar_lea.vmem [#allocation2], %s874
        %876 = vst [vmem:[%s875] sm:$0xff] %v870
        %s877 = smul.addr %s872, 8
        %s878 = scalar_lea.vmem [#allocation3], %s877
        %879 = vst [vmem:[%s878] sm:$0xff] %v871
        %v880 = vlaneseq
        %v881 = vshrl.u32 %v880, 7
        %v882 = vadd.s32 %v881, 8
        %v883 = vstv %s563
        %v884 = vadd.s32 %v883, %v881
        %v885 = vadd.s32 %v883, %v882
        %v886 = vlaneseq
        %v887 = vand.u32 %v886, 127
        %s888 = sadd.s32 %s38, 1
        // While loop
        $region101: #{tpu_custom_call.1} parent=71 // loop_pre_header
          _
        $region102: #{tpu_custom_call.1} parent=71 // loop_header
          %s890 = sphi 0, %s892
          %p891 = scmp.ge.s32.totalorder %s890, %s888
          %v895 = vphi -1e+30, %v989
          %v896 = vphi -1e+30, %v990
          %v897 = vphi 0.0, %v1011
          %v898 = vphi 0.0, %v1012
          %v899 = vphi 0.0, %v1060
          %v900 = vphi 0.0, %v1061
          %v901 = vphi -1e+30, %v1123
          %v902 = vphi -1e+30, %v1124
          %v903 = vphi 0.0, %v1145
          %v904 = vphi 0.0, %v1146
          %v905 = vphi 0.0, %v1198
          %v906 = vphi 0.0, %v1199
          %v907 = vphi -1e+30, %v1259
          %v908 = vphi -1e+30, %v1260
          %v909 = vphi 0.0, %v1281
          %v910 = vphi 0.0, %v1282
          %v911 = vphi 0.0, %v1333
          %v912 = vphi 0.0, %v1334
          %v913 = vphi -1e+30, %v1394
          %v914 = vphi -1e+30, %v1395
          %v915 = vphi 0.0, %v1416
          %v916 = vphi 0.0, %v1417
          %v917 = vphi 0.0, %v1468
          %v918 = vphi 0.0, %v1469
        $region103: #{tpu_custom_call.1} parent=71 // loop_header_branch
          %894 = sbr.rel (%p891) target = $region107
        $region104: #{tpu_custom_call.1} parent=71 // loop_body
          %s919 = smul.u32 %s890, 16
          %s920 = sshra.s32 %s919, 4
          %s921 = sand.u32 %s919, 15
          %s922 = smul.addr %s920, 8
          %s923 = scalar_lea.vmem [#allocation2], %s922
          %v924 = vld [vmem:[%s923] sm:$0xff]
          %s925 = smul.addr %s920, 8
          %s926 = scalar_lea.vmem [#allocation3], %s925
          %v927 = vld [vmem:[%s926] sm:$0xff]
          %v928 = vstv %s919
          %v929 = vadd.s32 %v928, %v887
          %vm930 = vcmp.ge.s32.totalorder %v884, %v929
          %vm931 = vcmp.ge.s32.totalorder %v885, %v929
          %vm932 = vcmask 261120
          %v934 = vsel %vm932, %v869, 0
          %v937 = vsel %vm932, %v924, 0
          %939 = vmatprep.subr.bf16.mxu0 0
          %940 = vmatpush1.bf16.xpose.msra.mxu0 %v937
          %941 = vmatprep.subr.bf16.mxu0 0
          %942 = vmatpush1.bf16.xpose.msra.mxu0 0
          %943 = vmatprep.subr.bf16.mxu0 0
          %944 = vmatpush1.bf16.xpose.msra.mxu0 0
          %945 = vmatprep.subr.bf16.mxu0 0
          %946 = vmatpush1.bf16.xpose.msra.mxu0 0
          %947 = vmatprep.subr.bf16.mxu0 0
          %948 = vmatpush1.bf16.xpose.msra.mxu0 0
          %949 = vmatprep.subr.bf16.mxu0 0
          %950 = vmatpush1.bf16.xpose.msra.mxu0 0
          %951 = vmatprep.subr.bf16.mxu0 0
          %952 = vmatpush1.bf16.xpose.msra.mxu0 0
          %953 = vmatprep.subr.bf16.mxu0 0
          %954 = vmatpush1.bf16.xpose.msra.mxu0 0
          %955 = vmatprep.subr.bf16.mxu0 0
          %956 = vmatpush1.bf16.xpose.msra.mxu0 0
          %957 = vmatprep.subr.bf16.mxu0 0
          %958 = vmatpush1.bf16.xpose.msra.mxu0 0
          %959 = vmatprep.subr.bf16.mxu0 0
          %960 = vmatpush1.bf16.xpose.msra.mxu0 0
          %961 = vmatprep.subr.bf16.mxu0 0
          %962 = vmatpush1.bf16.xpose.msra.mxu0 0
          %963 = vmatprep.subr.bf16.mxu0 0
          %964 = vmatpush1.bf16.xpose.msra.mxu0 0
          %965 = vmatprep.subr.bf16.mxu0 0
          %966 = vmatpush1.bf16.xpose.msra.mxu0 0
          %967 = vmatprep.subr.bf16.mxu0 0
          %968 = vmatpush1.bf16.xpose.msra.mxu0 0
          %969 = vmatprep.subr.bf16.mxu0 0
          %970 = vmatpush1.bf16.xpose.msra.mxu0 0
          %971 = vmatprep.mubr.bf16.mxu0 0
          %972 = vmatmul.mubr.bf16.gmra.mrb[0].mxu0 %v934
          %v973 = vpop.f32.mrb[0].mxu0
          %v974 = vadd.f32 0.0, %v973
          %v975 = vpop.f32.mrb[0].mxu0
          %v976 = vpop.f32.mrb[0].mxu0
          %v977 = vadd.f32 0.0, %v976
          %v978 = vpop.f32.mrb[0].mxu0
          %979 = vdwg.mxu0
          %v980 = vsel %vm930, %v974, -1e+30
          %v981 = vsel %vm931, %v977, -1e+30
          %vm982 = vcmask 130048
          %v983 = vsel %vm982, %v980, -inf
          %984 = vmax.xlane.f32.xlu0 %v983
          %v985 = vpop.xlane.xlu0 %984
          %v986 = vsel %vm982, %v981, -inf
          %987 = vmax.xlane.f32.xlu0 %v986
          %v988 = vpop.xlane.xlu0 %987
          %v989 = vmax.f32 %v895, %v985
          %v990 = vmax.f32 %v896, %v988
          %v991 = vsub.f32 %v895, %v989
          %v992 = vsub.f32 %v896, %v990
          %v993 = vmul.f32 %v991, 1.442695
          %v994 = vpow.pop %v993
          %v995 = vmul.f32 %v992, 1.442695
          %v996 = vpow.pop %v995
          %v997 = vsub.f32 %v980, %v989
          %v998 = vsub.f32 %v981, %v990
          %v999 = vmul.f32 %v997, 1.442695
          %v1000 = vpow.pop %v999
          %v1001 = vmul.f32 %v998, 1.442695
          %v1002 = vpow.pop %v1001
          %v1003 = vmul.f32 %v994, %v897
          %v1004 = vmul.f32 %v996, %v898
          %v1005 = vsel %vm982, %v1000, 0.0
          %1006 = vadd.xlane.f32.xlu0 %v1005
          %v1007 = vpop.xlane.xlu0 %1006
          %v1008 = vsel %vm982, %v1002, 0.0
          %1009 = vadd.xlane.f32.xlu0 %v1008
          %v1010 = vpop.xlane.xlu0 %1009
          %v1011 = vadd.f32 %v1003, %v1007
          %v1012 = vadd.f32 %v1004, %v1010
          %v1013 = vmul.f32 %v994, %v899
          %v1014 = vmul.f32 %v996, %v900
          %v1015 = vpack.c.bf16 %v1002, %v1000
          %v1017 = vsel %vm982, %v1015, 0
          %1019 = vmatprep.subr.bf16.mxu0 0
          %1020 = vmatpush1.bf16.msra.mxu0 %v927
          %1021 = vmatprep.subr.bf16.mxu0 0
          %1022 = vmatpush1.bf16.msra.mxu0 0
          %1023 = vmatprep.subr.bf16.mxu0 0
          %1024 = vmatpush1.bf16.msra.mxu0 0
          %1025 = vmatprep.subr.bf16.mxu0 0
          %1026 = vmatpush1.bf16.msra.mxu0 0
          %1027 = vmatprep.subr.bf16.mxu0 0
          %1028 = vmatpush1.bf16.msra.mxu0 0
          %1029 = vmatprep.subr.bf16.mxu0 0
          %1030 = vmatpush1.bf16.msra.mxu0 0
          %1031 = vmatprep.subr.bf16.mxu0 0
          %1032 = vmatpush1.bf16.msra.mxu0 0
          %1033 = vmatprep.subr.bf16.mxu0 0
          %1034 = vmatpush1.bf16.msra.mxu0 0
          %1035 = vmatprep.subr.bf16.mxu0 0
          %1036 = vmatpush1.bf16.msra.mxu0 0
          %1037 = vmatprep.subr.bf16.mxu0 0
          %1038 = vmatpush1.bf16.msra.mxu0 0
          %1039 = vmatprep.subr.bf16.mxu0 0
          %1040 = vmatpush1.bf16.msra.mxu0 0
          %1041 = vmatprep.subr.bf16.mxu0 0
          %1042 = vmatpush1.bf16.msra.mxu0 0
          %1043 = vmatprep.subr.bf16.mxu0 0
          %1044 = vmatpush1.bf16.msra.mxu0 0
          %1045 = vmatprep.subr.bf16.mxu0 0
          %1046 = vmatpush1.bf16.msra.mxu0 0
          %1047 = vmatprep.subr.bf16.mxu0 0
          %1048 = vmatpush1.bf16.msra.mxu0 0
          %1049 = vmatprep.subr.bf16.mxu0 0
          %1050 = vmatpush1.bf16.msra.mxu0 0
          %1051 = vmatprep.mubr.bf16.mxu0 0
          %1052 = vmatmul.mubr.bf16.gmra.mrb[0].mxu0 %v1017
          %v1053 = vpop.f32.mrb[0].mxu0
          %v1054 = vadd.f32 0.0, %v1053
          %v1055 = vpop.f32.mrb[0].mxu0
          %v1056 = vpop.f32.mrb[0].mxu0
          %v1057 = vadd.f32 0.0, %v1056
          %v1058 = vpop.f32.mrb[0].mxu0
          %1059 = vdwg.mxu0
          %v1060 = vadd.f32 %v1013, %v1054
          %v1061 = vadd.f32 %v1014, %v1057
          %1063 = vrot.lane.b32.xlu0 %v869, 96
          %v1064 = vpop.permute.xlu0 %1063
          %1066 = vrot.lane.b32.xlu0 %v924, 96
          %v1067 = vpop.permute.xlu0 %1066
          %v1069 = vsel %vm932, %v1064, 0
          %v1072 = vsel %vm932, %v1067, 0
          %1074 = vmatprep.subr.bf16.mxu0 0
          %1075 = vmatpush1.bf16.xpose.msra.mxu0 %v1072
          %1076 = vmatprep.subr.bf16.mxu0 0
          %1077 = vmatpush1.bf16.xpose.msra.mxu0 0
          %1078 = vmatprep.subr.bf16.mxu0 0
          %1079 = vmatpush1.bf16.xpose.msra.mxu0 0
          %1080 = vmatprep.subr.bf16.mxu0 0
          %1081 = vmatpush1.bf16.xpose.msra.mxu0 0
          %1082 = vmatprep.subr.bf16.mxu0 0
          %1083 = vmatpush1.bf16.xpose.msra.mxu0 0
          %1084 = vmatprep.subr.bf16.mxu0 0
          %1085 = vmatpush1.bf16.xpose.msra.mxu0 0
          %1086 = vmatprep.subr.bf16.mxu0 0
          %1087 = vmatpush1.bf16.xpose.msra.mxu0 0
          %1088 = vmatprep.subr.bf16.mxu0 0
          %1089 = vmatpush1.bf16.xpose.msra.mxu0 0
          %1090 = vmatprep.subr.bf16.mxu0 0
          %1091 = vmatpush1.bf16.xpose.msra.mxu0 0
          %1092 = vmatprep.subr.bf16.mxu0 0
          %1093 = vmatpush1.bf16.xpose.msra.mxu0 0
          %1094 = vmatprep.subr.bf16.mxu0 0
          %1095 = vmatpush1.bf16.xpose.msra.mxu0 0
          %1096 = vmatprep.subr.bf16.mxu0 0
          %1097 = vmatpush1.bf16.xpose.msra.mxu0 0
          %1098 = vmatprep.subr.bf16.mxu0 0
          %1099 = vmatpush1.bf16.xpose.msra.mxu0 0
          %1100 = vmatprep.subr.bf16.mxu0 0
          %1101 = vmatpush1.bf16.xpose.msra.mxu0 0
          %1102 = vmatprep.subr.bf16.mxu0 0
          %1103 = vmatpush1.bf16.xpose.msra.mxu0 0
          %1104 = vmatprep.subr.bf16.mxu0 0
          %1105 = vmatpush1.bf16.xpose.msra.mxu0 0
          %1106 = vmatprep.mubr.bf16.mxu0 0
          %1107 = vmatmul.mubr.bf16.gmra.mrb[0].mxu0 %v1069
          %v1108 = vpop.f32.mrb[0].mxu0
          %v1109 = vadd.f32 0.0, %v1108
          %v1110 = vpop.f32.mrb[0].mxu0
          %v1111 = vpop.f32.mrb[0].mxu0
          %v1112 = vadd.f32 0.0, %v1111
          %v1113 = vpop.f32.mrb[0].mxu0
          %1114 = vdwg.mxu0
          %v1115 = vsel %vm930, %v1109, -1e+30
          %v1116 = vsel %vm931, %v1112, -1e+30
          %v1117 = vsel %vm982, %v1115, -inf
          %1118 = vmax.xlane.f32.xlu0 %v1117
          %v1119 = vpop.xlane.xlu0 %1118
          %v1120 = vsel %vm982, %v1116, -inf
          %1121 = vmax.xlane.f32.xlu0 %v1120
          %v1122 = vpop.xlane.xlu0 %1121
          %v1123 = vmax.f32 %v901, %v1119
          %v1124 = vmax.f32 %v902, %v1122
          %v1125 = vsub.f32 %v901, %v1123
          %v1126 = vsub.f32 %v902, %v1124
          %v1127 = vmul.f32 %v1125, 1.442695
          %v1128 = vpow.pop %v1127
          %v1129 = vmul.f32 %v1126, 1.442695
          %v1130 = vpow.pop %v1129
          %v1131 = vsub.f32 %v1115, %v1123
          %v1132 = vsub.f32 %v1116, %v1124
          %v1133 = vmul.f32 %v1131, 1.442695
          %v1134 = vpow.pop %v1133
          %v1135 = vmul.f32 %v1132, 1.442695
          %v1136 = vpow.pop %v1135
          %v1137 = vmul.f32 %v1128, %v903
          %v1138 = vmul.f32 %v1130, %v904
          %v1139 = vsel %vm982, %v1134, 0.0
          %1140 = vadd.xlane.f32.xlu0 %v1139
          %v1141 = vpop.xlane.xlu0 %1140
          %v1142 = vsel %vm982, %v1136, 0.0
          %1143 = vadd.xlane.f32.xlu0 %v1142
          %v1144 = vpop.xlane.xlu0 %1143
          %v1145 = vadd.f32 %v1137, %v1141
          %v1146 = vadd.f32 %v1138, %v1144
          %v1147 = vmul.f32 %v1128, %v905
          %v1148 = vmul.f32 %v1130, %v906
          %v1149 = vpack.c.bf16 %v1136, %v1134
          %1151 = vrot.lane.b32.xlu0 %v927, 96
          %v1152 = vpop.permute.xlu0 %1151
          %v1155 = vsel %vm982, %v1149, 0
          %1157 = vmatprep.subr.bf16.mxu0 0
          %1158 = vmatpush1.bf16.msra.mxu0 %v1152
          %1159 = vmatprep.subr.bf16.mxu0 0
          %1160 = vmatpush1.bf16.msra.mxu0 0
          %1161 = vmatprep.subr.bf16.mxu0 0
          %1162 = vmatpush1.bf16.msra.mxu0 0
          %1163 = vmatprep.subr.bf16.mxu0 0
          %1164 = vmatpush1.bf16.msra.mxu0 0
          %1165 = vmatprep.subr.bf16.mxu0 0
          %1166 = vmatpush1.bf16.msra.mxu0 0
          %1167 = vmatprep.subr.bf16.mxu0 0
          %1168 = vmatpush1.bf16.msra.mxu0 0
          %1169 = vmatprep.subr.bf16.mxu0 0
          %1170 = vmatpush1.bf16.msra.mxu0 0
          %1171 = vmatprep.subr.bf16.mxu0 0
          %1172 = vmatpush1.bf16.msra.mxu0 0
          %1173 = vmatprep.subr.bf16.mxu0 0
          %1174 = vmatpush1.bf16.msra.mxu0 0
          %1175 = vmatprep.subr.bf16.mxu0 0
          %1176 = vmatpush1.bf16.msra.mxu0 0
          %1177 = vmatprep.subr.bf16.mxu0 0
          %1178 = vmatpush1.bf16.msra.mxu0 0
          %1179 = vmatprep.subr.bf16.mxu0 0
          %1180 = vmatpush1.bf16.msra.mxu0 0
          %1181 = vmatprep.subr.bf16.mxu0 0
          %1182 = vmatpush1.bf16.msra.mxu0 0
          %1183 = vmatprep.subr.bf16.mxu0 0
          %1184 = vmatpush1.bf16.msra.mxu0 0
          %1185 = vmatprep.subr.bf16.mxu0 0
          %1186 = vmatpush1.bf16.msra.mxu0 0
          %1187 = vmatprep.subr.bf16.mxu0 0
          %1188 = vmatpush1.bf16.msra.mxu0 0
          %1189 = vmatprep.mubr.bf16.mxu0 0
          %1190 = vmatmul.mubr.bf16.gmra.mrb[0].mxu0 %v1155
          %v1191 = vpop.f32.mrb[0].mxu0
          %v1192 = vadd.f32 0.0, %v1191
          %v1193 = vpop.f32.mrb[0].mxu0
          %v1194 = vpop.f32.mrb[0].mxu0
          %v1195 = vadd.f32 0.0, %v1194
          %v1196 = vpop.f32.mrb[0].mxu0
          %1197 = vdwg.mxu0
          %v1198 = vadd.f32 %v1147, %v1192
          %v1199 = vadd.f32 %v1148, %v1195
          %1200 = vrot.lane.b32.xlu0 %v869, 64
          %v1201 = vpop.permute.xlu0 %1200
          %1202 = vrot.lane.b32.xlu0 %v924, 64
          %v1203 = vpop.permute.xlu0 %1202
          %v1205 = vsel %vm932, %v1201, 0
          %v1208 = vsel %vm932, %v1203, 0
          %1210 = vmatprep.subr.bf16.mxu0 0
          %1211 = vmatpush1.bf16.xpose.msra.mxu0 %v1208
          %1212 = vmatprep.subr.bf16.mxu0 0
          %1213 = vmatpush1.bf16.xpose.msra.mxu0 0
          %1214 = vmatprep.subr.bf16.mxu0 0
          %1215 = vmatpush1.bf16.xpose.msra.mxu0 0
          %1216 = vmatprep.subr.bf16.mxu0 0
          %1217 = vmatpush1.bf16.xpose.msra.mxu0 0
          %1218 = vmatprep.subr.bf16.mxu0 0
          %1219 = vmatpush1.bf16.xpose.msra.mxu0 0
          %1220 = vmatprep.subr.bf16.mxu0 0
          %1221 = vmatpush1.bf16.xpose.msra.mxu0 0
          %1222 = vmatprep.subr.bf16.mxu0 0
          %1223 = vmatpush1.bf16.xpose.msra.mxu0 0
          %1224 = vmatprep.subr.bf16.mxu0 0
          %1225 = vmatpush1.bf16.xpose.msra.mxu0 0
          %1226 = vmatprep.subr.bf16.mxu0 0
          %1227 = vmatpush1.bf16.xpose.msra.mxu0 0
          %1228 = vmatprep.subr.bf16.mxu0 0
          %1229 = vmatpush1.bf16.xpose.msra.mxu0 0
          %1230 = vmatprep.subr.bf16.mxu0 0
          %1231 = vmatpush1.bf16.xpose.msra.mxu0 0
          %1232 = vmatprep.subr.bf16.mxu0 0
          %1233 = vmatpush1.bf16.xpose.msra.mxu0 0
          %1234 = vmatprep.subr.bf16.mxu0 0
          %1235 = vmatpush1.bf16.xpose.msra.mxu0 0
          %1236 = vmatprep.subr.bf16.mxu0 0
          %1237 = vmatpush1.bf16.xpose.msra.mxu0 0
          %1238 = vmatprep.subr.bf16.mxu0 0
          %1239 = vmatpush1.bf16.xpose.msra.mxu0 0
          %1240 = vmatprep.subr.bf16.mxu0 0
          %1241 = vmatpush1.bf16.xpose.msra.mxu0 0
          %1242 = vmatprep.mubr.bf16.mxu0 0
          %1243 = vmatmul.mubr.bf16.gmra.mrb[0].mxu0 %v1205
          %v1244 = vpop.f32.mrb[0].mxu0
          %v1245 = vadd.f32 0.0, %v1244
          %v1246 = vpop.f32.mrb[0].mxu0
          %v1247 = vpop.f32.mrb[0].mxu0
          %v1248 = vadd.f32 0.0, %v1247
          %v1249 = vpop.f32.mrb[0].mxu0
          %1250 = vdwg.mxu0
          %v1251 = vsel %vm930, %v1245, -1e+30
          %v1252 = vsel %vm931, %v1248, -1e+30
          %v1253 = vsel %vm982, %v1251, -inf
          %1254 = vmax.xlane.f32.xlu0 %v1253
          %v1255 = vpop.xlane.xlu0 %1254
          %v1256 = vsel %vm982, %v1252, -inf
          %1257 = vmax.xlane.f32.xlu0 %v1256
          %v1258 = vpop.xlane.xlu0 %1257
          %v1259 = vmax.f32 %v907, %v1255
          %v1260 = vmax.f32 %v908, %v1258
          %v1261 = vsub.f32 %v907, %v1259
          %v1262 = vsub.f32 %v908, %v1260
          %v1263 = vmul.f32 %v1261, 1.442695
          %v1264 = vpow.pop %v1263
          %v1265 = vmul.f32 %v1262, 1.442695
          %v1266 = vpow.pop %v1265
          %v1267 = vsub.f32 %v1251, %v1259
          %v1268 = vsub.f32 %v1252, %v1260
          %v1269 = vmul.f32 %v1267, 1.442695
          %v1270 = vpow.pop %v1269
          %v1271 = vmul.f32 %v1268, 1.442695
          %v1272 = vpow.pop %v1271
          %v1273 = vmul.f32 %v1264, %v909
          %v1274 = vmul.f32 %v1266, %v910
          %v1275 = vsel %vm982, %v1270, 0.0
          %1276 = vadd.xlane.f32.xlu0 %v1275
          %v1277 = vpop.xlane.xlu0 %1276
          %v1278 = vsel %vm982, %v1272, 0.0
          %1279 = vadd.xlane.f32.xlu0 %v1278
          %v1280 = vpop.xlane.xlu0 %1279
          %v1281 = vadd.f32 %v1273, %v1277
          %v1282 = vadd.f32 %v1274, %v1280
          %v1283 = vmul.f32 %v1264, %v911
          %v1284 = vmul.f32 %v1266, %v912
          %v1285 = vpack.c.bf16 %v1272, %v1270
          %1286 = vrot.lane.b32.xlu0 %v927, 64
          %v1287 = vpop.permute.xlu0 %1286
          %v1290 = vsel %vm982, %v1285, 0
          %1292 = vmatprep.subr.bf16.mxu0 0
          %1293 = vmatpush1.bf16.msra.mxu0 %v1287
          %1294 = vmatprep.subr.bf16.mxu0 0
          %1295 = vmatpush1.bf16.msra.mxu0 0
          %1296 = vmatprep.subr.bf16.mxu0 0
          %1297 = vmatpush1.bf16.msra.mxu0 0
          %1298 = vmatprep.subr.bf16.mxu0 0
          %1299 = vmatpush1.bf16.msra.mxu0 0
          %1300 = vmatprep.subr.bf16.mxu0 0
          %1301 = vmatpush1.bf16.msra.mxu0 0
          %1302 = vmatprep.subr.bf16.mxu0 0
          %1303 = vmatpush1.bf16.msra.mxu0 0
          %1304 = vmatprep.subr.bf16.mxu0 0
          %1305 = vmatpush1.bf16.msra.mxu0 0
          %1306 = vmatprep.subr.bf16.mxu0 0
          %1307 = vmatpush1.bf16.msra.mxu0 0
          %1308 = vmatprep.subr.bf16.mxu0 0
          %1309 = vmatpush1.bf16.msra.mxu0 0
          %1310 = vmatprep.subr.bf16.mxu0 0
          %1311 = vmatpush1.bf16.msra.mxu0 0
          %1312 = vmatprep.subr.bf16.mxu0 0
          %1313 = vmatpush1.bf16.msra.mxu0 0
          %1314 = vmatprep.subr.bf16.mxu0 0
          %1315 = vmatpush1.bf16.msra.mxu0 0
          %1316 = vmatprep.subr.bf16.mxu0 0
          %1317 = vmatpush1.bf16.msra.mxu0 0
          %1318 = vmatprep.subr.bf16.mxu0 0
          %1319 = vmatpush1.bf16.msra.mxu0 0
          %1320 = vmatprep.subr.bf16.mxu0 0
          %1321 = vmatpush1.bf16.msra.mxu0 0
          %1322 = vmatprep.subr.bf16.mxu0 0
          %1323 = vmatpush1.bf16.msra.mxu0 0
          %1324 = vmatprep.mubr.bf16.mxu0 0
          %1325 = vmatmul.mubr.bf16.gmra.mrb[0].mxu0 %v1290
          %v1326 = vpop.f32.mrb[0].mxu0
          %v1327 = vadd.f32 0.0, %v1326
          %v1328 = vpop.f32.mrb[0].mxu0
          %v1329 = vpop.f32.mrb[0].mxu0
          %v1330 = vadd.f32 0.0, %v1329
          %v1331 = vpop.f32.mrb[0].mxu0
          %1332 = vdwg.mxu0
          %v1333 = vadd.f32 %v1283, %v1327
          %v1334 = vadd.f32 %v1284, %v1330
          %1335 = vrot.lane.b32.xlu0 %v869, 32
          %v1336 = vpop.permute.xlu0 %1335
          %1337 = vrot.lane.b32.xlu0 %v924, 32
          %v1338 = vpop.permute.xlu0 %1337
          %v1340 = vsel %vm932, %v1336, 0
          %v1343 = vsel %vm932, %v1338, 0
          %1345 = vmatprep.subr.bf16.mxu0 0
          %1346 = vmatpush1.bf16.xpose.msra.mxu0 %v1343
          %1347 = vmatprep.subr.bf16.mxu0 0
          %1348 = vmatpush1.bf16.xpose.msra.mxu0 0
          %1349 = vmatprep.subr.bf16.mxu0 0
          %1350 = vmatpush1.bf16.xpose.msra.mxu0 0
          %1351 = vmatprep.subr.bf16.mxu0 0
          %1352 = vmatpush1.bf16.xpose.msra.mxu0 0
          %1353 = vmatprep.subr.bf16.mxu0 0
          %1354 = vmatpush1.bf16.xpose.msra.mxu0 0
          %1355 = vmatprep.subr.bf16.mxu0 0
          %1356 = vmatpush1.bf16.xpose.msra.mxu0 0
          %1357 = vmatprep.subr.bf16.mxu0 0
          %1358 = vmatpush1.bf16.xpose.msra.mxu0 0
          %1359 = vmatprep.subr.bf16.mxu0 0
          %1360 = vmatpush1.bf16.xpose.msra.mxu0 0
          %1361 = vmatprep.subr.bf16.mxu0 0
          %1362 = vmatpush1.bf16.xpose.msra.mxu0 0
          %1363 = vmatprep.subr.bf16.mxu0 0
          %1364 = vmatpush1.bf16.xpose.msra.mxu0 0
          %1365 = vmatprep.subr.bf16.mxu0 0
          %1366 = vmatpush1.bf16.xpose.msra.mxu0 0
          %1367 = vmatprep.subr.bf16.mxu0 0
          %1368 = vmatpush1.bf16.xpose.msra.mxu0 0
          %1369 = vmatprep.subr.bf16.mxu0 0
          %1370 = vmatpush1.bf16.xpose.msra.mxu0 0
          %1371 = vmatprep.subr.bf16.mxu0 0
          %1372 = vmatpush1.bf16.xpose.msra.mxu0 0
          %1373 = vmatprep.subr.bf16.mxu0 0
          %1374 = vmatpush1.bf16.xpose.msra.mxu0 0
          %1375 = vmatprep.subr.bf16.mxu0 0
          %1376 = vmatpush1.bf16.xpose.msra.mxu0 0
          %1377 = vmatprep.mubr.bf16.mxu0 0
          %1378 = vmatmul.mubr.bf16.gmra.mrb[0].mxu0 %v1340
          %v1379 = vpop.f32.mrb[0].mxu0
          %v1380 = vadd.f32 0.0, %v1379
          %v1381 = vpop.f32.mrb[0].mxu0
          %v1382 = vpop.f32.mrb[0].mxu0
          %v1383 = vadd.f32 0.0, %v1382
          %v1384 = vpop.f32.mrb[0].mxu0
          %1385 = vdwg.mxu0
          %v1386 = vsel %vm930, %v1380, -1e+30
          %v1387 = vsel %vm931, %v1383, -1e+30
          %v1388 = vsel %vm982, %v1386, -inf
          %1389 = vmax.xlane.f32.xlu0 %v1388
          %v1390 = vpop.xlane.xlu0 %1389
          %v1391 = vsel %vm982, %v1387, -inf
          %1392 = vmax.xlane.f32.xlu0 %v1391
          %v1393 = vpop.xlane.xlu0 %1392
          %v1394 = vmax.f32 %v913, %v1390
          %v1395 = vmax.f32 %v914, %v1393
          %v1396 = vsub.f32 %v913, %v1394
          %v1397 = vsub.f32 %v914, %v1395
          %v1398 = vmul.f32 %v1396, 1.442695
          %v1399 = vpow.pop %v1398
          %v1400 = vmul.f32 %v1397, 1.442695
          %v1401 = vpow.pop %v1400
          %v1402 = vsub.f32 %v1386, %v1394
          %v1403 = vsub.f32 %v1387, %v1395
          %v1404 = vmul.f32 %v1402, 1.442695
          %v1405 = vpow.pop %v1404
          %v1406 = vmul.f32 %v1403, 1.442695
          %v1407 = vpow.pop %v1406
          %v1408 = vmul.f32 %v1399, %v915
          %v1409 = vmul.f32 %v1401, %v916
          %v1410 = vsel %vm982, %v1405, 0.0
          %1411 = vadd.xlane.f32.xlu0 %v1410
          %v1412 = vpop.xlane.xlu0 %1411
          %v1413 = vsel %vm982, %v1407, 0.0
          %1414 = vadd.xlane.f32.xlu0 %v1413
          %v1415 = vpop.xlane.xlu0 %1414
          %v1416 = vadd.f32 %v1408, %v1412
          %v1417 = vadd.f32 %v1409, %v1415
          %v1418 = vmul.f32 %v1399, %v917
          %v1419 = vmul.f32 %v1401, %v918
          %v1420 = vpack.c.bf16 %v1407, %v1405
          %1421 = vrot.lane.b32.xlu0 %v927, 32
          %v1422 = vpop.permute.xlu0 %1421
          %v1425 = vsel %vm982, %v1420, 0
          %1427 = vmatprep.subr.bf16.mxu0 0
          %1428 = vmatpush1.bf16.msra.mxu0 %v1422
          %1429 = vmatprep.subr.bf16.mxu0 0
          %1430 = vmatpush1.bf16.msra.mxu0 0
          %1431 = vmatprep.subr.bf16.mxu0 0
          %1432 = vmatpush1.bf16.msra.mxu0 0
          %1433 = vmatprep.subr.bf16.mxu0 0
          %1434 = vmatpush1.bf16.msra.mxu0 0
          %1435 = vmatprep.subr.bf16.mxu0 0
          %1436 = vmatpush1.bf16.msra.mxu0 0
          %1437 = vmatprep.subr.bf16.mxu0 0
          %1438 = vmatpush1.bf16.msra.mxu0 0
          %1439 = vmatprep.subr.bf16.mxu0 0
          %1440 = vmatpush1.bf16.msra.mxu0 0
          %1441 = vmatprep.subr.bf16.mxu0 0
          %1442 = vmatpush1.bf16.msra.mxu0 0
          %1443 = vmatprep.subr.bf16.mxu0 0
          %1444 = vmatpush1.bf16.msra.mxu0 0
          %1445 = vmatprep.subr.bf16.mxu0 0
          %1446 = vmatpush1.bf16.msra.mxu0 0
          %1447 = vmatprep.subr.bf16.mxu0 0
          %1448 = vmatpush1.bf16.msra.mxu0 0
          %1449 = vmatprep.subr.bf16.mxu0 0
          %1450 = vmatpush1.bf16.msra.mxu0 0
          %1451 = vmatprep.subr.bf16.mxu0 0
          %1452 = vmatpush1.bf16.msra.mxu0 0
          %1453 = vmatprep.subr.bf16.mxu0 0
          %1454 = vmatpush1.bf16.msra.mxu0 0
          %1455 = vmatprep.subr.bf16.mxu0 0
          %1456 = vmatpush1.bf16.msra.mxu0 0
          %1457 = vmatprep.subr.bf16.mxu0 0
          %1458 = vmatpush1.bf16.msra.mxu0 0
          %1459 = vmatprep.mubr.bf16.mxu0 0
          %1460 = vmatmul.mubr.bf16.gmra.mrb[0].mxu0 %v1425
          %v1461 = vpop.f32.mrb[0].mxu0
          %v1462 = vadd.f32 0.0, %v1461
          %v1463 = vpop.f32.mrb[0].mxu0
          %v1464 = vpop.f32.mrb[0].mxu0
          %v1465 = vadd.f32 0.0, %v1464
          %v1466 = vpop.f32.mrb[0].mxu0
          %1467 = vdwg.mxu0
          %v1468 = vadd.f32 %v1418, %v1462
          %v1469 = vadd.f32 %v1419, %v1465
        $region105: #{tpu_custom_call.1} parent=71 // loop_footer
          %s892 = sadd.s32 %s890, 1
        $region106: #{tpu_custom_call.1} parent=71 // loop_footer_branch
          %889 = sbr.rel target = $region102
        $region107: #{tpu_custom_call.1} parent=71 // loop_exit
          _
        %v1470 = vrcp.pop %v897
        %v1471 = vrcp.pop %v898
        %v1472 = vmul.f32 %v899, %v1470
        %v1473 = vmul.f32 %v900, %v1471
        %v1474 = vpack.c.bf16 %v1473, %v1472
        %v1475 = vld [vmem:[#allocation12] sm:$0xf]
        %v1476 = vld [vmem:[#allocation12 + $0x4] sm:$0xf]
        %v1477 = vld [vmem:[#allocation12 + $0x8] sm:$0xf]
        %v1478 = vld [vmem:[#allocation12 + $0xc] sm:$0xf]
        %v1479 = vrcp.pop %v903
        %v1480 = vrcp.pop %v904
        %v1481 = vmul.f32 %v905, %v1479
        %v1482 = vmul.f32 %v906, %v1480
        %v1483 = vpack.c.bf16 %v1482, %v1481
        %v1484 = vld [vmem:[#allocation12 + $0x10] sm:$0xf]
        %v1485 = vld [vmem:[#allocation12 + $0x14] sm:$0xf]
        %v1486 = vld [vmem:[#allocation12 + $0x18] sm:$0xf]
        %v1487 = vld [vmem:[#allocation12 + $0x1c] sm:$0xf]
        %v1492 = vunpack.c.l.b16 %v1484
        %v1493 = vunpack.c.l.b16 %v1485
        %v1494 = vunpack.c.l.b16 %v1486
        %v1495 = vunpack.c.l.b16 %v1487
        %v1496 = vpack.c.b16 %v1493, %v1492
        %v1497 = vpack.c.b16 %v1495, %v1494
        %vm1500 = vcmask 261120
        %v1502 = vsel %vm1500, %v1483, 0
        %1504 = vmatprep.subr.bf16.mxu0 0
        %1505 = vmatpush1.bf16.msra.mxu0 %v1496
        %1506 = vmatprep.subr.bf16.mxu0 0
        %1507 = vmatpush1.bf16.msra.mxu0 %v1497
        %1508 = vmatprep.subr.bf16.mxu0 0
        %1509 = vmatpush1.bf16.msra.mxu0 0
        %1510 = vmatprep.subr.bf16.mxu0 0
        %1511 = vmatpush1.bf16.msra.mxu0 0
        %1512 = vmatprep.subr.bf16.mxu0 0
        %1513 = vmatpush1.bf16.msra.mxu0 0
        %1514 = vmatprep.subr.bf16.mxu0 0
        %1515 = vmatpush1.bf16.msra.mxu0 0
        %1516 = vmatprep.subr.bf16.mxu0 0
        %1517 = vmatpush1.bf16.msra.mxu0 0
        %1518 = vmatprep.subr.bf16.mxu0 0
        %1519 = vmatpush1.bf16.msra.mxu0 0
        %1520 = vmatprep.subr.bf16.mxu0 0
        %1521 = vmatpush1.bf16.msra.mxu0 0
        %1522 = vmatprep.subr.bf16.mxu0 0
        %1523 = vmatpush1.bf16.msra.mxu0 0
        %1524 = vmatprep.subr.bf16.mxu0 0
        %1525 = vmatpush1.bf16.msra.mxu0 0
        %1526 = vmatprep.subr.bf16.mxu0 0
        %1527 = vmatpush1.bf16.msra.mxu0 0
        %1528 = vmatprep.subr.bf16.mxu0 0
        %1529 = vmatpush1.bf16.msra.mxu0 0
        %1530 = vmatprep.subr.bf16.mxu0 0
        %1531 = vmatpush1.bf16.msra.mxu0 0
        %1532 = vmatprep.subr.bf16.mxu0 0
        %1533 = vmatpush1.bf16.msra.mxu0 0
        %1534 = vmatprep.subr.bf16.mxu0 0
        %1535 = vmatpush1.bf16.msra.mxu0 0
        %1536 = vmatprep.mubr.bf16.mxu0 0
        %1537 = vmatmul.mubr.bf16.gmra.mrb[0].mxu0 %v1502
        %v1538 = vpop.f32.mrb[0].mxu0
        %v1539 = vadd.f32 0.0, %v1538
        %v1540 = vpop.f32.mrb[0].mxu0
        %v1541 = vpop.f32.mrb[0].mxu0
        %v1542 = vadd.f32 0.0, %v1541
        %v1543 = vpop.f32.mrb[0].mxu0
        %1544 = vdwg.mxu0
        %v1549 = vunpack.c.l.b16 %v1475
        %v1550 = vunpack.c.l.b16 %v1476
        %v1551 = vunpack.c.l.b16 %v1477
        %v1552 = vunpack.c.l.b16 %v1478
        %v1553 = vpack.c.b16 %v1550, %v1549
        %v1554 = vpack.c.b16 %v1552, %v1551
        %v1558 = vsel %vm1500, %v1474, 0
        %1560 = vmatprep.subr.bf16.mxu0 0
        %1561 = vmatpush1.bf16.msra.mxu0 %v1553
        %1562 = vmatprep.subr.bf16.mxu0 0
        %1563 = vmatpush1.bf16.msra.mxu0 %v1554
        %1564 = vmatprep.subr.bf16.mxu0 0
        %1565 = vmatpush1.bf16.msra.mxu0 0
        %1566 = vmatprep.subr.bf16.mxu0 0
        %1567 = vmatpush1.bf16.msra.mxu0 0
        %1568 = vmatprep.subr.bf16.mxu0 0
        %1569 = vmatpush1.bf16.msra.mxu0 0
        %1570 = vmatprep.subr.bf16.mxu0 0
        %1571 = vmatpush1.bf16.msra.mxu0 0
        %1572 = vmatprep.subr.bf16.mxu0 0
        %1573 = vmatpush1.bf16.msra.mxu0 0
        %1574 = vmatprep.subr.bf16.mxu0 0
        %1575 = vmatpush1.bf16.msra.mxu0 0
        %1576 = vmatprep.subr.bf16.mxu0 0
        %1577 = vmatpush1.bf16.msra.mxu0 0
        %1578 = vmatprep.subr.bf16.mxu0 0
        %1579 = vmatpush1.bf16.msra.mxu0 0
        %1580 = vmatprep.subr.bf16.mxu0 0
        %1581 = vmatpush1.bf16.msra.mxu0 0
        %1582 = vmatprep.subr.bf16.mxu0 0
        %1583 = vmatpush1.bf16.msra.mxu0 0
        %1584 = vmatprep.subr.bf16.mxu0 0
        %1585 = vmatpush1.bf16.msra.mxu0 0
        %1586 = vmatprep.subr.bf16.mxu0 0
        %1587 = vmatpush1.bf16.msra.mxu0 0
        %1588 = vmatprep.subr.bf16.mxu0 0
        %1589 = vmatpush1.bf16.msra.mxu0 0
        %1590 = vmatprep.subr.bf16.mxu0 0
        %1591 = vmatpush1.bf16.msra.mxu0 0
        %1592 = vmatprep.mubr.bf16.mxu0 0
        %1593 = vmatmul.mubr.bf16.gmra.mrb[0].mxu0 %v1558
        %v1594 = vpop.f32.mrb[0].mxu0
        %v1595 = vadd.f32 %v1539, %v1594
        %v1596 = vpop.f32.mrb[0].mxu0
        %v1597 = vpop.f32.mrb[0].mxu0
        %v1598 = vadd.f32 %v1542, %v1597
        %v1599 = vpop.f32.mrb[0].mxu0
        %1600 = vdwg.mxu0
        %v1601 = vrcp.pop %v909
        %v1602 = vrcp.pop %v910
        %v1603 = vmul.f32 %v911, %v1601
        %v1604 = vmul.f32 %v912, %v1602
        %v1605 = vpack.c.bf16 %v1604, %v1603
        %v1606 = vld [vmem:[#allocation12 + $0x20] sm:$0xf]
        %v1607 = vld [vmem:[#allocation12 + $0x24] sm:$0xf]
        %v1608 = vld [vmem:[#allocation12 + $0x28] sm:$0xf]
        %v1609 = vld [vmem:[#allocation12 + $0x2c] sm:$0xf]
        %v1614 = vunpack.c.l.b16 %v1606
        %v1615 = vunpack.c.l.b16 %v1607
        %v1616 = vunpack.c.l.b16 %v1608
        %v1617 = vunpack.c.l.b16 %v1609
        %v1618 = vpack.c.b16 %v1615, %v1614
        %v1619 = vpack.c.b16 %v1617, %v1616
        %v1623 = vsel %vm1500, %v1605, 0
        %1625 = vmatprep.subr.bf16.mxu0 0
        %1626 = vmatpush1.bf16.msra.mxu0 %v1618
        %1627 = vmatprep.subr.bf16.mxu0 0
        %1628 = vmatpush1.bf16.msra.mxu0 %v1619
        %1629 = vmatprep.subr.bf16.mxu0 0
        %1630 = vmatpush1.bf16.msra.mxu0 0
        %1631 = vmatprep.subr.bf16.mxu0 0
        %1632 = vmatpush1.bf16.msra.mxu0 0
        %1633 = vmatprep.subr.bf16.mxu0 0
        %1634 = vmatpush1.bf16.msra.mxu0 0
        %1635 = vmatprep.subr.bf16.mxu0 0
        %1636 = vmatpush1.bf16.msra.mxu0 0
        %1637 = vmatprep.subr.bf16.mxu0 0
        %1638 = vmatpush1.bf16.msra.mxu0 0
        %1639 = vmatprep.subr.bf16.mxu0 0
        %1640 = vmatpush1.bf16.msra.mxu0 0
        %1641 = vmatprep.subr.bf16.mxu0 0
        %1642 = vmatpush1.bf16.msra.mxu0 0
        %1643 = vmatprep.subr.bf16.mxu0 0
        %1644 = vmatpush1.bf16.msra.mxu0 0
        %1645 = vmatprep.subr.bf16.mxu0 0
        %1646 = vmatpush1.bf16.msra.mxu0 0
        %1647 = vmatprep.subr.bf16.mxu0 0
        %1648 = vmatpush1.bf16.msra.mxu0 0
        %1649 = vmatprep.subr.bf16.mxu0 0
        %1650 = vmatpush1.bf16.msra.mxu0 0
        %1651 = vmatprep.subr.bf16.mxu0 0
        %1652 = vmatpush1.bf16.msra.mxu0 0
        %1653 = vmatprep.subr.bf16.mxu0 0
        %1654 = vmatpush1.bf16.msra.mxu0 0
        %1655 = vmatprep.subr.bf16.mxu0 0
        %1656 = vmatpush1.bf16.msra.mxu0 0
        %1657 = vmatprep.mubr.bf16.mxu0 0
        %1658 = vmatmul.mubr.bf16.gmra.mrb[0].mxu0 %v1623
        %v1659 = vpop.f32.mrb[0].mxu0
        %v1660 = vadd.f32 0.0, %v1659
        %v1661 = vpop.f32.mrb[0].mxu0
        %v1662 = vpop.f32.mrb[0].mxu0
        %v1663 = vadd.f32 0.0, %v1662
        %v1664 = vpop.f32.mrb[0].mxu0
        %1665 = vdwg.mxu0
        %v1666 = vadd.f32 %v1595, %v1660
        %v1667 = vadd.f32 %v1598, %v1663
        %v1668 = vrcp.pop %v915
        %v1669 = vrcp.pop %v916
        %v1670 = vmul.f32 %v917, %v1668
        %v1671 = vmul.f32 %v918, %v1669
        %v1672 = vpack.c.bf16 %v1671, %v1670
        %v1673 = vld [vmem:[#allocation12 + $0x30] sm:$0xf]
        %v1674 = vld [vmem:[#allocation12 + $0x34] sm:$0xf]
        %v1675 = vld [vmem:[#allocation12 + $0x38] sm:$0xf]
        %v1676 = vld [vmem:[#allocation12 + $0x3c] sm:$0xf]
        %v1681 = vunpack.c.l.b16 %v1673
        %v1682 = vunpack.c.l.b16 %v1674
        %v1683 = vunpack.c.l.b16 %v1675
        %v1684 = vunpack.c.l.b16 %v1676
        %v1685 = vpack.c.b16 %v1682, %v1681
        %v1686 = vpack.c.b16 %v1684, %v1683
        %v1690 = vsel %vm1500, %v1672, 0
        %1692 = vmatprep.subr.bf16.mxu0 0
        %1693 = vmatpush1.bf16.msra.mxu0 %v1685
        %1694 = vmatprep.subr.bf16.mxu0 0
        %1695 = vmatpush1.bf16.msra.mxu0 %v1686
        %1696 = vmatprep.subr.bf16.mxu0 0
        %1697 = vmatpush1.bf16.msra.mxu0 0
        %1698 = vmatprep.subr.bf16.mxu0 0
        %1699 = vmatpush1.bf16.msra.mxu0 0
        %1700 = vmatprep.subr.bf16.mxu0 0
        %1701 = vmatpush1.bf16.msra.mxu0 0
        %1702 = vmatprep.subr.bf16.mxu0 0
        %1703 = vmatpush1.bf16.msra.mxu0 0
        %1704 = vmatprep.subr.bf16.mxu0 0
        %1705 = vmatpush1.bf16.msra.mxu0 0
        %1706 = vmatprep.subr.bf16.mxu0 0
        %1707 = vmatpush1.bf16.msra.mxu0 0
        %1708 = vmatprep.subr.bf16.mxu0 0
        %1709 = vmatpush1.bf16.msra.mxu0 0
        %1710 = vmatprep.subr.bf16.mxu0 0
        %1711 = vmatpush1.bf16.msra.mxu0 0
        %1712 = vmatprep.subr.bf16.mxu0 0
        %1713 = vmatpush1.bf16.msra.mxu0 0
        %1714 = vmatprep.subr.bf16.mxu0 0
        %1715 = vmatpush1.bf16.msra.mxu0 0
        %1716 = vmatprep.subr.bf16.mxu0 0
        %1717 = vmatpush1.bf16.msra.mxu0 0
        %1718 = vmatprep.subr.bf16.mxu0 0
        %1719 = vmatpush1.bf16.msra.mxu0 0
        %1720 = vmatprep.subr.bf16.mxu0 0
        %1721 = vmatpush1.bf16.msra.mxu0 0
        %1722 = vmatprep.subr.bf16.mxu0 0
        %1723 = vmatpush1.bf16.msra.mxu0 0
        %1724 = vmatprep.mubr.bf16.mxu0 0
        %1725 = vmatmul.mubr.bf16.gmra.mrb[0].mxu0 %v1690
        %v1726 = vpop.f32.mrb[0].mxu0
        %v1727 = vadd.f32 0.0, %v1726
        %v1728 = vpop.f32.mrb[0].mxu0
        %v1729 = vpop.f32.mrb[0].mxu0
        %v1730 = vadd.f32 0.0, %v1729
        %v1731 = vpop.f32.mrb[0].mxu0
        %1732 = vdwg.mxu0
        %v1733 = vadd.f32 %v1666, %v1727
        %v1734 = vadd.f32 %v1667, %v1730
        %v1735 = vadd.f32 %v564, %v1733
        %v1736 = vadd.f32 %v565, %v1734
        %v1737 = vld [vmem:[%s6] sm:$0x1]
        %v1739 = vlaneseq
        %v1740 = vshrl.u32 %v1739, 7
        %v1741 = vsub.s32 0, %v1740
        %v1742 = vrot.slane %v1737, %v1741
        %v1744 = vadd.f32 %v1735, %v1742
        %v1745 = vadd.f32 %v1736, %v1742
        %v1746 = vld [vmem:[%s7] sm:$0x1]
        %v1747 = vld [vmem:[%s8] sm:$0x1]
        %1748 = vadd.xlane.f32.xlu0 %v1744
        %v1749 = vpop.xlane.xlu0 %1748
        %1750 = vadd.xlane.f32.xlu0 %v1745
        %v1751 = vpop.xlane.xlu0 %1750
        %v1752 = vmul.f32 %v1749, %v572
        %v1753 = vmul.f32 %v1751, %v572
        %v1754 = vsub.f32 %v1744, %v1752
        %v1755 = vsub.f32 %v1745, %v1753
        %v1756 = vmul.f32 %v1754, %v1754
        %v1757 = vmul.f32 %v1755, %v1755
        %1758 = vadd.xlane.f32.xlu0 %v1756
        %v1759 = vpop.xlane.xlu0 %1758
        %1760 = vadd.xlane.f32.xlu0 %v1757
        %v1761 = vpop.xlane.xlu0 %1760
        %v1762 = vmul.f32 %v1759, %v572
        %v1763 = vmul.f32 %v1761, %v572
        %v1764 = vadd.f32 %v1762, 1e-05
        %v1765 = vadd.f32 %v1763, 1e-05
        %v1766 = vrsqrt.pop %v1764
        %v1767 = vrsqrt.pop %v1765
        %v1768 = vmul.f32 %v1754, %v1766
        %v1769 = vmul.f32 %v1755, %v1767
        %v1771 = vlaneseq
        %v1772 = vshrl.u32 %v1771, 7
        %v1773 = vsub.s32 0, %v1772
        %v1774 = vrot.slane %v1746, %v1773
        %v1776 = vmul.f32 %v1768, %v1774
        %v1777 = vmul.f32 %v1769, %v1774
        %v1779 = vlaneseq
        %v1780 = vshrl.u32 %v1779, 7
        %v1781 = vsub.s32 0, %v1780
        %v1782 = vrot.slane %v1747, %v1781
        %v1784 = vadd.f32 %v1776, %v1782
        %v1785 = vadd.f32 %v1777, %v1782
        %v1786 = vpack.c.bf16 %v1785, %v1784
        %v1787 = vld [vmem:[#allocation13] sm:$0xff]
        %v1788 = vld [vmem:[#allocation13 + $0x8] sm:$0xff]
        %v1789 = vld [vmem:[#allocation13 + $0x10] sm:$0xff]
        %v1790 = vld [vmem:[#allocation13 + $0x18] sm:$0xff]
        %v1791 = vld [vmem:[#allocation13 + $0x20] sm:$0xff]
        %v1792 = vld [vmem:[#allocation13 + $0x28] sm:$0xff]
        %v1793 = vld [vmem:[#allocation13 + $0x30] sm:$0xff]
        %v1794 = vld [vmem:[#allocation13 + $0x38] sm:$0xff]
        %v1795 = vld [vmem:[#allocation13 + $0x40] sm:$0xff]
        %v1796 = vld [vmem:[#allocation13 + $0x48] sm:$0xff]
        %v1797 = vld [vmem:[#allocation13 + $0x50] sm:$0xff]
        %v1798 = vld [vmem:[#allocation13 + $0x58] sm:$0xff]
        %v1799 = vld [vmem:[#allocation13 + $0x60] sm:$0xff]
        %v1800 = vld [vmem:[#allocation13 + $0x68] sm:$0xff]
        %v1801 = vld [vmem:[#allocation13 + $0x70] sm:$0xff]
        %v1802 = vld [vmem:[#allocation13 + $0x78] sm:$0xff]
        %v1803 = vld [vmem:[#allocation13 + $0x80] sm:$0xff]
        %v1804 = vld [vmem:[#allocation13 + $0x88] sm:$0xff]
        %v1805 = vld [vmem:[#allocation13 + $0x90] sm:$0xff]
        %v1806 = vld [vmem:[#allocation13 + $0x98] sm:$0xff]
        %v1807 = vld [vmem:[#allocation13 + $0xa0] sm:$0xff]
        %v1808 = vld [vmem:[#allocation13 + $0xa8] sm:$0xff]
        %v1809 = vld [vmem:[#allocation13 + $0xb0] sm:$0xff]
        %v1810 = vld [vmem:[#allocation13 + $0xb8] sm:$0xff]
        %v1811 = vld [vmem:[#allocation13 + $0xc0] sm:$0xff]
        %v1812 = vld [vmem:[#allocation13 + $0xc8] sm:$0xff]
        %v1813 = vld [vmem:[#allocation13 + $0xd0] sm:$0xff]
        %v1814 = vld [vmem:[#allocation13 + $0xd8] sm:$0xff]
        %v1815 = vld [vmem:[#allocation13 + $0xe0] sm:$0xff]
        %v1816 = vld [vmem:[#allocation13 + $0xe8] sm:$0xff]
        %v1817 = vld [vmem:[#allocation13 + $0xf0] sm:$0xff]
        %v1818 = vld [vmem:[#allocation13 + $0xf8] sm:$0xff]
        %v1819 = vld [vmem:[%s10] sm:$0xf]
        %v1821 = vlaneseq
        %v1822 = vshrl.u32 %v1821, 7
        %v1823 = vsub.s32 0, %v1822
        %v1824 = vrot.slane %v1819, %v1823
        %v1825 = vlaneseq
        %v1826 = vshrl.u32 %v1825, 7
        %v1827 = vsub.s32 1, %v1826
        %v1828 = vrot.slane %v1819, %v1827
        %v1829 = vlaneseq
        %v1830 = vshrl.u32 %v1829, 7
        %v1831 = vsub.s32 2, %v1830
        %v1832 = vrot.slane %v1819, %v1831
        %v1833 = vlaneseq
        %v1834 = vshrl.u32 %v1833, 7
        %v1835 = vsub.s32 3, %v1834
        %v1836 = vrot.slane %v1819, %v1835
        %v1873 = vunpack.c.l.b16 %v1787
        %v1874 = vunpack.c.h.b16 %v1787
        %v1875 = vunpack.c.l.b16 %v1788
        %v1876 = vunpack.c.h.b16 %v1788
        %v1877 = vunpack.c.l.b16 %v1789
        %v1878 = vunpack.c.h.b16 %v1789
        %v1879 = vunpack.c.l.b16 %v1790
        %v1880 = vunpack.c.h.b16 %v1790
        %v1881 = vunpack.c.l.b16 %v1791
        %v1882 = vunpack.c.h.b16 %v1791
        %v1883 = vunpack.c.l.b16 %v1792
        %v1884 = vunpack.c.h.b16 %v1792
        %v1885 = vunpack.c.l.b16 %v1793
        %v1886 = vunpack.c.h.b16 %v1793
        %v1887 = vunpack.c.l.b16 %v1794
        %v1888 = vunpack.c.h.b16 %v1794
        %v1889 = vunpack.c.l.b16 %v1795
        %v1890 = vunpack.c.h.b16 %v1795
        %v1891 = vunpack.c.l.b16 %v1796
        %v1892 = vunpack.c.h.b16 %v1796
        %v1893 = vunpack.c.l.b16 %v1797
        %v1894 = vunpack.c.h.b16 %v1797
        %v1895 = vunpack.c.l.b16 %v1798
        %v1896 = vunpack.c.h.b16 %v1798
        %v1897 = vunpack.c.l.b16 %v1799
        %v1898 = vunpack.c.h.b16 %v1799
        %v1899 = vunpack.c.l.b16 %v1800
        %v1900 = vunpack.c.h.b16 %v1800
        %v1901 = vunpack.c.l.b16 %v1801
        %v1902 = vunpack.c.h.b16 %v1801
        %v1903 = vunpack.c.l.b16 %v1802
        %v1904 = vunpack.c.h.b16 %v1802
        %v1905 = vunpack.c.l.b16 %v1803
        %v1906 = vunpack.c.h.b16 %v1803
        %v1907 = vunpack.c.l.b16 %v1804
        %v1908 = vunpack.c.h.b16 %v1804
        %v1909 = vunpack.c.l.b16 %v1805
        %v1910 = vunpack.c.h.b16 %v1805
        %v1911 = vunpack.c.l.b16 %v1806
        %v1912 = vunpack.c.h.b16 %v1806
        %v1913 = vunpack.c.l.b16 %v1807
        %v1914 = vunpack.c.h.b16 %v1807
        %v1915 = vunpack.c.l.b16 %v1808
        %v1916 = vunpack.c.h.b16 %v1808
        %v1917 = vunpack.c.l.b16 %v1809
        %v1918 = vunpack.c.h.b16 %v1809
        %v1919 = vunpack.c.l.b16 %v1810
        %v1920 = vunpack.c.h.b16 %v1810
        %v1921 = vunpack.c.l.b16 %v1811
        %v1922 = vunpack.c.h.b16 %v1811
        %v1923 = vunpack.c.l.b16 %v1812
        %v1924 = vunpack.c.h.b16 %v1812
        %v1925 = vunpack.c.l.b16 %v1813
        %v1926 = vunpack.c.h.b16 %v1813
        %v1927 = vunpack.c.l.b16 %v1814
        %v1928 = vunpack.c.h.b16 %v1814
        %v1929 = vunpack.c.l.b16 %v1815
        %v1930 = vunpack.c.h.b16 %v1815
        %v1931 = vunpack.c.l.b16 %v1816
        %v1932 = vunpack.c.h.b16 %v1816
        %v1933 = vunpack.c.l.b16 %v1817
        %v1934 = vunpack.c.h.b16 %v1817
        %v1935 = vunpack.c.l.b16 %v1818
        %v1936 = vunpack.c.h.b16 %v1818
        %v1937 = vpack.c.b16 %v1877, %v1873
        %v1938 = vpack.c.b16 %v1878, %v1874
        %v1939 = vpack.c.b16 %v1879, %v1875
        %v1940 = vpack.c.b16 %v1880, %v1876
        %v1941 = vpack.c.b16 %v1885, %v1881
        %v1942 = vpack.c.b16 %v1886, %v1882
        %v1943 = vpack.c.b16 %v1887, %v1883
        %v1944 = vpack.c.b16 %v1888, %v1884
        %v1945 = vpack.c.b16 %v1893, %v1889
        %v1946 = vpack.c.b16 %v1894, %v1890
        %v1947 = vpack.c.b16 %v1895, %v1891
        %v1948 = vpack.c.b16 %v1896, %v1892
        %v1949 = vpack.c.b16 %v1901, %v1897
        %v1950 = vpack.c.b16 %v1902, %v1898
        %v1951 = vpack.c.b16 %v1903, %v1899
        %v1952 = vpack.c.b16 %v1904, %v1900
        %v1953 = vpack.c.b16 %v1909, %v1905
        %v1954 = vpack.c.b16 %v1910, %v1906
        %v1955 = vpack.c.b16 %v1911, %v1907
        %v1956 = vpack.c.b16 %v1912, %v1908
        %v1957 = vpack.c.b16 %v1917, %v1913
        %v1958 = vpack.c.b16 %v1918, %v1914
        %v1959 = vpack.c.b16 %v1919, %v1915
        %v1960 = vpack.c.b16 %v1920, %v1916
        %v1961 = vpack.c.b16 %v1925, %v1921
        %v1962 = vpack.c.b16 %v1926, %v1922
        %v1963 = vpack.c.b16 %v1927, %v1923
        %v1964 = vpack.c.b16 %v1928, %v1924
        %v1965 = vpack.c.b16 %v1933, %v1929
        %v1966 = vpack.c.b16 %v1934, %v1930
        %v1967 = vpack.c.b16 %v1935, %v1931
        %v1968 = vpack.c.b16 %v1936, %v1932
        %2001 = vmatprep.subr.bf16.mxu0 %v1938
        %2002 = vmatpush1.bf16.msra.mxu0 %v1937
        %2003 = vmatprep.subr.bf16.mxu0 %v1942
        %2004 = vmatpush1.bf16.msra.mxu0 %v1941
        %2005 = vmatprep.subr.bf16.mxu0 %v1946
        %2006 = vmatpush1.bf16.msra.mxu0 %v1945
        %2007 = vmatprep.subr.bf16.mxu0 %v1950
        %2008 = vmatpush1.bf16.msra.mxu0 %v1949
        %2009 = vmatprep.subr.bf16.mxu0 %v1954
        %2010 = vmatpush1.bf16.msra.mxu0 %v1953
        %2011 = vmatprep.subr.bf16.mxu0 %v1958
        %2012 = vmatpush1.bf16.msra.mxu0 %v1957
        %2013 = vmatprep.subr.bf16.mxu0 %v1962
        %2014 = vmatpush1.bf16.msra.mxu0 %v1961
        %2015 = vmatprep.subr.bf16.mxu0 %v1966
        %2016 = vmatpush1.bf16.msra.mxu0 %v1965
        %2017 = vmatprep.subr.bf16.mxu0 0
        %2018 = vmatpush1.bf16.msra.mxu0 0
        %2019 = vmatprep.subr.bf16.mxu0 0
        %2020 = vmatpush1.bf16.msra.mxu0 0
        %2021 = vmatprep.subr.bf16.mxu0 0
        %2022 = vmatpush1.bf16.msra.mxu0 0
        %2023 = vmatprep.subr.bf16.mxu0 0
        %2024 = vmatpush1.bf16.msra.mxu0 0
        %2025 = vmatprep.subr.bf16.mxu0 0
        %2026 = vmatpush1.bf16.msra.mxu0 0
        %2027 = vmatprep.subr.bf16.mxu0 0
        %2028 = vmatpush1.bf16.msra.mxu0 0
        %2029 = vmatprep.subr.bf16.mxu0 0
        %2030 = vmatpush1.bf16.msra.mxu0 0
        %2031 = vmatprep.subr.bf16.mxu0 0
        %2032 = vmatpush1.bf16.msra.mxu0 0
        %2033 = vmatprep.mubr.bf16.mxu0 0
        %2034 = vmatmul.mubr.bf16.gmra.mrb[0].mxu0 %v1786
        %v2035 = vpop.f32.mrb[0].mxu0
        %v2036 = vadd.f32 %v1824, %v2035
        %v2037 = vpop.f32.mrb[0].mxu0
        %v2038 = vadd.f32 %v1828, %v2037
        %v2039 = vpop.f32.mrb[0].mxu0
        %v2040 = vadd.f32 %v1824, %v2039
        %v2041 = vpop.f32.mrb[0].mxu0
        %v2042 = vadd.f32 %v1828, %v2041
        %2043 = vdwg.mxu0
        %2044 = vmatprep.subr.bf16.mxu0 %v1940
        %2045 = vmatpush1.bf16.msra.mxu0 %v1939
        %2046 = vmatprep.subr.bf16.mxu0 %v1944
        %2047 = vmatpush1.bf16.msra.mxu0 %v1943
        %2048 = vmatprep.subr.bf16.mxu0 %v1948
        %2049 = vmatpush1.bf16.msra.mxu0 %v1947
        %2050 = vmatprep.subr.bf16.mxu0 %v1952
        %2051 = vmatpush1.bf16.msra.mxu0 %v1951
        %2052 = vmatprep.subr.bf16.mxu0 %v1956
        %2053 = vmatpush1.bf16.msra.mxu0 %v1955
        %2054 = vmatprep.subr.bf16.mxu0 %v1960
        %2055 = vmatpush1.bf16.msra.mxu0 %v1959
        %2056 = vmatprep.subr.bf16.mxu0 %v1964
        %2057 = vmatpush1.bf16.msra.mxu0 %v1963
        %2058 = vmatprep.subr.bf16.mxu0 %v1968
        %2059 = vmatpush1.bf16.msra.mxu0 %v1967
        %2060 = vmatprep.subr.bf16.mxu0 0
        %2061 = vmatpush1.bf16.msra.mxu0 0
        %2062 = vmatprep.subr.bf16.mxu0 0
        %2063 = vmatpush1.bf16.msra.mxu0 0
        %2064 = vmatprep.subr.bf16.mxu0 0
        %2065 = vmatpush1.bf16.msra.mxu0 0
        %2066 = vmatprep.subr.bf16.mxu0 0
        %2067 = vmatpush1.bf16.msra.mxu0 0
        %2068 = vmatprep.subr.bf16.mxu0 0
        %2069 = vmatpush1.bf16.msra.mxu0 0
        %2070 = vmatprep.subr.bf16.mxu0 0
        %2071 = vmatpush1.bf16.msra.mxu0 0
        %2072 = vmatprep.subr.bf16.mxu0 0
        %2073 = vmatpush1.bf16.msra.mxu0 0
        %2074 = vmatprep.subr.bf16.mxu0 0
        %2075 = vmatpush1.bf16.msra.mxu0 0
        %2076 = vmatprep.mubr.bf16.mxu0 0
        %2077 = vmatmul.mubr.bf16.gmra.mrb[0].mxu0 %v1786
        %v2078 = vpop.f32.mrb[0].mxu0
        %v2079 = vadd.f32 %v1832, %v2078
        %v2080 = vpop.f32.mrb[0].mxu0
        %v2081 = vadd.f32 %v1836, %v2080
        %v2082 = vpop.f32.mrb[0].mxu0
        %v2083 = vadd.f32 %v1832, %v2082
        %v2084 = vpop.f32.mrb[0].mxu0
        %v2085 = vadd.f32 %v1836, %v2084
        %2086 = vdwg.mxu0
        %v2087 = vmax.f32 %v2036, 0.0
        %v2088 = vmax.f32 %v2038, 0.0
        %v2089 = vmax.f32 %v2079, 0.0
        %v2090 = vmax.f32 %v2081, 0.0
        %v2091 = vmax.f32 %v2040, 0.0
        %v2092 = vmax.f32 %v2042, 0.0
        %v2093 = vmax.f32 %v2083, 0.0
        %v2094 = vmax.f32 %v2085, 0.0
        %v2095 = vpack.c.bf16 %v2091, %v2087
        %v2096 = vpack.c.bf16 %v2092, %v2088
        %v2097 = vpack.c.bf16 %v2093, %v2089
        %v2098 = vpack.c.bf16 %v2094, %v2090
        %v2099 = vld [vmem:[#allocation15] sm:$0xf]
        %v2100 = vld [vmem:[#allocation15 + $0x4] sm:$0xf]
        %v2101 = vld [vmem:[#allocation15 + $0x8] sm:$0xf]
        %v2102 = vld [vmem:[#allocation15 + $0xc] sm:$0xf]
        %v2103 = vld [vmem:[#allocation15 + $0x10] sm:$0xf]
        %v2104 = vld [vmem:[#allocation15 + $0x14] sm:$0xf]
        %v2105 = vld [vmem:[#allocation15 + $0x18] sm:$0xf]
        %v2106 = vld [vmem:[#allocation15 + $0x1c] sm:$0xf]
        %v2107 = vld [vmem:[#allocation15 + $0x20] sm:$0xf]
        %v2108 = vld [vmem:[#allocation15 + $0x24] sm:$0xf]
        %v2109 = vld [vmem:[#allocation15 + $0x28] sm:$0xf]
        %v2110 = vld [vmem:[#allocation15 + $0x2c] sm:$0xf]
        %v2111 = vld [vmem:[#allocation15 + $0x30] sm:$0xf]
        %v2112 = vld [vmem:[#allocation15 + $0x34] sm:$0xf]
        %v2113 = vld [vmem:[#allocation15 + $0x38] sm:$0xf]
        %v2114 = vld [vmem:[#allocation15 + $0x3c] sm:$0xf]
        %v2115 = vld [vmem:[#allocation15 + $0x40] sm:$0xf]
        %v2116 = vld [vmem:[#allocation15 + $0x44] sm:$0xf]
        %v2117 = vld [vmem:[#allocation15 + $0x48] sm:$0xf]
        %v2118 = vld [vmem:[#allocation15 + $0x4c] sm:$0xf]
        %v2119 = vld [vmem:[#allocation15 + $0x50] sm:$0xf]
        %v2120 = vld [vmem:[#allocation15 + $0x54] sm:$0xf]
        %v2121 = vld [vmem:[#allocation15 + $0x58] sm:$0xf]
        %v2122 = vld [vmem:[#allocation15 + $0x5c] sm:$0xf]
        %v2123 = vld [vmem:[#allocation15 + $0x60] sm:$0xf]
        %v2124 = vld [vmem:[#allocation15 + $0x64] sm:$0xf]
        %v2125 = vld [vmem:[#allocation15 + $0x68] sm:$0xf]
        %v2126 = vld [vmem:[#allocation15 + $0x6c] sm:$0xf]
        %v2127 = vld [vmem:[#allocation15 + $0x70] sm:$0xf]
        %v2128 = vld [vmem:[#allocation15 + $0x74] sm:$0xf]
        %v2129 = vld [vmem:[#allocation15 + $0x78] sm:$0xf]
        %v2130 = vld [vmem:[#allocation15 + $0x7c] sm:$0xf]
        %v2131 = vld [vmem:[#allocation15 + $0x80] sm:$0xf]
        %v2132 = vld [vmem:[#allocation15 + $0x84] sm:$0xf]
        %v2133 = vld [vmem:[#allocation15 + $0x88] sm:$0xf]
        %v2134 = vld [vmem:[#allocation15 + $0x8c] sm:$0xf]
        %v2135 = vld [vmem:[#allocation15 + $0x90] sm:$0xf]
        %v2136 = vld [vmem:[#allocation15 + $0x94] sm:$0xf]
        %v2137 = vld [vmem:[#allocation15 + $0x98] sm:$0xf]
        %v2138 = vld [vmem:[#allocation15 + $0x9c] sm:$0xf]
        %v2139 = vld [vmem:[#allocation15 + $0xa0] sm:$0xf]
        %v2140 = vld [vmem:[#allocation15 + $0xa4] sm:$0xf]
        %v2141 = vld [vmem:[#allocation15 + $0xa8] sm:$0xf]
        %v2142 = vld [vmem:[#allocation15 + $0xac] sm:$0xf]
        %v2143 = vld [vmem:[#allocation15 + $0xb0] sm:$0xf]
        %v2144 = vld [vmem:[#allocation15 + $0xb4] sm:$0xf]
        %v2145 = vld [vmem:[#allocation15 + $0xb8] sm:$0xf]
        %v2146 = vld [vmem:[#allocation15 + $0xbc] sm:$0xf]
        %v2147 = vld [vmem:[#allocation15 + $0xc0] sm:$0xf]
        %v2148 = vld [vmem:[#allocation15 + $0xc4] sm:$0xf]
        %v2149 = vld [vmem:[#allocation15 + $0xc8] sm:$0xf]
        %v2150 = vld [vmem:[#allocation15 + $0xcc] sm:$0xf]
        %v2151 = vld [vmem:[#allocation15 + $0xd0] sm:$0xf]
        %v2152 = vld [vmem:[#allocation15 + $0xd4] sm:$0xf]
        %v2153 = vld [vmem:[#allocation15 + $0xd8] sm:$0xf]
        %v2154 = vld [vmem:[#allocation15 + $0xdc] sm:$0xf]
        %v2155 = vld [vmem:[#allocation15 + $0xe0] sm:$0xf]
        %v2156 = vld [vmem:[#allocation15 + $0xe4] sm:$0xf]
        %v2157 = vld [vmem:[#allocation15 + $0xe8] sm:$0xf]
        %v2158 = vld [vmem:[#allocation15 + $0xec] sm:$0xf]
        %v2159 = vld [vmem:[#allocation15 + $0xf0] sm:$0xf]
        %v2160 = vld [vmem:[#allocation15 + $0xf4] sm:$0xf]
        %v2161 = vld [vmem:[#allocation15 + $0xf8] sm:$0xf]
        %v2162 = vld [vmem:[#allocation15 + $0xfc] sm:$0xf]
        %v2163 = vld [vmem:[%s12] sm:$0x1]
        %v2165 = vlaneseq
        %v2166 = vshrl.u32 %v2165, 7
        %v2167 = vsub.s32 0, %v2166
        %v2168 = vrot.slane %v2163, %v2167
        %v2234 = vunpack.c.l.b16 %v2099
        %v2235 = vunpack.c.l.b16 %v2100
        %v2236 = vunpack.c.l.b16 %v2101
        %v2237 = vunpack.c.l.b16 %v2102
        %v2238 = vunpack.c.l.b16 %v2103
        %v2239 = vunpack.c.l.b16 %v2104
        %v2240 = vunpack.c.l.b16 %v2105
        %v2241 = vunpack.c.l.b16 %v2106
        %v2242 = vunpack.c.l.b16 %v2107
        %v2243 = vunpack.c.l.b16 %v2108
        %v2244 = vunpack.c.l.b16 %v2109
        %v2245 = vunpack.c.l.b16 %v2110
        %v2246 = vunpack.c.l.b16 %v2111
        %v2247 = vunpack.c.l.b16 %v2112
        %v2248 = vunpack.c.l.b16 %v2113
        %v2249 = vunpack.c.l.b16 %v2114
        %v2250 = vunpack.c.l.b16 %v2115
        %v2251 = vunpack.c.l.b16 %v2116
        %v2252 = vunpack.c.l.b16 %v2117
        %v2253 = vunpack.c.l.b16 %v2118
        %v2254 = vunpack.c.l.b16 %v2119
        %v2255 = vunpack.c.l.b16 %v2120
        %v2256 = vunpack.c.l.b16 %v2121
        %v2257 = vunpack.c.l.b16 %v2122
        %v2258 = vunpack.c.l.b16 %v2123
        %v2259 = vunpack.c.l.b16 %v2124
        %v2260 = vunpack.c.l.b16 %v2125
        %v2261 = vunpack.c.l.b16 %v2126
        %v2262 = vunpack.c.l.b16 %v2127
        %v2263 = vunpack.c.l.b16 %v2128
        %v2264 = vunpack.c.l.b16 %v2129
        %v2265 = vunpack.c.l.b16 %v2130
        %v2266 = vunpack.c.l.b16 %v2131
        %v2267 = vunpack.c.l.b16 %v2132
        %v2268 = vunpack.c.l.b16 %v2133
        %v2269 = vunpack.c.l.b16 %v2134
        %v2270 = vunpack.c.l.b16 %v2135
        %v2271 = vunpack.c.l.b16 %v2136
        %v2272 = vunpack.c.l.b16 %v2137
        %v2273 = vunpack.c.l.b16 %v2138
        %v2274 = vunpack.c.l.b16 %v2139
        %v2275 = vunpack.c.l.b16 %v2140
        %v2276 = vunpack.c.l.b16 %v2141
        %v2277 = vunpack.c.l.b16 %v2142
        %v2278 = vunpack.c.l.b16 %v2143
        %v2279 = vunpack.c.l.b16 %v2144
        %v2280 = vunpack.c.l.b16 %v2145
        %v2281 = vunpack.c.l.b16 %v2146
        %v2282 = vunpack.c.l.b16 %v2147
        %v2283 = vunpack.c.l.b16 %v2148
        %v2284 = vunpack.c.l.b16 %v2149
        %v2285 = vunpack.c.l.b16 %v2150
        %v2286 = vunpack.c.l.b16 %v2151
        %v2287 = vunpack.c.l.b16 %v2152
        %v2288 = vunpack.c.l.b16 %v2153
        %v2289 = vunpack.c.l.b16 %v2154
        %v2290 = vunpack.c.l.b16 %v2155
        %v2291 = vunpack.c.l.b16 %v2156
        %v2292 = vunpack.c.l.b16 %v2157
        %v2293 = vunpack.c.l.b16 %v2158
        %v2294 = vunpack.c.l.b16 %v2159
        %v2295 = vunpack.c.l.b16 %v2160
        %v2296 = vunpack.c.l.b16 %v2161
        %v2297 = vunpack.c.l.b16 %v2162
        %v2298 = vpack.c.b16 %v2235, %v2234
        %v2299 = vpack.c.b16 %v2237, %v2236
        %v2300 = vpack.c.b16 %v2239, %v2238
        %v2301 = vpack.c.b16 %v2241, %v2240
        %v2302 = vpack.c.b16 %v2243, %v2242
        %v2303 = vpack.c.b16 %v2245, %v2244
        %v2304 = vpack.c.b16 %v2247, %v2246
        %v2305 = vpack.c.b16 %v2249, %v2248
        %v2306 = vpack.c.b16 %v2251, %v2250
        %v2307 = vpack.c.b16 %v2253, %v2252
        %v2308 = vpack.c.b16 %v2255, %v2254
        %v2309 = vpack.c.b16 %v2257, %v2256
        %v2310 = vpack.c.b16 %v2259, %v2258
        %v2311 = vpack.c.b16 %v2261, %v2260
        %v2312 = vpack.c.b16 %v2263, %v2262
        %v2313 = vpack.c.b16 %v2265, %v2264
        %v2314 = vpack.c.b16 %v2267, %v2266
        %v2315 = vpack.c.b16 %v2269, %v2268
        %v2316 = vpack.c.b16 %v2271, %v2270
        %v2317 = vpack.c.b16 %v2273, %v2272
        %v2318 = vpack.c.b16 %v2275, %v2274
        %v2319 = vpack.c.b16 %v2277, %v2276
        %v2320 = vpack.c.b16 %v2279, %v2278
        %v2321 = vpack.c.b16 %v2281, %v2280
        %v2322 = vpack.c.b16 %v2283, %v2282
        %v2323 = vpack.c.b16 %v2285, %v2284
        %v2324 = vpack.c.b16 %v2287, %v2286
        %v2325 = vpack.c.b16 %v2289, %v2288
        %v2326 = vpack.c.b16 %v2291, %v2290
        %v2327 = vpack.c.b16 %v2293, %v2292
        %v2328 = vpack.c.b16 %v2295, %v2294
        %v2329 = vpack.c.b16 %v2297, %v2296
        %2362 = vmatprep.subr.bf16.mxu0 0
        %2363 = vmatpush1.bf16.msra.mxu0 %v2298
        %2364 = vmatprep.subr.bf16.mxu0 0
        %2365 = vmatpush1.bf16.msra.mxu0 %v2299
        %2366 = vmatprep.subr.bf16.mxu0 0
        %2367 = vmatpush1.bf16.msra.mxu0 %v2300
        %2368 = vmatprep.subr.bf16.mxu0 0
        %2369 = vmatpush1.bf16.msra.mxu0 %v2301
        %2370 = vmatprep.subr.bf16.mxu0 0
        %2371 = vmatpush1.bf16.msra.mxu0 %v2302
        %2372 = vmatprep.subr.bf16.mxu0 0
        %2373 = vmatpush1.bf16.msra.mxu0 %v2303
        %2374 = vmatprep.subr.bf16.mxu0 0
        %2375 = vmatpush1.bf16.msra.mxu0 %v2304
        %2376 = vmatprep.subr.bf16.mxu0 0
        %2377 = vmatpush1.bf16.msra.mxu0 %v2305
        %2378 = vmatprep.subr.bf16.mxu0 0
        %2379 = vmatpush1.bf16.msra.mxu0 %v2306
        %2380 = vmatprep.subr.bf16.mxu0 0
        %2381 = vmatpush1.bf16.msra.mxu0 %v2307
        %2382 = vmatprep.subr.bf16.mxu0 0
        %2383 = vmatpush1.bf16.msra.mxu0 %v2308
        %2384 = vmatprep.subr.bf16.mxu0 0
        %2385 = vmatpush1.bf16.msra.mxu0 %v2309
        %2386 = vmatprep.subr.bf16.mxu0 0
        %2387 = vmatpush1.bf16.msra.mxu0 %v2310
        %2388 = vmatprep.subr.bf16.mxu0 0
        %2389 = vmatpush1.bf16.msra.mxu0 %v2311
        %2390 = vmatprep.subr.bf16.mxu0 0
        %2391 = vmatpush1.bf16.msra.mxu0 %v2312
        %2392 = vmatprep.subr.bf16.mxu0 0
        %2393 = vmatpush1.bf16.msra.mxu0 %v2313
        %2394 = vmatprep.mubr.bf16.mxu0 %v2096
        %2395 = vmatmul.mubr.bf16.gmra.mrb[0].mxu0 %v2095
        %v2396 = vpop.f32.mrb[0].mxu0
        %v2397 = vadd.f32 %v2168, %v2396
        %v2398 = vpop.f32.mrb[0].mxu0
        %v2399 = vpop.f32.mrb[0].mxu0
        %v2400 = vadd.f32 %v2168, %v2399
        %v2401 = vpop.f32.mrb[0].mxu0
        %2402 = vdwg.mxu0
        %2403 = vmatprep.subr.bf16.mxu0 0
        %2404 = vmatpush1.bf16.msra.mxu0 %v2314
        %2405 = vmatprep.subr.bf16.mxu0 0
        %2406 = vmatpush1.bf16.msra.mxu0 %v2315
        %2407 = vmatprep.subr.bf16.mxu0 0
        %2408 = vmatpush1.bf16.msra.mxu0 %v2316
        %2409 = vmatprep.subr.bf16.mxu0 0
        %2410 = vmatpush1.bf16.msra.mxu0 %v2317
        %2411 = vmatprep.subr.bf16.mxu0 0
        %2412 = vmatpush1.bf16.msra.mxu0 %v2318
        %2413 = vmatprep.subr.bf16.mxu0 0
        %2414 = vmatpush1.bf16.msra.mxu0 %v2319
        %2415 = vmatprep.subr.bf16.mxu0 0
        %2416 = vmatpush1.bf16.msra.mxu0 %v2320
        %2417 = vmatprep.subr.bf16.mxu0 0
        %2418 = vmatpush1.bf16.msra.mxu0 %v2321
        %2419 = vmatprep.subr.bf16.mxu0 0
        %2420 = vmatpush1.bf16.msra.mxu0 %v2322
        %2421 = vmatprep.subr.bf16.mxu0 0
        %2422 = vmatpush1.bf16.msra.mxu0 %v2323
        %2423 = vmatprep.subr.bf16.mxu0 0
        %2424 = vmatpush1.bf16.msra.mxu0 %v2324
        %2425 = vmatprep.subr.bf16.mxu0 0
        %2426 = vmatpush1.bf16.msra.mxu0 %v2325
        %2427 = vmatprep.subr.bf16.mxu0 0
        %2428 = vmatpush1.bf16.msra.mxu0 %v2326
        %2429 = vmatprep.subr.bf16.mxu0 0
        %2430 = vmatpush1.bf16.msra.mxu0 %v2327
        %2431 = vmatprep.subr.bf16.mxu0 0
        %2432 = vmatpush1.bf16.msra.mxu0 %v2328
        %2433 = vmatprep.subr.bf16.mxu0 0
        %2434 = vmatpush1.bf16.msra.mxu0 %v2329
        %2435 = vmatprep.mubr.bf16.mxu0 %v2098
        %2436 = vmatmul.mubr.bf16.gmra.mrb[0].mxu0 %v2097
        %v2437 = vpop.f32.mrb[0].mxu0
        %v2438 = vadd.f32 %v2397, %v2437
        %v2439 = vpop.f32.mrb[0].mxu0
        %v2440 = vpop.f32.mrb[0].mxu0
        %v2441 = vadd.f32 %v2400, %v2440
        %v2442 = vpop.f32.mrb[0].mxu0
        %2443 = vdwg.mxu0
        %v2444 = vadd.f32 %v1744, %v2438
        %v2445 = vadd.f32 %v1745, %v2441
        %2446 = vst [vmem:[%s559] sm:$0xff] %v2444
        %2447 = vst [vmem:[%s559 + $0x8] sm:$0xff] %v2445
        %s2448 = sand.u32 %s335, 1
        %s2449 = scalar_lea.sflag [#allocation6], %s2448
        %s2450 = sand.u32 %s335, 1
        %s2451 = smul.addr %s2450, 16
        %s2452 = scalar_lea.vmem [#allocation16], %s2451
        // Predicated region
        $region108: #{tpu_custom_call.1} parent=71 // pred_check
          %p2453 = pneg %p345
        $region109: #{tpu_custom_call.1} parent=71 // pred_check_branch
          %2455 = sbr.rel (%p2453) target = $region111
        $region110: #{tpu_custom_call.1} parent=71 // pred_region
          %s2456 = smul.u32 2, %s38
          %s2458 = ssub.s32 256, 256
          %2459 = vsyncadd %s2449, %s2458
          %s2460 = smul.addr %s37, 4
          %s2461 = sadd.s32 %s2456, %s2460
          %s2462 = smul.addr %s2461, 128
          %s2463 = scalar_lea.hbm %s13, %s2462
          %s2464 = sshll.u32 %s2452, 4
          %s2465 = int_to_ptr.vmem [resolvable:$true] %s2464
          %2470 = dma.vmem_to_hbm [thread:$0]  %s2465, 256, %s2463, %s2449, 128, 128, 8
        $region111: #{tpu_custom_call.1} parent=71 // pred_fallthru
          _
      $region72: #{tpu_custom_call.1} parent=5 // pred_fallthru
        _
      %p2471 = scmp.le.s32.totalorder 2, %s28
      // Predicated region
      $region112: #{tpu_custom_call.1} parent=5 // pred_check
        %p2472 = pneg %p2471
      $region113: #{tpu_custom_call.1} parent=5 // pred_check_branch
        %2474 = sbr.rel (%p2472) target = $region115
      $region114: #{tpu_custom_call.1} parent=5 // pred_region
        %s2475 = ssub.s32 %s28, 2
        // Predicated region
        $region116: #{tpu_custom_call.1} parent=114 // pred_check
          %p2476 = pneg %p351
        $region117: #{tpu_custom_call.1} parent=114 // pred_check_branch
          %2478 = sbr.rel (%p2476) target = $region119
        $region118: #{tpu_custom_call.1} parent=114 // pred_region
          %s2479 = sand.u32 %s336, 1
          %s2480 = scalar_lea.sflag [#allocation6], %s2479
          %s2481 = sand.u32 %s336, 1
          %s2482 = smul.addr %s2481, 16
          %s2483 = scalar_lea.vmem [#allocation16], %s2482
          %2484 = dma.done %s2480, 256
        $region119: #{tpu_custom_call.1} parent=114 // pred_fallthru
          _
      $region115: #{tpu_custom_call.1} parent=5 // pred_fallthru
        _
    $region6: #{tpu_custom_call.1} parent=1 // loop_footer
      %s32 = sadd.s32 1, %s28
    $region7: #{tpu_custom_call.1} parent=1 // loop_footer_branch
      %27 = sbr.rel target = $region3
    $region8: #{tpu_custom_call.1} parent=1 // loop_exit
      _
    %2485 = vsyncpa [#allocation5], 1
    %s2486 = scalar_lea.sflag [#allocation5], 1
    %2487 = vsyncpa %s2486, 1
    %2488 = vsyncpa [#allocation8], 1
    %2489 = vsyncpa [#allocation11], 1
    %2490 = vsyncpa [#allocation14], 1
    %2491 = vsyncpa [#allocation6], 1
    %s2492 = scalar_lea.sflag [#allocation6], 1
    %2493 = vsyncpa %s2492, 1

// kernel: tpu_custom_call.1
$region0: #{tpu_custom_call.1}
  #allocation0 [shape = 'u32[]', space=smem, size = 0x4, offset = 0x4, fixed_abs, tag = 'smem constant byte address 0x4 - core index']
  #allocation1 [shape = 'u32[144,128]{1,0:T(1,128)}', space=vmem, size = 0x12000, scoped, tag = 'internal scratch']
  #allocation2 [shape = 'bf16[32,128]{1,0:T(16,128)(2,1)}', space=vmem, size = 0x2000, scoped, tag = 'scratch operand']
  #allocation3 [shape = 'bf16[32,128]{1,0:T(16,128)(2,1)}', space=vmem, size = 0x2000, scoped, tag = 'scratch operand']
  %s0 = inlined_call_operand.hbm [shape: f32[2,32,128], index: 0, kind: input, shape index: {}]
  %s1 = inlined_call_operand.hbm [shape: f32[1,128], index: 1, kind: input, shape index: {}]
  %s2 = inlined_call_operand.hbm [shape: f32[1,128], index: 2, kind: input, shape index: {}]
  %s3 = inlined_call_operand.hbm [shape: bf16[128,384], index: 3, kind: input, shape index: {}]
  %s4 = inlined_call_operand.vmem [shape: f32[1,384], index: 4, kind: input, shape index: {}]
  %s5 = inlined_call_operand.hbm [shape: bf16[128,128], index: 5, kind: input, shape index: {}]
  %s6 = inlined_call_operand.vmem [shape: f32[1,128], index: 6, kind: input, shape index: {}]
  %s7 = inlined_call_operand.vmem [shape: f32[1,128], index: 7, kind: input, shape index: {}]
  %s8 = inlined_call_operand.vmem [shape: f32[1,128], index: 8, kind: input, shape index: {}]
  %s9 = inlined_call_operand.hbm [shape: bf16[128,512], index: 9, kind: input, shape index: {}]
  %s10 = inlined_call_operand.vmem [shape: f32[1,512], index: 10, kind: input, shape index: {}]
  %s11 = inlined_call_operand.hbm [shape: bf16[512,128], index: 11, kind: input, shape index: {}]
  %s12 = inlined_call_operand.vmem [shape: f32[1,128], index: 12, kind: input, shape index: {}]
  %s13 = inlined_call_operand.hbm [shape: f32[2,32,128], index: 13, kind: output, shape index: {}]
  %s14 = sld [smem:[#allocation0]]
  $region120: #{tpu_custom_call.1} parent=0
    _
  %s16 = ssub.s32 1, %s14
  %s17 = scalar_select 0, %s16, %s14
  $region1: #{tpu_custom_call.1} parent=0
    #allocation4 [shape = 'u8[16384]{0}', space=vmem, size = 0x4000, scoped, tag = 'input window, operand 0']
    #allocation5 [shape = 's32[2]{0}', space=sflag, size = 0x8, scoped, tag = 'scoped memory for tpu_custom_call.1']
    #allocation6 [shape = 's32[2]{0}', space=sflag, size = 0x8, scoped, tag = 'scoped memory for tpu_custom_call.1']
    #allocation7 [shape = 'u8[512]{0}', space=vmem, size = 0x400, scoped, tag = 'input window, operand 1, single buffered']
    #allocation8 [shape = 's32[1]{0}', space=sflag, size = 0x4, scoped, tag = 'scoped memory for tpu_custom_call.1']
    #allocation9 [shape = 'u8[512]{0}', space=vmem, size = 0x400, scoped, tag = 'input window, operand 2, single buffered']
    #allocation10 [shape = 'u8[98304]{0}', space=vmem, size = 0x18000, scoped, tag = 'input window, operand 3, single buffered']
    #allocation11 [shape = 's32[1]{0}', space=sflag, size = 0x4, scoped, tag = 'scoped memory for tpu_custom_call.1']
    #allocation12 [shape = 'u8[32768]{0}', space=vmem, size = 0x8000, scoped, tag = 'input window, operand 5, single buffered']
    #allocation13 [shape = 'u8[131072]{0}', space=vmem, size = 0x20000, scoped, tag = 'input window, operand 9, single buffered']
    #allocation14 [shape = 's32[1]{0}', space=sflag, size = 0x4, scoped, tag = 'scoped memory for tpu_custom_call.1']
    #allocation15 [shape = 'u8[131072]{0}', space=vmem, size = 0x20000, scoped, tag = 'input window, operand 11, single buffered']
    #allocation16 [shape = 'u8[16384]{0}', space=vmem, size = 0x4000, scoped, tag = 'output window, operand 0']
    %18 = vsyncpa [#allocation5], 0
    %s19 = scalar_lea.sflag [#allocation5], 1
    %20 = vsyncpa %s19, 0
    %21 = vsyncpa [#allocation8], 0
    %22 = vsyncpa [#allocation11], 0
    %23 = vsyncpa [#allocation14], 0
    %24 = vsyncpa [#allocation6], 0
    %s25 = scalar_lea.sflag [#allocation6], 1
    %26 = vsyncpa %s25, 0
    loop: start=0, step=1, limit=6
    $region2: #{tpu_custom_call.1} parent=1 // loop_pre_header
      _
    $region3: #{tpu_custom_call.1} parent=1 // loop_header
      %s28 = sphi 0, %s32
      %p29 = scmp.ge.s32.totalorder %s28, 6
      %s35 = sphi 0, %s47
      %s36 = sphi 0, %s43
      %s37 = sphi 0, %s35
      %s38 = sphi 0, %s36
      %s39 = sphi 0, %s37
      %s40 = sphi 0, %s38
      %s52 = sphi 0, %s54
      %s55 = sphi 0, %s52
      %s56 = sphi 0, %s55
      %s72 = sphi 0, %s56
      %s76 = sphi 0, %s76
      %s78 = sphi 0, %s76
      %s79 = sphi 0, %s78
      %s93 = sphi 0, %s79
      %s97 = sphi 0, %s97
      %s99 = sphi 0, %s97
      %s100 = sphi 0, %s99
      %s114 = sphi 0, %s100
      %s118 = sphi 0, %s118
      %s120 = sphi 0, %s118
      %s121 = sphi 0, %s120
      %s135 = sphi 0, %s121
      %s139 = sphi 0, %s139
      %s141 = sphi 0, %s139
      %s142 = sphi 0, %s141
      %s156 = sphi 0, %s142
      %s160 = sphi 0, %s160
      %s162 = sphi 0, %s160
      %s163 = sphi 0, %s162
      %s177 = sphi 0, %s163
      %s181 = sphi 0, %s181
      %s183 = sphi 0, %s181
      %s184 = sphi 0, %s183
      %s198 = sphi 0, %s184
      %s202 = sphi 0, %s202
      %s204 = sphi 0, %s202
      %s205 = sphi 0, %s204
      %s219 = sphi 0, %s205
      %s223 = sphi 0, %s223
      %s225 = sphi 0, %s223
      %s226 = sphi 0, %s225
      %s240 = sphi 0, %s226
      %s244 = sphi 0, %s244
      %s246 = sphi 0, %s244
      %s247 = sphi 0, %s246
      %s261 = sphi 0, %s247
      %s265 = sphi 0, %s265
      %s267 = sphi 0, %s265
      %s268 = sphi 0, %s267
      %s282 = sphi 0, %s268
      %s286 = sphi 0, %s286
      %s288 = sphi 0, %s286
      %s289 = sphi 0, %s288
      %s303 = sphi 0, %s289
      %s307 = sphi 0, %s307
      %s309 = sphi 0, %s307
      %s310 = sphi 0, %s309
      %s324 = sphi 0, %s310
      %s332 = sphi 0, %s334
      %s335 = sphi 0, %s332
      %s336 = sphi 0, %s335
      %s352 = sphi 0, %s336
    $region4: #{tpu_custom_call.1} parent=1 // loop_header_branch
      %31 = sbr.rel (%p29) target = $region8
    $region5: #{tpu_custom_call.1} parent=1 // loop_body
      %s33 = ssub.s32 %s28, 1
      %s34 = ssub.s32 %s28, 2
      %s41 = sadd.s32 1, %s36
      %p42 = scmp.ge.s32.totalorder %s41, 2
      %s43 = scalar_select %p42, 0, %s41
      %s44 = sadd.s32 1, %s35
      %s45 = scalar_select %p42, %s44, %s35
      %p46 = scmp.ge.s32.totalorder %s45, 2
      %s47 = scalar_select %p46, 0, %s45
      %s48 = ssub.s32 %s35, %s47
      %s49 = ssub.s32 %s36, %s43
      %s50 = sor.u32 %s48, %s49
      %p51 = scmp.eq.s32.totalorder %s50, 0
      %s53 = sadd.s32 %s52, 1
      %s54 = scalar_select %p51, %s52, %s53
      %p57 = pneg %p51
      %p58 = scmp.eq.s32.totalorder %s28, 3
      %p59 = por %p57, %p58
      %p60 = scmp.ne.s32.totalorder %s52, %s55
      %p61 = scmp.eq.s32.totalorder %s28, 0
      %p62 = por %p60, %p61
      %p63 = scmp.ne.s32.totalorder %s52, %s55
      %p64 = scmp.eq.s32.totalorder %s33, 3
      %p65 = por %p63, %p64
      %p66 = scmp.ne.s32.totalorder %s55, %s56
      %p67 = scmp.eq.s32.totalorder %s33, 0
      %p68 = por %p66, %p67
      %p69 = scmp.ne.s32.totalorder %s55, %s56
      %p70 = scmp.eq.s32.totalorder %s34, 3
      %p71 = por %p69, %p70
      %p73 = scmp.ne.s32.totalorder %s56, %s72
      %p74 = scmp.eq.s32.totalorder %s34, 0
      %p75 = por %p73, %p74
      %s77 = sadd.s32 %s76, 1
      %p80 = scmp.eq.s32.totalorder %s28, 3
      %p81 = scmp.ne.s32.totalorder %s76, %s78
      %p82 = scmp.eq.s32.totalorder %s28, 0
      %p83 = por %p81, %p82
      %p84 = scmp.ne.s32.totalorder %s76, %s78
      %p85 = scmp.eq.s32.totalorder %s33, 3
      %p86 = por %p84, %p85
      %p87 = scmp.ne.s32.totalorder %s78, %s79
      %p88 = scmp.eq.s32.totalorder %s33, 0
      %p89 = por %p87, %p88
      %p90 = scmp.ne.s32.totalorder %s78, %s79
      %p91 = scmp.eq.s32.totalorder %s34, 3
      %p92 = por %p90, %p91
      %p94 = scmp.ne.s32.totalorder %s79, %s93
      %p95 = scmp.eq.s32.totalorder %s34, 0
      %p96 = por %p94, %p95
      %s98 = sadd.s32 %s97, 1
      %p101 = scmp.eq.s32.totalorder %s28, 3
      %p102 = scmp.ne.s32.totalorder %s97, %s99
      %p103 = scmp.eq.s32.totalorder %s28, 0
      %p104 = por %p102, %p103
      %p105 = scmp.ne.s32.totalorder %s97, %s99
      %p106 = scmp.eq.s32.totalorder %s33, 3
      %p107 = por %p105, %p106
      %p108 = scmp.ne.s32.totalorder %s99, %s100
      %p109 = scmp.eq.s32.totalorder %s33, 0
      %p110 = por %p108, %p109
      %p111 = scmp.ne.s32.totalorder %s99, %s100
      %p112 = scmp.eq.s32.totalorder %s34, 3
      %p113 = por %p111, %p112
      %p115 = scmp.ne.s32.totalorder %s100, %s114
      %p116 = scmp.eq.s32.totalorder %s34, 0
      %p117 = por %p115, %p116
      %s119 = sadd.s32 %s118, 1
      %p122 = scmp.eq.s32.totalorder %s28, 3
      %p123 = scmp.ne.s32.totalorder %s118, %s120
      %p124 = scmp.eq.s32.totalorder %s28, 0
      %p125 = por %p123, %p124
      %p126 = scmp.ne.s32.totalorder %s118, %s120
      %p127 = scmp.eq.s32.totalorder %s33, 3
      %p128 = por %p126, %p127
      %p129 = scmp.ne.s32.totalorder %s120, %s121
      %p130 = scmp.eq.s32.totalorder %s33, 0
      %p131 = por %p129, %p130
      %p132 = scmp.ne.s32.totalorder %s120, %s121
      %p133 = scmp.eq.s32.totalorder %s34, 3
      %p134 = por %p132, %p133
      %p136 = scmp.ne.s32.totalorder %s121, %s135
      %p137 = scmp.eq.s32.totalorder %s34, 0
      %p138 = por %p136, %p137
      %s140 = sadd.s32 %s139, 1
      %p143 = scmp.eq.s32.totalorder %s28, 3
      %p144 = scmp.ne.s32.totalorder %s139, %s141
      %p145 = scmp.eq.s32.totalorder %s28, 0
      %p146 = por %p144, %p145
      %p147 = scmp.ne.s32.totalorder %s139, %s141
      %p148 = scmp.eq.s32.totalorder %s33, 3
      %p149 = por %p147, %p148
      %p150 = scmp.ne.s32.totalorder %s141, %s142
      %p151 = scmp.eq.s32.totalorder %s33, 0
      %p152 = por %p150, %p151
      %p153 = scmp.ne.s32.totalorder %s141, %s142
      %p154 = scmp.eq.s32.totalorder %s34, 3
      %p155 = por %p153, %p154
      %p157 = scmp.ne.s32.totalorder %s142, %s156
      %p158 = scmp.eq.s32.totalorder %s34, 0
      %p159 = por %p157, %p158
      %s161 = sadd.s32 %s160, 1
      %p164 = scmp.eq.s32.totalorder %s28, 3
      %p165 = scmp.ne.s32.totalorder %s160, %s162
      %p166 = scmp.eq.s32.totalorder %s28, 0
      %p167 = por %p165, %p166
      %p168 = scmp.ne.s32.totalorder %s160, %s162
      %p169 = scmp.eq.s32.totalorder %s33, 3
      %p170 = por %p168, %p169
      %p171 = scmp.ne.s32.totalorder %s162, %s163
      %p172 = scmp.eq.s32.totalorder %s33, 0
      %p173 = por %p171, %p172
      %p174 = scmp.ne.s32.totalorder %s162, %s163
      %p175 = scmp.eq.s32.totalorder %s34, 3
      %p176 = por %p174, %p175
      %p178 = scmp.ne.s32.totalorder %s163, %s177
      %p179 = scmp.eq.s32.totalorder %s34, 0
      %p180 = por %p178, %p179
      %s182 = sadd.s32 %s181, 1
      %p185 = scmp.eq.s32.totalorder %s28, 3
      %p186 = scmp.ne.s32.totalorder %s181, %s183
      %p187 = scmp.eq.s32.totalorder %s28, 0
      %p188 = por %p186, %p187
      %p189 = scmp.ne.s32.totalorder %s181, %s183
      %p190 = scmp.eq.s32.totalorder %s33, 3
      %p191 = por %p189, %p190
      %p192 = scmp.ne.s32.totalorder %s183, %s184
      %p193 = scmp.eq.s32.totalorder %s33, 0
      %p194 = por %p192, %p193
      %p195 = scmp.ne.s32.totalorder %s183, %s184
      %p196 = scmp.eq.s32.totalorder %s34, 3
      %p197 = por %p195, %p196
      %p199 = scmp.ne.s32.totalorder %s184, %s198
      %p200 = scmp.eq.s32.totalorder %s34, 0
      %p201 = por %p199, %p200
      %s203 = sadd.s32 %s202, 1
      %p206 = scmp.eq.s32.totalorder %s28, 3
      %p207 = scmp.ne.s32.totalorder %s202, %s204
      %p208 = scmp.eq.s32.totalorder %s28, 0
      %p209 = por %p207, %p208
      %p210 = scmp.ne.s32.totalorder %s202, %s204
      %p211 = scmp.eq.s32.totalorder %s33, 3
      %p212 = por %p210, %p211
      %p213 = scmp.ne.s32.totalorder %s204, %s205
      %p214 = scmp.eq.s32.totalorder %s33, 0
      %p215 = por %p213, %p214
      %p216 = scmp.ne.s32.totalorder %s204, %s205
      %p217 = scmp.eq.s32.totalorder %s34, 3
      %p218 = por %p216, %p217
      %p220 = scmp.ne.s32.totalorder %s205, %s219
      %p221 = scmp.eq.s32.totalorder %s34, 0
      %p222 = por %p220, %p221
      %s224 = sadd.s32 %s223, 1
      %p227 = scmp.eq.s32.totalorder %s28, 3
      %p228 = scmp.ne.s32.totalorder %s223, %s225
      %p229 = scmp.eq.s32.totalorder %s28, 0
      %p230 = por %p228, %p229
      %p231 = scmp.ne.s32.totalorder %s223, %s225
      %p232 = scmp.eq.s32.totalorder %s33, 3
      %p233 = por %p231, %p232
      %p234 = scmp.ne.s32.totalorder %s225, %s226
      %p235 = scmp.eq.s32.totalorder %s33, 0
      %p236 = por %p234, %p235
      %p237 = scmp.ne.s32.totalorder %s225, %s226
      %p238 = scmp.eq.s32.totalorder %s34, 3
      %p239 = por %p237, %p238
      %p241 = scmp.ne.s32.totalorder %s226, %s240
      %p242 = scmp.eq.s32.totalorder %s34, 0
      %p243 = por %p241, %p242
      %s245 = sadd.s32 %s244, 1
      %p248 = scmp.eq.s32.totalorder %s28, 3
      %p249 = scmp.ne.s32.totalorder %s244, %s246
      %p250 = scmp.eq.s32.totalorder %s28, 0
      %p251 = por %p249, %p250
      %p252 = scmp.ne.s32.totalorder %s244, %s246
      %p253 = scmp.eq.s32.totalorder %s33, 3
      %p254 = por %p252, %p253
      %p255 = scmp.ne.s32.totalorder %s246, %s247
      %p256 = scmp.eq.s32.totalorder %s33, 0
      %p257 = por %p255, %p256
      %p258 = scmp.ne.s32.totalorder %s246, %s247
      %p259 = scmp.eq.s32.totalorder %s34, 3
      %p260 = por %p258, %p259
      %p262 = scmp.ne.s32.totalorder %s247, %s261
      %p263 = scmp.eq.s32.totalorder %s34, 0
      %p264 = por %p262, %p263
      %s266 = sadd.s32 %s265, 1
      %p269 = scmp.eq.s32.totalorder %s28, 3
      %p270 = scmp.ne.s32.totalorder %s265, %s267
      %p271 = scmp.eq.s32.totalorder %s28, 0
      %p272 = por %p270, %p271
      %p273 = scmp.ne.s32.totalorder %s265, %s267
      %p274 = scmp.eq.s32.totalorder %s33, 3
      %p275 = por %p273, %p274
      %p276 = scmp.ne.s32.totalorder %s267, %s268
      %p277 = scmp.eq.s32.totalorder %s33, 0
      %p278 = por %p276, %p277
      %p279 = scmp.ne.s32.totalorder %s267, %s268
      %p280 = scmp.eq.s32.totalorder %s34, 3
      %p281 = por %p279, %p280
      %p283 = scmp.ne.s32.totalorder %s268, %s282
      %p284 = scmp.eq.s32.totalorder %s34, 0
      %p285 = por %p283, %p284
      %s287 = sadd.s32 %s286, 1
      %p290 = scmp.eq.s32.totalorder %s28, 3
      %p291 = scmp.ne.s32.totalorder %s286, %s288
      %p292 = scmp.eq.s32.totalorder %s28, 0
      %p293 = por %p291, %p292
      %p294 = scmp.ne.s32.totalorder %s286, %s288
      %p295 = scmp.eq.s32.totalorder %s33, 3
      %p296 = por %p294, %p295
      %p297 = scmp.ne.s32.totalorder %s288, %s289
      %p298 = scmp.eq.s32.totalorder %s33, 0
      %p299 = por %p297, %p298
      %p300 = scmp.ne.s32.totalorder %s288, %s289
      %p301 = scmp.eq.s32.totalorder %s34, 3
      %p302 = por %p300, %p301
      %p304 = scmp.ne.s32.totalorder %s289, %s303
      %p305 = scmp.eq.s32.totalorder %s34, 0
      %p306 = por %p304, %p305
      %s308 = sadd.s32 %s307, 1
      %p311 = scmp.eq.s32.totalorder %s28, 3
      %p312 = scmp.ne.s32.totalorder %s307, %s309
      %p313 = scmp.eq.s32.totalorder %s28, 0
      %p314 = por %p312, %p313
      %p315 = scmp.ne.s32.totalorder %s307, %s309
      %p316 = scmp.eq.s32.totalorder %s33, 3
      %p317 = por %p315, %p316
      %p318 = scmp.ne.s32.totalorder %s309, %s310
      %p319 = scmp.eq.s32.totalorder %s33, 0
      %p320 = por %p318, %p319
      %p321 = scmp.ne.s32.totalorder %s309, %s310
      %p322 = scmp.eq.s32.totalorder %s34, 3
      %p323 = por %p321, %p322
      %p325 = scmp.ne.s32.totalorder %s310, %s324
      %p326 = scmp.eq.s32.totalorder %s34, 0
      %p327 = por %p325, %p326
      %s328 = ssub.s32 %s35, %s47
      %s329 = ssub.s32 %s36, %s43
      %s330 = sor.u32 %s328, %s329
      %p331 = scmp.eq.s32.totalorder %s330, 0
      %s333 = sadd.s32 %s332, 1
      %s334 = scalar_select %p331, %s332, %s333
      %p337 = pneg %p331
      %p338 = scmp.eq.s32.totalorder %s28, 3
      %p339 = por %p337, %p338
      %p340 = scmp.ne.s32.totalorder %s332, %s335
      %p341 = scmp.eq.s32.totalorder %s28, 0
      %p342 = por %p340, %p341
      %p343 = scmp.ne.s32.totalorder %s332, %s335
      %p344 = scmp.eq.s32.totalorder %s33, 3
      %p345 = por %p343, %p344
      %p346 = scmp.ne.s32.totalorder %s335, %s336
      %p347 = scmp.eq.s32.totalorder %s33, 0
      %p348 = por %p346, %p347
      %p349 = scmp.ne.s32.totalorder %s335, %s336
      %p350 = scmp.eq.s32.totalorder %s34, 3
      %p351 = por %p349, %p350
      %p353 = scmp.ne.s32.totalorder %s336, %s352
      %p354 = scmp.eq.s32.totalorder %s34, 0
      %p355 = por %p353, %p354
      %p356 = scmp.le.s32.totalorder 1, %s28
      %p357 = scmp.lt.s32.totalorder %s28, 5
      %p358 = pnand %p356, %p357
      %p359 = pneg %p358
      // Predicated region
      $region9: #{tpu_custom_call.1} parent=5 // pred_check
        _
      $region10: #{tpu_custom_call.1} parent=5 // pred_check_branch
        %361 = sbr.rel (%p358) target = $region12
      $region11: #{tpu_custom_call.1} parent=5 // pred_region
        %s362 = ssub.s32 %s28, 1
        // Predicated region
        $region13: #{tpu_custom_call.1} parent=11 // pred_check
          %p363 = pneg %p89
        $region14: #{tpu_custom_call.1} parent=11 // pred_check_branch
          %365 = sbr.rel (%p363) target = $region16
        $region15: #{tpu_custom_call.1} parent=11 // pred_region
          %s367 = ssub.s32 16, 16
          %368 = vsyncadd [#allocation8], %s367
          %s370 = sshll.u32 [#allocation7], 4
          %s371 = int_to_ptr.vmem [resolvable:$true] %s370
          %373 = dma.hbm_to_vmem [thread:$0]  %s1, 16, %s371, [#allocation8]
        $region16: #{tpu_custom_call.1} parent=11 // pred_fallthru
          _
        // Predicated region
        $region17: #{tpu_custom_call.1} parent=11 // pred_check
          %p374 = pneg %p110
        $region18: #{tpu_custom_call.1} parent=11 // pred_check_branch
          %376 = sbr.rel (%p374) target = $region20
        $region19: #{tpu_custom_call.1} parent=11 // pred_region
          %s378 = ssub.s32 16, 16
          %379 = vsyncadd [#allocation8], %s378
          %s381 = sshll.u32 [#allocation9], 4
          %s382 = int_to_ptr.vmem [resolvable:$true] %s381
          %384 = dma.hbm_to_vmem [thread:$0]  %s2, 16, %s382, [#allocation8]
        $region20: #{tpu_custom_call.1} parent=11 // pred_fallthru
          _
        // Predicated region
        $region21: #{tpu_custom_call.1} parent=11 // pred_check
          %p385 = pneg %p131
        $region22: #{tpu_custom_call.1} parent=11 // pred_check_branch
          %387 = sbr.rel (%p385) target = $region24
        $region23: #{tpu_custom_call.1} parent=11 // pred_region
          %s389 = ssub.s32 3072, 3072
          %390 = vsyncadd [#allocation11], %s389
          %s391 = sshll.u32 [#allocation10], 4
          %s392 = int_to_ptr.vmem [resolvable:$true] %s391
          %397 = dma.hbm_to_vmem [thread:$0]  %s3, 3072, %s392, [#allocation11], 192, 192, 12
        $region24: #{tpu_custom_call.1} parent=11 // pred_fallthru
          _
        // Predicated region
        $region25: #{tpu_custom_call.1} parent=11 // pred_check
          %p398 = pneg %p152
        $region26: #{tpu_custom_call.1} parent=11 // pred_check_branch
          %400 = sbr.rel (%p398) target = $region28
        $region27: #{tpu_custom_call.1} parent=11 // pred_region
          _
        $region28: #{tpu_custom_call.1} parent=11 // pred_fallthru
          _
        // Predicated region
        $region29: #{tpu_custom_call.1} parent=11 // pred_check
          %p401 = pneg %p173
        $region30: #{tpu_custom_call.1} parent=11 // pred_check_branch
          %403 = sbr.rel (%p401) target = $region32
        $region31: #{tpu_custom_call.1} parent=11 // pred_region
          %s405 = ssub.s32 1024, 1024
          %406 = vsyncadd [#allocation11], %s405
          %s407 = sshll.u32 [#allocation12], 4
          %s408 = int_to_ptr.vmem [resolvable:$true] %s407
          %413 = dma.hbm_to_vmem [thread:$0]  %s5, 1024, %s408, [#allocation11], 64, 64, 4
        $region32: #{tpu_custom_call.1} parent=11 // pred_fallthru
          _
        // Predicated region
        $region33: #{tpu_custom_call.1} parent=11 // pred_check
          %p414 = pneg %p194
        $region34: #{tpu_custom_call.1} parent=11 // pred_check_branch
          %416 = sbr.rel (%p414) target = $region36
        $region35: #{tpu_custom_call.1} parent=11 // pred_region
          _
        $region36: #{tpu_custom_call.1} parent=11 // pred_fallthru
          _
        // Predicated region
        $region37: #{tpu_custom_call.1} parent=11 // pred_check
          %p417 = pneg %p215
        $region38: #{tpu_custom_call.1} parent=11 // pred_check_branch
          %419 = sbr.rel (%p417) target = $region40
        $region39: #{tpu_custom_call.1} parent=11 // pred_region
          _
        $region40: #{tpu_custom_call.1} parent=11 // pred_fallthru
          _
        // Predicated region
        $region41: #{tpu_custom_call.1} parent=11 // pred_check
          %p420 = pneg %p236
        $region42: #{tpu_custom_call.1} parent=11 // pred_check_branch
          %422 = sbr.rel (%p420) target = $region44
        $region43: #{tpu_custom_call.1} parent=11 // pred_region
          _
        $region44: #{tpu_custom_call.1} parent=11 // pred_fallthru
          _
        // Predicated region
        $region45: #{tpu_custom_call.1} parent=11 // pred_check
          %p423 = pneg %p257
        $region46: #{tpu_custom_call.1} parent=11 // pred_check_branch
          %425 = sbr.rel (%p423) target = $region48
        $region47: #{tpu_custom_call.1} parent=11 // pred_region
          %s427 = ssub.s32 4096, 4096
          %428 = vsyncadd [#allocation14], %s427
          %s429 = sshll.u32 [#allocation13], 4
          %s430 = int_to_ptr.vmem [resolvable:$true] %s429
          %435 = dma.hbm_to_vmem [thread:$0]  %s9, 4096, %s430, [#allocation14], 256, 256, 16
        $region48: #{tpu_custom_call.1} parent=11 // pred_fallthru
          _
        // Predicated region
        $region49: #{tpu_custom_call.1} parent=11 // pred_check
          %p436 = pneg %p278
        $region50: #{tpu_custom_call.1} parent=11 // pred_check_branch
          %438 = sbr.rel (%p436) target = $region52
        $region51: #{tpu_custom_call.1} parent=11 // pred_region
          _
        $region52: #{tpu_custom_call.1} parent=11 // pred_fallthru
          _
        // Predicated region
        $region53: #{tpu_custom_call.1} parent=11 // pred_check
          %p439 = pneg %p299
        $region54: #{tpu_custom_call.1} parent=11 // pred_check_branch
          %441 = sbr.rel (%p439) target = $region56
        $region55: #{tpu_custom_call.1} parent=11 // pred_region
          %s443 = ssub.s32 4096, 4096
          %444 = vsyncadd [#allocation14], %s443
          %s445 = sshll.u32 [#allocation15], 4
          %s446 = int_to_ptr.vmem [resolvable:$true] %s445
          %451 = dma.hbm_to_vmem [thread:$0]  %s11, 4096, %s446, [#allocation14], 64, 64, 4
        $region56: #{tpu_custom_call.1} parent=11 // pred_fallthru
          _
        // Predicated region
        $region57: #{tpu_custom_call.1} parent=11 // pred_check
          %p452 = pneg %p320
        $region58: #{tpu_custom_call.1} parent=11 // pred_check_branch
          %454 = sbr.rel (%p452) target = $region60
        $region59: #{tpu_custom_call.1} parent=11 // pred_region
          _
        $region60: #{tpu_custom_call.1} parent=11 // pred_fallthru
          _
      $region12: #{tpu_custom_call.1} parent=5 // pred_fallthru
        _
      %p455 = scmp.lt.s32.totalorder %s28, 4
      // Predicated region
      $region61: #{tpu_custom_call.1} parent=5 // pred_check
        %p456 = pneg %p455
      $region62: #{tpu_custom_call.1} parent=5 // pred_check_branch
        %458 = sbr.rel (%p456) target = $region64
      $region63: #{tpu_custom_call.1} parent=5 // pred_region
        // Predicated region
        $region65: #{tpu_custom_call.1} parent=63 // pred_check
          %p459 = pneg %p62
        $region66: #{tpu_custom_call.1} parent=63 // pred_check_branch
          %461 = sbr.rel (%p459) target = $region68
        $region67: #{tpu_custom_call.1} parent=63 // pred_region
          %s462 = sand.u32 %s52, 1
          %s463 = scalar_lea.sflag [#allocation5], %s462
          %s464 = sand.u32 %s52, 1
          %s465 = smul.addr %s464, 16
          %s466 = scalar_lea.vmem [#allocation4], %s465
          %s467 = smul.u32 2, %s36
          %s469 = ssub.s32 256, 256
          %470 = vsyncadd %s463, %s469
          %s471 = smul.addr %s35, 4
          %s472 = sadd.s32 %s467, %s471
          %s473 = smul.addr %s472, 128
          %s474 = scalar_lea.hbm %s0, %s473
          %s475 = sshll.u32 %s466, 4
          %s476 = int_to_ptr.vmem [resolvable:$true] %s475
          %481 = dma.hbm_to_vmem [thread:$0]  %s474, 256, %s476, %s463, 128, 128, 8
        $region68: #{tpu_custom_call.1} parent=63 // pred_fallthru
          _
      $region64: #{tpu_custom_call.1} parent=5 // pred_fallthru
        _
      %p482 = scmp.le.s32.totalorder 1, %s28
      %p483 = scmp.lt.s32.totalorder %s28, 5
      %p484 = pnand %p482, %p483
      %p485 = pneg %p484
      // Predicated region
      $region69: #{tpu_custom_call.1} parent=5 // pred_check
        _
      $region70: #{tpu_custom_call.1} parent=5 // pred_check_branch
        %487 = sbr.rel (%p484) target = $region72
      $region71: #{tpu_custom_call.1} parent=5 // pred_region
        %s488 = ssub.s32 %s28, 1
        %s489 = sand.u32 %s55, 1
        %s490 = scalar_lea.sflag [#allocation5], %s489
        %s491 = sand.u32 %s55, 1
        %s492 = smul.addr %s491, 16
        %s493 = scalar_lea.vmem [#allocation4], %s492
        // Predicated region
        $region73: #{tpu_custom_call.1} parent=71 // pred_check
          %p494 = pneg %p68
        $region74: #{tpu_custom_call.1} parent=71 // pred_check_branch
          %496 = sbr.rel (%p494) target = $region76
        $region75: #{tpu_custom_call.1} parent=71 // pred_region
          %497 = dma.done %s490, 256
        $region76: #{tpu_custom_call.1} parent=71 // pred_fallthru
          _
        // Predicated region
        $region77: #{tpu_custom_call.1} parent=71 // pred_check
          %p498 = pneg %p89
        $region78: #{tpu_custom_call.1} parent=71 // pred_check_branch
          %500 = sbr.rel (%p498) target = $region80
        $region79: #{tpu_custom_call.1} parent=71 // pred_region
          %501 = dma.done [#allocation8], 16
        $region80: #{tpu_custom_call.1} parent=71 // pred_fallthru
          _
        // Predicated region
        $region81: #{tpu_custom_call.1} parent=71 // pred_check
          %p502 = pneg %p110
        $region82: #{tpu_custom_call.1} parent=71 // pred_check_branch
          %504 = sbr.rel (%p502) target = $region84
        $region83: #{tpu_custom_call.1} parent=71 // pred_region
          %505 = dma.done [#allocation8], 16
        $region84: #{tpu_custom_call.1} parent=71 // pred_fallthru
          _
        // Predicated region
        $region85: #{tpu_custom_call.1} parent=71 // pred_check
          %p506 = pneg %p131
        $region86: #{tpu_custom_call.1} parent=71 // pred_check_branch
          %508 = sbr.rel (%p506) target = $region88
        $region87: #{tpu_custom_call.1} parent=71 // pred_region
          %509 = dma.done [#allocation11], 3072
        $region88: #{tpu_custom_call.1} parent=71 // pred_fallthru
          _
        // Predicated region
        $region89: #{tpu_custom_call.1} parent=71 // pred_check
          %p510 = pneg %p173
        $region90: #{tpu_custom_call.1} parent=71 // pred_check_branch
          %512 = sbr.rel (%p510) target = $region92
        $region91: #{tpu_custom_call.1} parent=71 // pred_region
          %513 = dma.done [#allocation11], 1024
        $region92: #{tpu_custom_call.1} parent=71 // pred_fallthru
          _
        // Predicated region
        $region93: #{tpu_custom_call.1} parent=71 // pred_check
          %p514 = pneg %p257
        $region94: #{tpu_custom_call.1} parent=71 // pred_check_branch
          %516 = sbr.rel (%p514) target = $region96
        $region95: #{tpu_custom_call.1} parent=71 // pred_region
          %517 = dma.done [#allocation14], 4096
        $region96: #{tpu_custom_call.1} parent=71 // pred_fallthru
          _
        // Predicated region
        $region97: #{tpu_custom_call.1} parent=71 // pred_check
          %p518 = pneg %p299
        $region98: #{tpu_custom_call.1} parent=71 // pred_check_branch
          %520 = sbr.rel (%p518) target = $region100
        $region99: #{tpu_custom_call.1} parent=71 // pred_region
          %521 = dma.done [#allocation14], 4096
        $region100: #{tpu_custom_call.1} parent=71 // pred_fallthru
          _
        %s522 = sand.u32 %s55, 1
        %s523 = scalar_lea.sflag [#allocation5], %s522
        %s524 = sand.u32 %s55, 1
        %s525 = smul.addr %s524, 16
        %s526 = scalar_lea.vmem [#allocation4], %s525
        %p527 = pneg %p68
        %p528 = pneg %p65
        %p529 = pneg %p89
        %p530 = pneg %p86
        %p531 = pneg %p110
        %p532 = pneg %p107
        %p533 = pneg %p131
        %p534 = pneg %p128
        %p535 = pneg %p152
        %p536 = pneg %p149
        %p537 = pneg %p173
        %p538 = pneg %p170
        %p539 = pneg %p194
        %p540 = pneg %p191
        %p541 = pneg %p215
        %p542 = pneg %p212
        %p543 = pneg %p236
        %p544 = pneg %p233
        %p545 = pneg %p257
        %p546 = pneg %p254
        %p547 = pneg %p278
        %p548 = pneg %p275
        %p549 = pneg %p299
        %p550 = pneg %p296
        %p551 = pneg %p320
        %p552 = pneg %p317
        %p553 = pneg %p348
        %p554 = pneg %p345
        %s555 = sand.u32 %s335, 1
        %s556 = scalar_lea.sflag [#allocation6], %s555
        %s557 = sand.u32 %s335, 1
        %s558 = smul.addr %s557, 16
        %s559 = scalar_lea.vmem [#allocation16], %s558
        %s560 = smul.u32 2, %s38
        %s561 = smul.u32 2, %s38
        %s563 = smul.u32 %s38, 16
        %v564 = vld [vmem:[%s493] sm:$0xff]
        %v565 = vld [vmem:[%s493 + $0x8] sm:$0xff]
        %v566 = vld [vmem:[#allocation7] sm:$0x1]
        %v567 = vld [vmem:[#allocation9] sm:$0x1]
        %568 = vadd.xlane.f32.xlu0 %v564
        %v569 = vpop.xlane.xlu0 %568
        %570 = vadd.xlane.f32.xlu0 %v565
        %v571 = vpop.xlane.xlu0 %570
        %v572 = vrcp.pop 128.0
        %v573 = vmul.f32 %v569, %v572
        %v574 = vmul.f32 %v571, %v572
        %v575 = vsub.f32 %v564, %v573
        %v576 = vsub.f32 %v565, %v574
        %v577 = vmul.f32 %v575, %v575
        %v578 = vmul.f32 %v576, %v576
        %579 = vadd.xlane.f32.xlu0 %v577
        %v580 = vpop.xlane.xlu0 %579
        %581 = vadd.xlane.f32.xlu0 %v578
        %v582 = vpop.xlane.xlu0 %581
        %v583 = vmul.f32 %v580, %v572
        %v584 = vmul.f32 %v582, %v572
        %v585 = vadd.f32 %v583, 1e-05
        %v586 = vadd.f32 %v584, 1e-05
        %v587 = vrsqrt.pop %v585
        %v588 = vrsqrt.pop %v586
        %v589 = vmul.f32 %v575, %v587
        %v590 = vmul.f32 %v576, %v588
        %v592 = vlaneseq
        %v593 = vshrl.u32 %v592, 7
        %v594 = vsub.s32 0, %v593
        %v595 = vrot.slane %v566, %v594
        %v597 = vmul.f32 %v589, %v595
        %v598 = vmul.f32 %v590, %v595
        %v600 = vlaneseq
        %v601 = vshrl.u32 %v600, 7
        %v602 = vsub.s32 0, %v601
        %v603 = vrot.slane %v567, %v602
        %v605 = vadd.f32 %v597, %v603
        %v606 = vadd.f32 %v598, %v603
        %v607 = vpack.c.bf16 %v606, %v605
        %v608 = vld [vmem:[#allocation10] sm:$0xff]
        %v609 = vld [vmem:[#allocation10 + $0x8] sm:$0xf]
        %v610 = vld [vmem:[#allocation10 + $0xc] sm:$0xff]
        %v611 = vld [vmem:[#allocation10 + $0x14] sm:$0xf]
        %v612 = vld [vmem:[#allocation10 + $0x18] sm:$0xff]
        %v613 = vld [vmem:[#allocation10 + $0x20] sm:$0xf]
        %v614 = vld [vmem:[#allocation10 + $0x24] sm:$0xff]
        %v615 = vld [vmem:[#allocation10 + $0x2c] sm:$0xf]
        %v616 = vld [vmem:[#allocation10 + $0x30] sm:$0xff]
        %v617 = vld [vmem:[#allocation10 + $0x38] sm:$0xf]
        %v618 = vld [vmem:[#allocation10 + $0x3c] sm:$0xff]
        %v619 = vld [vmem:[#allocation10 + $0x44] sm:$0xf]
        %v620 = vld [vmem:[#allocation10 + $0x48] sm:$0xff]
        %v621 = vld [vmem:[#allocation10 + $0x50] sm:$0xf]
        %v622 = vld [vmem:[#allocation10 + $0x54] sm:$0xff]
        %v623 = vld [vmem:[#allocation10 + $0x5c] sm:$0xf]
        %v624 = vld [vmem:[#allocation10 + $0x60] sm:$0xff]
        %v625 = vld [vmem:[#allocation10 + $0x68] sm:$0xf]
        %v626 = vld [vmem:[#allocation10 + $0x6c] sm:$0xff]
        %v627 = vld [vmem:[#allocation10 + $0x74] sm:$0xf]
        %v628 = vld [vmem:[#allocation10 + $0x78] sm:$0xff]
        %v629 = vld [vmem:[#allocation10 + $0x80] sm:$0xf]
        %v630 = vld [vmem:[#allocation10 + $0x84] sm:$0xff]
        %v631 = vld [vmem:[#allocation10 + $0x8c] sm:$0xf]
        %v632 = vld [vmem:[#allocation10 + $0x90] sm:$0xff]
        %v633 = vld [vmem:[#allocation10 + $0x98] sm:$0xf]
        %v634 = vld [vmem:[#allocation10 + $0x9c] sm:$0xff]
        %v635 = vld [vmem:[#allocation10 + $0xa4] sm:$0xf]
        %v636 = vld [vmem:[#allocation10 + $0xa8] sm:$0xff]
        %v637 = vld [vmem:[#allocation10 + $0xb0] sm:$0xf]
        %v638 = vld [vmem:[#allocation10 + $0xb4] sm:$0xff]
        %v639 = vld [vmem:[#allocation10 + $0xbc] sm:$0xf]
        %v640 = vld [vmem:[%s4] sm:$0x7]
        %v642 = vlaneseq
        %v643 = vshrl.u32 %v642, 7
        %v644 = vsub.s32 0, %v643
        %v645 = vrot.slane %v640, %v644
        %v646 = vlaneseq
        %v647 = vshrl.u32 %v646, 7
        %v648 = vsub.s32 1, %v647
        %v649 = vrot.slane %v640, %v648
        %v650 = vlaneseq
        %v651 = vshrl.u32 %v650, 7
        %v652 = vsub.s32 2, %v651
        %v653 = vrot.slane %v640, %v652
        %v689 = vunpack.c.l.b16 %v608
        %v690 = vunpack.c.h.b16 %v608
        %v691 = vunpack.c.l.b16 %v609
        %v692 = vunpack.c.l.b16 %v610
        %v693 = vunpack.c.h.b16 %v610
        %v694 = vunpack.c.l.b16 %v611
        %v695 = vunpack.c.l.b16 %v612
        %v696 = vunpack.c.h.b16 %v612
        %v697 = vunpack.c.l.b16 %v613
        %v698 = vunpack.c.l.b16 %v614
        %v699 = vunpack.c.h.b16 %v614
        %v700 = vunpack.c.l.b16 %v615
        %v701 = vunpack.c.l.b16 %v616
        %v702 = vunpack.c.h.b16 %v616
        %v703 = vunpack.c.l.b16 %v617
        %v704 = vunpack.c.l.b16 %v618
        %v705 = vunpack.c.h.b16 %v618
        %v706 = vunpack.c.l.b16 %v619
        %v707 = vunpack.c.l.b16 %v620
        %v708 = vunpack.c.h.b16 %v620
        %v709 = vunpack.c.l.b16 %v621
        %v710 = vunpack.c.l.b16 %v622
        %v711 = vunpack.c.h.b16 %v622
        %v712 = vunpack.c.l.b16 %v623
        %v713 = vunpack.c.l.b16 %v624
        %v714 = vunpack.c.h.b16 %v624
        %v715 = vunpack.c.l.b16 %v625
        %v716 = vunpack.c.l.b16 %v626
        %v717 = vunpack.c.h.b16 %v626
        %v718 = vunpack.c.l.b16 %v627
        %v719 = vunpack.c.l.b16 %v628
        %v720 = vunpack.c.h.b16 %v628
        %v721 = vunpack.c.l.b16 %v629
        %v722 = vunpack.c.l.b16 %v630
        %v723 = vunpack.c.h.b16 %v630
        %v724 = vunpack.c.l.b16 %v631
        %v725 = vunpack.c.l.b16 %v632
        %v726 = vunpack.c.h.b16 %v632
        %v727 = vunpack.c.l.b16 %v633
        %v728 = vunpack.c.l.b16 %v634
        %v729 = vunpack.c.h.b16 %v634
        %v730 = vunpack.c.l.b16 %v635
        %v731 = vunpack.c.l.b16 %v636
        %v732 = vunpack.c.h.b16 %v636
        %v733 = vunpack.c.l.b16 %v637
        %v734 = vunpack.c.l.b16 %v638
        %v735 = vunpack.c.h.b16 %v638
        %v736 = vunpack.c.l.b16 %v639
        %v737 = vpack.c.b16 %v692, %v689
        %v738 = vpack.c.b16 %v693, %v690
        %v739 = vpack.c.b16 %v694, %v691
        %v740 = vpack.c.b16 %v698, %v695
        %v741 = vpack.c.b16 %v699, %v696
        %v742 = vpack.c.b16 %v700, %v697
        %v743 = vpack.c.b16 %v704, %v701
        %v744 = vpack.c.b16 %v705, %v702
        %v745 = vpack.c.b16 %v706, %v703
        %v746 = vpack.c.b16 %v710, %v707
        %v747 = vpack.c.b16 %v711, %v708
        %v748 = vpack.c.b16 %v712, %v709
        %v749 = vpack.c.b16 %v716, %v713
        %v750 = vpack.c.b16 %v717, %v714
        %v751 = vpack.c.b16 %v718, %v715
        %v752 = vpack.c.b16 %v722, %v719
        %v753 = vpack.c.b16 %v723, %v720
        %v754 = vpack.c.b16 %v724, %v721
        %v755 = vpack.c.b16 %v728, %v725
        %v756 = vpack.c.b16 %v729, %v726
        %v757 = vpack.c.b16 %v730, %v727
        %v758 = vpack.c.b16 %v734, %v731
        %v759 = vpack.c.b16 %v735, %v732
        %v760 = vpack.c.b16 %v736, %v733
        %785 = vmatprep.subr.bf16.mxu0 %v738
        %786 = vmatpush1.bf16.msra.mxu0 %v737
        %787 = vmatprep.subr.bf16.mxu0 %v741
        %788 = vmatpush1.bf16.msra.mxu0 %v740
        %789 = vmatprep.subr.bf16.mxu0 %v744
        %790 = vmatpush1.bf16.msra.mxu0 %v743
        %791 = vmatprep.subr.bf16.mxu0 %v747
        %792 = vmatpush1.bf16.msra.mxu0 %v746
        %793 = vmatprep.subr.bf16.mxu0 %v750
        %794 = vmatpush1.bf16.msra.mxu0 %v749
        %795 = vmatprep.subr.bf16.mxu0 %v753
        %796 = vmatpush1.bf16.msra.mxu0 %v752
        %797 = vmatprep.subr.bf16.mxu0 %v756
        %798 = vmatpush1.bf16.msra.mxu0 %v755
        %799 = vmatprep.subr.bf16.mxu0 %v759
        %800 = vmatpush1.bf16.msra.mxu0 %v758
        %801 = vmatprep.subr.bf16.mxu0 0
        %802 = vmatpush1.bf16.msra.mxu0 0
        %803 = vmatprep.subr.bf16.mxu0 0
        %804 = vmatpush1.bf16.msra.mxu0 0
        %805 = vmatprep.subr.bf16.mxu0 0
        %806 = vmatpush1.bf16.msra.mxu0 0
        %807 = vmatprep.subr.bf16.mxu0 0
        %808 = vmatpush1.bf16.msra.mxu0 0
        %809 = vmatprep.subr.bf16.mxu0 0
        %810 = vmatpush1.bf16.msra.mxu0 0
        %811 = vmatprep.subr.bf16.mxu0 0
        %812 = vmatpush1.bf16.msra.mxu0 0
        %813 = vmatprep.subr.bf16.mxu0 0
        %814 = vmatpush1.bf16.msra.mxu0 0
        %815 = vmatprep.subr.bf16.mxu0 0
        %816 = vmatpush1.bf16.msra.mxu0 0
        %817 = vmatprep.mubr.bf16.mxu0 0
        %818 = vmatmul.mubr.bf16.gmra.mrb[0].mxu0 %v607
        %v819 = vpop.f32.mrb[0].mxu0
        %v820 = vadd.f32 %v645, %v819
        %v821 = vpop.f32.mrb[0].mxu0
        %v822 = vadd.f32 %v649, %v821
        %v823 = vpop.f32.mrb[0].mxu0
        %v824 = vadd.f32 %v645, %v823
        %v825 = vpop.f32.mrb[0].mxu0
        %v826 = vadd.f32 %v649, %v825
        %827 = vdwg.mxu0
        %828 = vmatprep.subr.bf16.mxu0 0
        %829 = vmatpush1.bf16.msra.mxu0 %v739
        %830 = vmatprep.subr.bf16.mxu0 0
        %831 = vmatpush1.bf16.msra.mxu0 %v742
        %832 = vmatprep.subr.bf16.mxu0 0
        %833 = vmatpush1.bf16.msra.mxu0 %v745
        %834 = vmatprep.subr.bf16.mxu0 0
        %835 = vmatpush1.bf16.msra.mxu0 %v748
        %836 = vmatprep.subr.bf16.mxu0 0
        %837 = vmatpush1.bf16.msra.mxu0 %v751
        %838 = vmatprep.subr.bf16.mxu0 0
        %839 = vmatpush1.bf16.msra.mxu0 %v754
        %840 = vmatprep.subr.bf16.mxu0 0
        %841 = vmatpush1.bf16.msra.mxu0 %v757
        %842 = vmatprep.subr.bf16.mxu0 0
        %843 = vmatpush1.bf16.msra.mxu0 %v760
        %844 = vmatprep.subr.bf16.mxu0 0
        %845 = vmatpush1.bf16.msra.mxu0 0
        %846 = vmatprep.subr.bf16.mxu0 0
        %847 = vmatpush1.bf16.msra.mxu0 0
        %848 = vmatprep.subr.bf16.mxu0 0
        %849 = vmatpush1.bf16.msra.mxu0 0
        %850 = vmatprep.subr.bf16.mxu0 0
        %851 = vmatpush1.bf16.msra.mxu0 0
        %852 = vmatprep.subr.bf16.mxu0 0
        %853 = vmatpush1.bf16.msra.mxu0 0
        %854 = vmatprep.subr.bf16.mxu0 0
        %855 = vmatpush1.bf16.msra.mxu0 0
        %856 = vmatprep.subr.bf16.mxu0 0
        %857 = vmatpush1.bf16.msra.mxu0 0
        %858 = vmatprep.subr.bf16.mxu0 0
        %859 = vmatpush1.bf16.msra.mxu0 0
        %860 = vmatprep.mubr.bf16.mxu0 0
        %861 = vmatmul.mubr.bf16.gmra.mrb[0].mxu0 %v607
        %v862 = vpop.f32.mrb[0].mxu0
        %v863 = vadd.f32 %v653, %v862
        %v864 = vpop.f32.mrb[0].mxu0
        %v865 = vpop.f32.mrb[0].mxu0
        %v866 = vadd.f32 %v653, %v865
        %v867 = vpop.f32.mrb[0].mxu0
        %868 = vdwg.mxu0
        %v869 = vpack.c.bf16 %v824, %v820
        %v870 = vpack.c.bf16 %v826, %v822
        %v871 = vpack.c.bf16 %v866, %v863
        %s872 = sshra.s32 %s563, 4
        %s873 = sand.u32 %s563, 15
        %s874 = smul.addr %s872, 8
        %s875 = scalar_lea.vmem [#allocation2], %s874
        %876 = vst [vmem:[%s875] sm:$0xff] %v870
        %s877 = smul.addr %s872, 8
        %s878 = scalar_lea.vmem [#allocation3], %s877
        %879 = vst [vmem:[%s878] sm:$0xff] %v871
        %v880 = vlaneseq
        %v881 = vshrl.u32 %v880, 7
        %v882 = vadd.s32 %v881, 8
        %v883 = vstv %s563
        %v884 = vadd.s32 %v883, %v881
        %v885 = vadd.s32 %v883, %v882
        %v886 = vlaneseq
        %v887 = vand.u32 %v886, 127
        %s888 = sadd.s32 %s38, 1
        // While loop
        $region101: #{tpu_custom_call.1} parent=71 // loop_pre_header
          _
        $region102: #{tpu_custom_call.1} parent=71 // loop_header
          %s890 = sphi 0, %s892
          %p891 = scmp.ge.s32.totalorder %s890, %s888
          %v895 = vphi -1e+30, %v989
          %v896 = vphi -1e+30, %v990
          %v897 = vphi 0.0, %v1011
          %v898 = vphi 0.0, %v1012
          %v899 = vphi 0.0, %v1060
          %v900 = vphi 0.0, %v1061
          %v901 = vphi -1e+30, %v1123
          %v902 = vphi -1e+30, %v1124
          %v903 = vphi 0.0, %v1145
          %v904 = vphi 0.0, %v1146
          %v905 = vphi 0.0, %v1198
          %v906 = vphi 0.0, %v1199
          %v907 = vphi -1e+30, %v1259
          %v908 = vphi -1e+30, %v1260
          %v909 = vphi 0.0, %v1281
          %v910 = vphi 0.0, %v1282
          %v911 = vphi 0.0, %v1333
          %v912 = vphi 0.0, %v1334
          %v913 = vphi -1e+30, %v1394
          %v914 = vphi -1e+30, %v1395
          %v915 = vphi 0.0, %v1416
          %v916 = vphi 0.0, %v1417
          %v917 = vphi 0.0, %v1468
          %v918 = vphi 0.0, %v1469
        $region103: #{tpu_custom_call.1} parent=71 // loop_header_branch
          %894 = sbr.rel (%p891) target = $region107
        $region104: #{tpu_custom_call.1} parent=71 // loop_body
          %s919 = smul.u32 %s890, 16
          %s920 = sshra.s32 %s919, 4
          %s921 = sand.u32 %s919, 15
          %s922 = smul.addr %s920, 8
          %s923 = scalar_lea.vmem [#allocation2], %s922
          %v924 = vld [vmem:[%s923] sm:$0xff]
          %s925 = smul.addr %s920, 8
          %s926 = scalar_lea.vmem [#allocation3], %s925
          %v927 = vld [vmem:[%s926] sm:$0xff]
          %v928 = vstv %s919
          %v929 = vadd.s32 %v928, %v887
          %vm930 = vcmp.ge.s32.totalorder %v884, %v929
          %vm931 = vcmp.ge.s32.totalorder %v885, %v929
          %vm932 = vcmask 261120
          %v934 = vsel %vm932, %v869, 0
          %v937 = vsel %vm932, %v924, 0
          %939 = vmatprep.subr.bf16.mxu0 0
          %940 = vmatpush1.bf16.xpose.msra.mxu0 %v937
          %941 = vmatprep.subr.bf16.mxu0 0
          %942 = vmatpush1.bf16.xpose.msra.mxu0 0
          %943 = vmatprep.subr.bf16.mxu0 0
          %944 = vmatpush1.bf16.xpose.msra.mxu0 0
          %945 = vmatprep.subr.bf16.mxu0 0
          %946 = vmatpush1.bf16.xpose.msra.mxu0 0
          %947 = vmatprep.subr.bf16.mxu0 0
          %948 = vmatpush1.bf16.xpose.msra.mxu0 0
          %949 = vmatprep.subr.bf16.mxu0 0
          %950 = vmatpush1.bf16.xpose.msra.mxu0 0
          %951 = vmatprep.subr.bf16.mxu0 0
          %952 = vmatpush1.bf16.xpose.msra.mxu0 0
          %953 = vmatprep.subr.bf16.mxu0 0
          %954 = vmatpush1.bf16.xpose.msra.mxu0 0
          %955 = vmatprep.subr.bf16.mxu0 0
          %956 = vmatpush1.bf16.xpose.msra.mxu0 0
          %957 = vmatprep.subr.bf16.mxu0 0
          %958 = vmatpush1.bf16.xpose.msra.mxu0 0
          %959 = vmatprep.subr.bf16.mxu0 0
          %960 = vmatpush1.bf16.xpose.msra.mxu0 0
          %961 = vmatprep.subr.bf16.mxu0 0
          %962 = vmatpush1.bf16.xpose.msra.mxu0 0
          %963 = vmatprep.subr.bf16.mxu0 0
          %964 = vmatpush1.bf16.xpose.msra.mxu0 0
          %965 = vmatprep.subr.bf16.mxu0 0
          %966 = vmatpush1.bf16.xpose.msra.mxu0 0
          %967 = vmatprep.subr.bf16.mxu0 0
          %968 = vmatpush1.bf16.xpose.msra.mxu0 0
          %969 = vmatprep.subr.bf16.mxu0 0
          %970 = vmatpush1.bf16.xpose.msra.mxu0 0
          %971 = vmatprep.mubr.bf16.mxu0 0
          %972 = vmatmul.mubr.bf16.gmra.mrb[0].mxu0 %v934
          %v973 = vpop.f32.mrb[0].mxu0
          %v974 = vadd.f32 0.0, %v973
          %v975 = vpop.f32.mrb[0].mxu0
          %v976 = vpop.f32.mrb[0].mxu0
          %v977 = vadd.f32 0.0, %v976
          %v978 = vpop.f32.mrb[0].mxu0
          %979 = vdwg.mxu0
          %v980 = vsel %vm930, %v974, -1e+30
          %v981 = vsel %vm931, %v977, -1e+30
          %vm982 = vcmask 130048
          %v983 = vsel %vm982, %v980, -inf
          %984 = vmax.xlane.f32.xlu0 %v983
          %v985 = vpop.xlane.xlu0 %984
          %v986 = vsel %vm982, %v981, -inf
          %987 = vmax.xlane.f32.xlu0 %v986
          %v988 = vpop.xlane.xlu0 %987
          %v989 = vmax.f32 %v895, %v985
          %v990 = vmax.f32 %v896, %v988
          %v991 = vsub.f32 %v895, %v989
          %v992 = vsub.f32 %v896, %v990
          %v993 = vmul.f32 %v991, 1.442695
          %v994 = vpow.pop %v993
          %v995 = vmul.f32 %v992, 1.442695
          %v996 = vpow.pop %v995
          %v997 = vsub.f32 %v980, %v989
          %v998 = vsub.f32 %v981, %v990
          %v999 = vmul.f32 %v997, 1.442695
          %v1000 = vpow.pop %v999
          %v1001 = vmul.f32 %v998, 1.442695
          %v1002 = vpow.pop %v1001
          %v1003 = vmul.f32 %v994, %v897
          %v1004 = vmul.f32 %v996, %v898
          %v1005 = vsel %vm982, %v1000, 0.0
          %1006 = vadd.xlane.f32.xlu0 %v1005
          %v1007 = vpop.xlane.xlu0 %1006
          %v1008 = vsel %vm982, %v1002, 0.0
          %1009 = vadd.xlane.f32.xlu0 %v1008
          %v1010 = vpop.xlane.xlu0 %1009
          %v1011 = vadd.f32 %v1003, %v1007
          %v1012 = vadd.f32 %v1004, %v1010
          %v1013 = vmul.f32 %v994, %v899
          %v1014 = vmul.f32 %v996, %v900
          %v1015 = vpack.c.bf16 %v1002, %v1000
          %v1017 = vsel %vm982, %v1015, 0
          %1019 = vmatprep.subr.bf16.mxu0 0
          %1020 = vmatpush1.bf16.msra.mxu0 %v927
          %1021 = vmatprep.subr.bf16.mxu0 0
          %1022 = vmatpush1.bf16.msra.mxu0 0
          %1023 = vmatprep.subr.bf16.mxu0 0
          %1024 = vmatpush1.bf16.msra.mxu0 0
          %1025 = vmatprep.subr.bf16.mxu0 0
          %1026 = vmatpush1.bf16.msra.mxu0 0
          %1027 = vmatprep.subr.bf16.mxu0 0
          %1028 = vmatpush1.bf16.msra.mxu0 0
          %1029 = vmatprep.subr.bf16.mxu0 0
          %1030 = vmatpush1.bf16.msra.mxu0 0
          %1031 = vmatprep.subr.bf16.mxu0 0
          %1032 = vmatpush1.bf16.msra.mxu0 0
          %1033 = vmatprep.subr.bf16.mxu0 0
          %1034 = vmatpush1.bf16.msra.mxu0 0
          %1035 = vmatprep.subr.bf16.mxu0 0
          %1036 = vmatpush1.bf16.msra.mxu0 0
          %1037 = vmatprep.subr.bf16.mxu0 0
          %1038 = vmatpush1.bf16.msra.mxu0 0
          %1039 = vmatprep.subr.bf16.mxu0 0
          %1040 = vmatpush1.bf16.msra.mxu0 0
          %1041 = vmatprep.subr.bf16.mxu0 0
          %1042 = vmatpush1.bf16.msra.mxu0 0
          %1043 = vmatprep.subr.bf16.mxu0 0
          %1044 = vmatpush1.bf16.msra.mxu0 0
          %1045 = vmatprep.subr.bf16.mxu0 0
          %1046 = vmatpush1.bf16.msra.mxu0 0
          %1047 = vmatprep.subr.bf16.mxu0 0
          %1048 = vmatpush1.bf16.msra.mxu0 0
          %1049 = vmatprep.subr.bf16.mxu0 0
          %1050 = vmatpush1.bf16.msra.mxu0 0
          %1051 = vmatprep.mubr.bf16.mxu0 0
          %1052 = vmatmul.mubr.bf16.gmra.mrb[0].mxu0 %v1017
          %v1053 = vpop.f32.mrb[0].mxu0
          %v1054 = vadd.f32 0.0, %v1053
          %v1055 = vpop.f32.mrb[0].mxu0
          %v1056 = vpop.f32.mrb[0].mxu0
          %v1057 = vadd.f32 0.0, %v1056
          %v1058 = vpop.f32.mrb[0].mxu0
          %1059 = vdwg.mxu0
          %v1060 = vadd.f32 %v1013, %v1054
          %v1061 = vadd.f32 %v1014, %v1057
          %1063 = vrot.lane.b32.xlu0 %v869, 96
          %v1064 = vpop.permute.xlu0 %1063
          %1066 = vrot.lane.b32.xlu0 %v924, 96
          %v1067 = vpop.permute.xlu0 %1066
          %v1069 = vsel %vm932, %v1064, 0
          %v1072 = vsel %vm932, %v1067, 0
          %1074 = vmatprep.subr.bf16.mxu0 0
          %1075 = vmatpush1.bf16.xpose.msra.mxu0 %v1072
          %1076 = vmatprep.subr.bf16.mxu0 0
          %1077 = vmatpush1.bf16.xpose.msra.mxu0 0
          %1078 = vmatprep.subr.bf16.mxu0 0
          %1079 = vmatpush1.bf16.xpose.msra.mxu0 0
          %1080 = vmatprep.subr.bf16.mxu0 0
          %1081 = vmatpush1.bf16.xpose.msra.mxu0 0
          %1082 = vmatprep.subr.bf16.mxu0 0
          %1083 = vmatpush1.bf16.xpose.msra.mxu0 0
          %1084 = vmatprep.subr.bf16.mxu0 0
          %1085 = vmatpush1.bf16.xpose.msra.mxu0 0
          %1086 = vmatprep.subr.bf16.mxu0 0
          %1087 = vmatpush1.bf16.xpose.msra.mxu0 0
          %1088 = vmatprep.subr.bf16.mxu0 0
          %1089 = vmatpush1.bf16.xpose.msra.mxu0 0
          %1090 = vmatprep.subr.bf16.mxu0 0
          %1091 = vmatpush1.bf16.xpose.msra.mxu0 0
          %1092 = vmatprep.subr.bf16.mxu0 0
          %1093 = vmatpush1.bf16.xpose.msra.mxu0 0
          %1094 = vmatprep.subr.bf16.mxu0 0
          %1095 = vmatpush1.bf16.xpose.msra.mxu0 0
          %1096 = vmatprep.subr.bf16.mxu0 0
          %1097 = vmatpush1.bf16.xpose.msra.mxu0 0
          %1098 = vmatprep.subr.bf16.mxu0 0
          %1099 = vmatpush1.bf16.xpose.msra.mxu0 0
          %1100 = vmatprep.subr.bf16.mxu0 0
          %1101 = vmatpush1.bf16.xpose.msra.mxu0 0
          %1102 = vmatprep.subr.bf16.mxu0 0
          %1103 = vmatpush1.bf16.xpose.msra.mxu0 0
          %1104 = vmatprep.subr.bf16.mxu0 0
          %1105 = vmatpush1.bf16.xpose.msra.mxu0 0
          %1106 = vmatprep.mubr.bf16.mxu0 0
          %1107 = vmatmul.mubr.bf16.gmra.mrb[0].mxu0 %v1069
          %v1108 = vpop.f32.mrb[0].mxu0
          %v1109 = vadd.f32 0.0, %v1108
          %v1110 = vpop.f32.mrb[0].mxu0
          %v1111 = vpop.f32.mrb[0].mxu0
          %v1112 = vadd.f32 0.0, %v1111
          %v1113 = vpop.f32.mrb[0].mxu0
          %1114 = vdwg.mxu0
          %v1115 = vsel %vm930, %v1109, -1e+30
          %v1116 = vsel %vm931, %v1112, -1e+30
          %v1117 = vsel %vm982, %v1115, -inf
          %1118 = vmax.xlane.f32.xlu0 %v1117
          %v1119 = vpop.xlane.xlu0 %1118
          %v1120 = vsel %vm982, %v1116, -inf
          %1121 = vmax.xlane.f32.xlu0 %v1120
          %v1122 = vpop.xlane.xlu0 %1121
          %v1123 = vmax.f32 %v901, %v1119
          %v1124 = vmax.f32 %v902, %v1122
          %v1125 = vsub.f32 %v901, %v1123
          %v1126 = vsub.f32 %v902, %v1124
          %v1127 = vmul.f32 %v1125, 1.442695
          %v1128 = vpow.pop %v1127
          %v1129 = vmul.f32 %v1126, 1.442695
          %v1130 = vpow.pop %v1129
          %v1131 = vsub.f32 %v1115, %v1123
          %v1132 = vsub.f32 %v1116, %v1124
          %v1133 = vmul.f32 %v1131, 1.442695
          %v1134 = vpow.pop %v1133
          %v1135 = vmul.f32 %v1132, 1.442695
          %v1136 = vpow.pop %v1135
          %v1137 = vmul.f32 %v1128, %v903
          %v1138 = vmul.f32 %v1130, %v904
          %v1139 = vsel %vm982, %v1134, 0.0
          %1140 = vadd.xlane.f32.xlu0 %v1139
          %v1141 = vpop.xlane.xlu0 %1140
          %v1142 = vsel %vm982, %v1136, 0.0
          %1143 = vadd.xlane.f32.xlu0 %v1142
          %v1144 = vpop.xlane.xlu0 %1143
          %v1145 = vadd.f32 %v1137, %v1141
          %v1146 = vadd.f32 %v1138, %v1144
          %v1147 = vmul.f32 %v1128, %v905
          %v1148 = vmul.f32 %v1130, %v906
          %v1149 = vpack.c.bf16 %v1136, %v1134
          %1151 = vrot.lane.b32.xlu0 %v927, 96
          %v1152 = vpop.permute.xlu0 %1151
          %v1155 = vsel %vm982, %v1149, 0
          %1157 = vmatprep.subr.bf16.mxu0 0
          %1158 = vmatpush1.bf16.msra.mxu0 %v1152
          %1159 = vmatprep.subr.bf16.mxu0 0
          %1160 = vmatpush1.bf16.msra.mxu0 0
          %1161 = vmatprep.subr.bf16.mxu0 0
          %1162 = vmatpush1.bf16.msra.mxu0 0
          %1163 = vmatprep.subr.bf16.mxu0 0
          %1164 = vmatpush1.bf16.msra.mxu0 0
          %1165 = vmatprep.subr.bf16.mxu0 0
          %1166 = vmatpush1.bf16.msra.mxu0 0
          %1167 = vmatprep.subr.bf16.mxu0 0
          %1168 = vmatpush1.bf16.msra.mxu0 0
          %1169 = vmatprep.subr.bf16.mxu0 0
          %1170 = vmatpush1.bf16.msra.mxu0 0
          %1171 = vmatprep.subr.bf16.mxu0 0
          %1172 = vmatpush1.bf16.msra.mxu0 0
          %1173 = vmatprep.subr.bf16.mxu0 0
          %1174 = vmatpush1.bf16.msra.mxu0 0
          %1175 = vmatprep.subr.bf16.mxu0 0
          %1176 = vmatpush1.bf16.msra.mxu0 0
          %1177 = vmatprep.subr.bf16.mxu0 0
          %1178 = vmatpush1.bf16.msra.mxu0 0
          %1179 = vmatprep.subr.bf16.mxu0 0
          %1180 = vmatpush1.bf16.msra.mxu0 0
          %1181 = vmatprep.subr.bf16.mxu0 0
          %1182 = vmatpush1.bf16.msra.mxu0 0
          %1183 = vmatprep.subr.bf16.mxu0 0
          %1184 = vmatpush1.bf16.msra.mxu0 0
          %1185 = vmatprep.subr.bf16.mxu0 0
          %1186 = vmatpush1.bf16.msra.mxu0 0
          %1187 = vmatprep.subr.bf16.mxu0 0
          %1188 = vmatpush1.bf16.msra.mxu0 0
          %1189 = vmatprep.mubr.bf16.mxu0 0
          %1190 = vmatmul.mubr.bf16.gmra.mrb[0].mxu0 %v1155
          %v1191 = vpop.f32.mrb[0].mxu0
          %v1192 = vadd.f32 0.0, %v1191
          %v1193 = vpop.f32.mrb[0].mxu0
          %v1194 = vpop.f32.mrb[0].mxu0
          %v1195 = vadd.f32 0.0, %v1194
          %v1196 = vpop.f32.mrb[0].mxu0
          %1197 = vdwg.mxu0
          %v1198 = vadd.f32 %v1147, %v1192
          %v1199 = vadd.f32 %v1148, %v1195
          %1200 = vrot.lane.b32.xlu0 %v869, 64
          %v1201 = vpop.permute.xlu0 %1200
          %1202 = vrot.lane.b32.xlu0 %v924, 64
          %v1203 = vpop.permute.xlu0 %1202
          %v1205 = vsel %vm932, %v1201, 0
          %v1208 = vsel %vm932, %v1203, 0
          %1210 = vmatprep.subr.bf16.mxu0 0
          %1211 = vmatpush1.bf16.xpose.msra.mxu0 %v1208
          %1212 = vmatprep.subr.bf16.mxu0 0
          %1213 = vmatpush1.bf16.xpose.msra.mxu0 0
          %1214 = vmatprep.subr.bf16.mxu0 0
          %1215 = vmatpush1.bf16.xpose.msra.mxu0 0
          %1216 = vmatprep.subr.bf16.mxu0 0
          %1217 = vmatpush1.bf16.xpose.msra.mxu0 0
          %1218 = vmatprep.subr.bf16.mxu0 0
          %1219 = vmatpush1.bf16.xpose.msra.mxu0 0
          %1220 = vmatprep.subr.bf16.mxu0 0
          %1221 = vmatpush1.bf16.xpose.msra.mxu0 0
          %1222 = vmatprep.subr.bf16.mxu0 0
          %1223 = vmatpush1.bf16.xpose.msra.mxu0 0
          %1224 = vmatprep.subr.bf16.mxu0 0
          %1225 = vmatpush1.bf16.xpose.msra.mxu0 0
          %1226 = vmatprep.subr.bf16.mxu0 0
          %1227 = vmatpush1.bf16.xpose.msra.mxu0 0
          %1228 = vmatprep.subr.bf16.mxu0 0
          %1229 = vmatpush1.bf16.xpose.msra.mxu0 0
          %1230 = vmatprep.subr.bf16.mxu0 0
          %1231 = vmatpush1.bf16.xpose.msra.mxu0 0
          %1232 = vmatprep.subr.bf16.mxu0 0
          %1233 = vmatpush1.bf16.xpose.msra.mxu0 0
          %1234 = vmatprep.subr.bf16.mxu0 0
          %1235 = vmatpush1.bf16.xpose.msra.mxu0 0
          %1236 = vmatprep.subr.bf16.mxu0 0
          %1237 = vmatpush1.bf16.xpose.msra.mxu0 0
          %1238 = vmatprep.subr.bf16.mxu0 0
          %1239 = vmatpush1.bf16.xpose.msra.mxu0 0
          %1240 = vmatprep.subr.bf16.mxu0 0
          %1241 = vmatpush1.bf16.xpose.msra.mxu0 0
          %1242 = vmatprep.mubr.bf16.mxu0 0
          %1243 = vmatmul.mubr.bf16.gmra.mrb[0].mxu0 %v1205
          %v1244 = vpop.f32.mrb[0].mxu0
          %v1245 = vadd.f32 0.0, %v1244
          %v1246 = vpop.f32.mrb[0].mxu0
          %v1247 = vpop.f32.mrb[0].mxu0
          %v1248 = vadd.f32 0.0, %v1247
          %v1249 = vpop.f32.mrb[0].mxu0
          %1250 = vdwg.mxu0
          %v1251 = vsel %vm930, %v1245, -1e+30
          %v1252 = vsel %vm931, %v1248, -1e+30
          %v1253 = vsel %vm982, %v1251, -inf
          %1254 = vmax.xlane.f32.xlu0 %v1253
          %v1255 = vpop.xlane.xlu0 %1254
          %v1256 = vsel %vm982, %v1252, -inf
          %1257 = vmax.xlane.f32.xlu0 %v1256
          %v1258 = vpop.xlane.xlu0 %1257
          %v1259 = vmax.f32 %v907, %v1255
          %v1260 = vmax.f32 %v908, %v1258
          %v1261 = vsub.f32 %v907, %v1259
          %v1262 = vsub.f32 %v908, %v1260
          %v1263 = vmul.f32 %v1261, 1.442695
          %v1264 = vpow.pop %v1263
          %v1265 = vmul.f32 %v1262, 1.442695
          %v1266 = vpow.pop %v1265
          %v1267 = vsub.f32 %v1251, %v1259
          %v1268 = vsub.f32 %v1252, %v1260
          %v1269 = vmul.f32 %v1267, 1.442695
          %v1270 = vpow.pop %v1269
          %v1271 = vmul.f32 %v1268, 1.442695
          %v1272 = vpow.pop %v1271
          %v1273 = vmul.f32 %v1264, %v909
          %v1274 = vmul.f32 %v1266, %v910
          %v1275 = vsel %vm982, %v1270, 0.0
          %1276 = vadd.xlane.f32.xlu0 %v1275
          %v1277 = vpop.xlane.xlu0 %1276
          %v1278 = vsel %vm982, %v1272, 0.0
          %1279 = vadd.xlane.f32.xlu0 %v1278
          %v1280 = vpop.xlane.xlu0 %1279
          %v1281 = vadd.f32 %v1273, %v1277
          %v1282 = vadd.f32 %v1274, %v1280
          %v1283 = vmul.f32 %v1264, %v911
          %v1284 = vmul.f32 %v1266, %v912
          %v1285 = vpack.c.bf16 %v1272, %v1270
          %1286 = vrot.lane.b32.xlu0 %v927, 64
          %v1287 = vpop.permute.xlu0 %1286
          %v1290 = vsel %vm982, %v1285, 0
          %1292 = vmatprep.subr.bf16.mxu0 0
          %1293 = vmatpush1.bf16.msra.mxu0 %v1287
          %1294 = vmatprep.subr.bf16.mxu0 0
          %1295 = vmatpush1.bf16.msra.mxu0 0
          %1296 = vmatprep.subr.bf16.mxu0 0
          %1297 = vmatpush1.bf16.msra.mxu0 0
          %1298 = vmatprep.subr.bf16.mxu0 0
          %1299 = vmatpush1.bf16.msra.mxu0 0
          %1300 = vmatprep.subr.bf16.mxu0 0
          %1301 = vmatpush1.bf16.msra.mxu0 0
          %1302 = vmatprep.subr.bf16.mxu0 0
          %1303 = vmatpush1.bf16.msra.mxu0 0
          %1304 = vmatprep.subr.bf16.mxu0 0
          %1305 = vmatpush1.bf16.msra.mxu0 0
          %1306 = vmatprep.subr.bf16.mxu0 0
          %1307 = vmatpush1.bf16.msra.mxu0 0
          %1308 = vmatprep.subr.bf16.mxu0 0
          %1309 = vmatpush1.bf16.msra.mxu0 0
          %1310 = vmatprep.subr.bf16.mxu0 0
          %1311 = vmatpush1.bf16.msra.mxu0 0
          %1312 = vmatprep.subr.bf16.mxu0 0
          %1313 = vmatpush1.bf16.msra.mxu0 0
          %1314 = vmatprep.subr.bf16.mxu0 0
          %1315 = vmatpush1.bf16.msra.mxu0 0
          %1316 = vmatprep.subr.bf16.mxu0 0
          %1317 = vmatpush1.bf16.msra.mxu0 0
          %1318 = vmatprep.subr.bf16.mxu0 0
          %1319 = vmatpush1.bf16.msra.mxu0 0
          %1320 = vmatprep.subr.bf16.mxu0 0
          %1321 = vmatpush1.bf16.msra.mxu0 0
          %1322 = vmatprep.subr.bf16.mxu0 0
          %1323 = vmatpush1.bf16.msra.mxu0 0
          %1324 = vmatprep.mubr.bf16.mxu0 0
          %1325 = vmatmul.mubr.bf16.gmra.mrb[0].mxu0 %v1290
          %v1326 = vpop.f32.mrb[0].mxu0
          %v1327 = vadd.f32 0.0, %v1326
          %v1328 = vpop.f32.mrb[0].mxu0
          %v1329 = vpop.f32.mrb[0].mxu0
          %v1330 = vadd.f32 0.0, %v1329
          %v1331 = vpop.f32.mrb[0].mxu0
          %1332 = vdwg.mxu0
          %v1333 = vadd.f32 %v1283, %v1327
          %v1334 = vadd.f32 %v1284, %v1330
          %1335 = vrot.lane.b32.xlu0 %v869, 32
          %v1336 = vpop.permute.xlu0 %1335
          %1337 = vrot.lane.b32.xlu0 %v924, 32
          %v1338 = vpop.permute.xlu0 %1337
          %v1340 = vsel %vm932, %v1336, 0
          %v1343 = vsel %vm932, %v1338, 0
          %1345 = vmatprep.subr.bf16.mxu0 0
          %1346 = vmatpush1.bf16.xpose.msra.mxu0 %v1343
          %1347 = vmatprep.subr.bf16.mxu0 0
          %1348 = vmatpush1.bf16.xpose.msra.mxu0 0
          %1349 = vmatprep.subr.bf16.mxu0 0
          %1350 = vmatpush1.bf16.xpose.msra.mxu0 0
          %1351 = vmatprep.subr.bf16.mxu0 0
          %1352 = vmatpush1.bf16.xpose.msra.mxu0 0
          %1353 = vmatprep.subr.bf16.mxu0 0
          %1354 = vmatpush1.bf16.xpose.msra.mxu0 0
          %1355 = vmatprep.subr.bf16.mxu0 0
          %1356 = vmatpush1.bf16.xpose.msra.mxu0 0
          %1357 = vmatprep.subr.bf16.mxu0 0
          %1358 = vmatpush1.bf16.xpose.msra.mxu0 0
          %1359 = vmatprep.subr.bf16.mxu0 0
          %1360 = vmatpush1.bf16.xpose.msra.mxu0 0
          %1361 = vmatprep.subr.bf16.mxu0 0
          %1362 = vmatpush1.bf16.xpose.msra.mxu0 0
          %1363 = vmatprep.subr.bf16.mxu0 0
          %1364 = vmatpush1.bf16.xpose.msra.mxu0 0
          %1365 = vmatprep.subr.bf16.mxu0 0
          %1366 = vmatpush1.bf16.xpose.msra.mxu0 0
          %1367 = vmatprep.subr.bf16.mxu0 0
          %1368 = vmatpush1.bf16.xpose.msra.mxu0 0
          %1369 = vmatprep.subr.bf16.mxu0 0
          %1370 = vmatpush1.bf16.xpose.msra.mxu0 0
          %1371 = vmatprep.subr.bf16.mxu0 0
          %1372 = vmatpush1.bf16.xpose.msra.mxu0 0
          %1373 = vmatprep.subr.bf16.mxu0 0
          %1374 = vmatpush1.bf16.xpose.msra.mxu0 0
          %1375 = vmatprep.subr.bf16.mxu0 0
          %1376 = vmatpush1.bf16.xpose.msra.mxu0 0
          %1377 = vmatprep.mubr.bf16.mxu0 0
          %1378 = vmatmul.mubr.bf16.gmra.mrb[0].mxu0 %v1340
          %v1379 = vpop.f32.mrb[0].mxu0
          %v1380 = vadd.f32 0.0, %v1379
          %v1381 = vpop.f32.mrb[0].mxu0
          %v1382 = vpop.f32.mrb[0].mxu0
          %v1383 = vadd.f32 0.0, %v1382
          %v1384 = vpop.f32.mrb[0].mxu0
          %1385 = vdwg.mxu0
          %v1386 = vsel %vm930, %v1380, -1e+30
          %v1387 = vsel %vm931, %v1383, -1e+30
          %v1388 = vsel %vm982, %v1386, -inf
          %1389 = vmax.xlane.f32.xlu0 %v1388
          %v1390 = vpop.xlane.xlu0 %1389
          %v1391 = vsel %vm982, %v1387, -inf
          %1392 = vmax.xlane.f32.xlu0 %v1391
          %v1393 = vpop.xlane.xlu0 %1392
          %v1394 = vmax.f32 %v913, %v1390
          %v1395 = vmax.f32 %v914, %v1393
          %v1396 = vsub.f32 %v913, %v1394
          %v1397 = vsub.f32 %v914, %v1395
          %v1398 = vmul.f32 %v1396, 1.442695
          %v1399 = vpow.pop %v1398
          %v1400 = vmul.f32 %v1397, 1.442695
          %v1401 = vpow.pop %v1400
          %v1402 = vsub.f32 %v1386, %v1394
          %v1403 = vsub.f32 %v1387, %v1395
          %v1404 = vmul.f32 %v1402, 1.442695
          %v1405 = vpow.pop %v1404
          %v1406 = vmul.f32 %v1403, 1.442695
          %v1407 = vpow.pop %v1406
          %v1408 = vmul.f32 %v1399, %v915
          %v1409 = vmul.f32 %v1401, %v916
          %v1410 = vsel %vm982, %v1405, 0.0
          %1411 = vadd.xlane.f32.xlu0 %v1410
          %v1412 = vpop.xlane.xlu0 %1411
          %v1413 = vsel %vm982, %v1407, 0.0
          %1414 = vadd.xlane.f32.xlu0 %v1413
          %v1415 = vpop.xlane.xlu0 %1414
          %v1416 = vadd.f32 %v1408, %v1412
          %v1417 = vadd.f32 %v1409, %v1415
          %v1418 = vmul.f32 %v1399, %v917
          %v1419 = vmul.f32 %v1401, %v918
          %v1420 = vpack.c.bf16 %v1407, %v1405
          %1421 = vrot.lane.b32.xlu0 %v927, 32
          %v1422 = vpop.permute.xlu0 %1421
          %v1425 = vsel %vm982, %v1420, 0
          %1427 = vmatprep.subr.bf16.mxu0 0
          %1428 = vmatpush1.bf16.msra.mxu0 %v1422
          %1429 = vmatprep.subr.bf16.mxu0 0
          %1430 = vmatpush1.bf16.msra.mxu0 0
          %1431 = vmatprep.subr.bf16.mxu0 0
          %1432 = vmatpush1.bf16.msra.mxu0 0
          %1433 = vmatprep.subr.bf16.mxu0 0
          %1434 = vmatpush1.bf16.msra.mxu0 0
          %1435 = vmatprep.subr.bf16.mxu0 0
          %1436 = vmatpush1.bf16.msra.mxu0 0
          %1437 = vmatprep.subr.bf16.mxu0 0
          %1438 = vmatpush1.bf16.msra.mxu0 0
          %1439 = vmatprep.subr.bf16.mxu0 0
          %1440 = vmatpush1.bf16.msra.mxu0 0
          %1441 = vmatprep.subr.bf16.mxu0 0
          %1442 = vmatpush1.bf16.msra.mxu0 0
          %1443 = vmatprep.subr.bf16.mxu0 0
          %1444 = vmatpush1.bf16.msra.mxu0 0
          %1445 = vmatprep.subr.bf16.mxu0 0
          %1446 = vmatpush1.bf16.msra.mxu0 0
          %1447 = vmatprep.subr.bf16.mxu0 0
          %1448 = vmatpush1.bf16.msra.mxu0 0
          %1449 = vmatprep.subr.bf16.mxu0 0
          %1450 = vmatpush1.bf16.msra.mxu0 0
          %1451 = vmatprep.subr.bf16.mxu0 0
          %1452 = vmatpush1.bf16.msra.mxu0 0
          %1453 = vmatprep.subr.bf16.mxu0 0
          %1454 = vmatpush1.bf16.msra.mxu0 0
          %1455 = vmatprep.subr.bf16.mxu0 0
          %1456 = vmatpush1.bf16.msra.mxu0 0
          %1457 = vmatprep.subr.bf16.mxu0 0
          %1458 = vmatpush1.bf16.msra.mxu0 0
          %1459 = vmatprep.mubr.bf16.mxu0 0
          %1460 = vmatmul.mubr.bf16.gmra.mrb[0].mxu0 %v1425
          %v1461 = vpop.f32.mrb[0].mxu0
          %v1462 = vadd.f32 0.0, %v1461
          %v1463 = vpop.f32.mrb[0].mxu0
          %v1464 = vpop.f32.mrb[0].mxu0
          %v1465 = vadd.f32 0.0, %v1464
          %v1466 = vpop.f32.mrb[0].mxu0
          %1467 = vdwg.mxu0
          %v1468 = vadd.f32 %v1418, %v1462
          %v1469 = vadd.f32 %v1419, %v1465
        $region105: #{tpu_custom_call.1} parent=71 // loop_footer
          %s892 = sadd.s32 %s890, 1
        $region106: #{tpu_custom_call.1} parent=71 // loop_footer_branch
          %889 = sbr.rel target = $region102
        $region107: #{tpu_custom_call.1} parent=71 // loop_exit
          _
        %v1470 = vrcp.pop %v897
        %v1471 = vrcp.pop %v898
        %v1472 = vmul.f32 %v899, %v1470
        %v1473 = vmul.f32 %v900, %v1471
        %v1474 = vpack.c.bf16 %v1473, %v1472
        %v1475 = vld [vmem:[#allocation12] sm:$0xf]
        %v1476 = vld [vmem:[#allocation12 + $0x4] sm:$0xf]
        %v1477 = vld [vmem:[#allocation12 + $0x8] sm:$0xf]
        %v1478 = vld [vmem:[#allocation12 + $0xc] sm:$0xf]
        %v1479 = vrcp.pop %v903
        %v1480 = vrcp.pop %v904
        %v1481 = vmul.f32 %v905, %v1479
        %v1482 = vmul.f32 %v906, %v1480
        %v1483 = vpack.c.bf16 %v1482, %v1481
        %v1484 = vld [vmem:[#allocation12 + $0x10] sm:$0xf]
        %v1485 = vld [vmem:[#allocation12 + $0x14] sm:$0xf]
        %v1486 = vld [vmem:[#allocation12 + $0x18] sm:$0xf]
        %v1487 = vld [vmem:[#allocation12 + $0x1c] sm:$0xf]
        %v1492 = vunpack.c.l.b16 %v1484
        %v1493 = vunpack.c.l.b16 %v1485
        %v1494 = vunpack.c.l.b16 %v1486
        %v1495 = vunpack.c.l.b16 %v1487
        %v1496 = vpack.c.b16 %v1493, %v1492
        %v1497 = vpack.c.b16 %v1495, %v1494
        %vm1500 = vcmask 261120
        %v1502 = vsel %vm1500, %v1483, 0
        %1504 = vmatprep.subr.bf16.mxu0 0
        %1505 = vmatpush1.bf16.msra.mxu0 %v1496
        %1506 = vmatprep.subr.bf16.mxu0 0
        %1507 = vmatpush1.bf16.msra.mxu0 %v1497
        %1508 = vmatprep.subr.bf16.mxu0 0
        %1509 = vmatpush1.bf16.msra.mxu0 0
        %1510 = vmatprep.subr.bf16.mxu0 0
        %1511 = vmatpush1.bf16.msra.mxu0 0
        %1512 = vmatprep.subr.bf16.mxu0 0
        %1513 = vmatpush1.bf16.msra.mxu0 0
        %1514 = vmatprep.subr.bf16.mxu0 0
        %1515 = vmatpush1.bf16.msra.mxu0 0
        %1516 = vmatprep.subr.bf16.mxu0 0
        %1517 = vmatpush1.bf16.msra.mxu0 0
        %1518 = vmatprep.subr.bf16.mxu0 0
        %1519 = vmatpush1.bf16.msra.mxu0 0
        %1520 = vmatprep.subr.bf16.mxu0 0
        %1521 = vmatpush1.bf16.msra.mxu0 0
        %1522 = vmatprep.subr.bf16.mxu0 0
        %1523 = vmatpush1.bf16.msra.mxu0 0
        %1524 = vmatprep.subr.bf16.mxu0 0
        %1525 = vmatpush1.bf16.msra.mxu0 0
        %1526 = vmatprep.subr.bf16.mxu0 0
        %1527 = vmatpush1.bf16.msra.mxu0 0
        %1528 = vmatprep.subr.bf16.mxu0 0
        %1529 = vmatpush1.bf16.msra.mxu0 0
        %1530 = vmatprep.subr.bf16.mxu0 0
        %1531 = vmatpush1.bf16.msra.mxu0 0
        %1532 = vmatprep.subr.bf16.mxu0 0
        %1533 = vmatpush1.bf16.msra.mxu0 0
        %1534 = vmatprep.subr.bf16.mxu0 0
        %1535 = vmatpush1.bf16.msra.mxu0 0
        %1536 = vmatprep.mubr.bf16.mxu0 0
        %1537 = vmatmul.mubr.bf16.gmra.mrb[0].mxu0 %v1502
        %v1538 = vpop.f32.mrb[0].mxu0
        %v1539 = vadd.f32 0.0, %v1538
        %v1540 = vpop.f32.mrb[0].mxu0
        %v1541 = vpop.f32.mrb[0].mxu0
        %v1542 = vadd.f32 0.0, %v1541
        %v1543 = vpop.f32.mrb[0].mxu0
        %1544 = vdwg.mxu0
        %v1549 = vunpack.c.l.b16 %v1475
        %v1550 = vunpack.c.l.b16 %v1476
        %v1551 = vunpack.c.l.b16 %v1477
        %v1552 = vunpack.c.l.b16 %v1478
        %v1553 = vpack.c.b16 %v1550, %v1549
        %v1554 = vpack.c.b16 %v1552, %v1551
        %v1558 = vsel %vm1500, %v1474, 0
        %1560 = vmatprep.subr.bf16.mxu0 0
        %1561 = vmatpush1.bf16.msra.mxu0 %v1553
        %1562 = vmatprep.subr.bf16.mxu0 0
        %1563 = vmatpush1.bf16.msra.mxu0 %v1554
        %1564 = vmatprep.subr.bf16.mxu0 0
        %1565 = vmatpush1.bf16.msra.mxu0 0
        %1566 = vmatprep.subr.bf16.mxu0 0
        %1567 = vmatpush1.bf16.msra.mxu0 0
        %1568 = vmatprep.subr.bf16.mxu0 0
        %1569 = vmatpush1.bf16.msra.mxu0 0
        %1570 = vmatprep.subr.bf16.mxu0 0
        %1571 = vmatpush1.bf16.msra.mxu0 0
        %1572 = vmatprep.subr.bf16.mxu0 0
        %1573 = vmatpush1.bf16.msra.mxu0 0
        %1574 = vmatprep.subr.bf16.mxu0 0
        %1575 = vmatpush1.bf16.msra.mxu0 0
        %1576 = vmatprep.subr.bf16.mxu0 0
        %1577 = vmatpush1.bf16.msra.mxu0 0
        %1578 = vmatprep.subr.bf16.mxu0 0
        %1579 = vmatpush1.bf16.msra.mxu0 0
        %1580 = vmatprep.subr.bf16.mxu0 0
        %1581 = vmatpush1.bf16.msra.mxu0 0
        %1582 = vmatprep.subr.bf16.mxu0 0
        %1583 = vmatpush1.bf16.msra.mxu0 0
        %1584 = vmatprep.subr.bf16.mxu0 0
        %1585 = vmatpush1.bf16.msra.mxu0 0
        %1586 = vmatprep.subr.bf16.mxu0 0
        %1587 = vmatpush1.bf16.msra.mxu0 0
        %1588 = vmatprep.subr.bf16.mxu0 0
        %1589 = vmatpush1.bf16.msra.mxu0 0
        %1590 = vmatprep.subr.bf16.mxu0 0
        %1591 = vmatpush1.bf16.msra.mxu0 0
        %1592 = vmatprep.mubr.bf16.mxu0 0
        %1593 = vmatmul.mubr.bf16.gmra.mrb[0].mxu0 %v1558
        %v1594 = vpop.f32.mrb[0].mxu0
        %v1595 = vadd.f32 %v1539, %v1594
        %v1596 = vpop.f32.mrb[0].mxu0
        %v1597 = vpop.f32.mrb[0].mxu0
        %v1598 = vadd.f32 %v1542, %v1597
        %v1599 = vpop.f32.mrb[0].mxu0
        %1600 = vdwg.mxu0
        %v1601 = vrcp.pop %v909
        %v1602 = vrcp.pop %v910
        %v1603 = vmul.f32 %v911, %v1601
        %v1604 = vmul.f32 %v912, %v1602
        %v1605 = vpack.c.bf16 %v1604, %v1603
        %v1606 = vld [vmem:[#allocation12 + $0x20] sm:$0xf]
        %v1607 = vld [vmem:[#allocation12 + $0x24] sm:$0xf]
        %v1608 = vld [vmem:[#allocation12 + $0x28] sm:$0xf]
        %v1609 = vld [vmem:[#allocation12 + $0x2c] sm:$0xf]
        %v1614 = vunpack.c.l.b16 %v1606
        %v1615 = vunpack.c.l.b16 %v1607
        %v1616 = vunpack.c.l.b16 %v1608
        %v1617 = vunpack.c.l.b16 %v1609
        %v1618 = vpack.c.b16 %v1615, %v1614
        %v1619 = vpack.c.b16 %v1617, %v1616
        %v1623 = vsel %vm1500, %v1605, 0
        %1625 = vmatprep.subr.bf16.mxu0 0
        %1626 = vmatpush1.bf16.msra.mxu0 %v1618
        %1627 = vmatprep.subr.bf16.mxu0 0
        %1628 = vmatpush1.bf16.msra.mxu0 %v1619
        %1629 = vmatprep.subr.bf16.mxu0 0
        %1630 = vmatpush1.bf16.msra.mxu0 0
        %1631 = vmatprep.subr.bf16.mxu0 0
        %1632 = vmatpush1.bf16.msra.mxu0 0
        %1633 = vmatprep.subr.bf16.mxu0 0
        %1634 = vmatpush1.bf16.msra.mxu0 0
        %1635 = vmatprep.subr.bf16.mxu0 0
        %1636 = vmatpush1.bf16.msra.mxu0 0
        %1637 = vmatprep.subr.bf16.mxu0 0
        %1638 = vmatpush1.bf16.msra.mxu0 0
        %1639 = vmatprep.subr.bf16.mxu0 0
        %1640 = vmatpush1.bf16.msra.mxu0 0
        %1641 = vmatprep.subr.bf16.mxu0 0
        %1642 = vmatpush1.bf16.msra.mxu0 0
        %1643 = vmatprep.subr.bf16.mxu0 0
        %1644 = vmatpush1.bf16.msra.mxu0 0
        %1645 = vmatprep.subr.bf16.mxu0 0
        %1646 = vmatpush1.bf16.msra.mxu0 0
        %1647 = vmatprep.subr.bf16.mxu0 0
        %1648 = vmatpush1.bf16.msra.mxu0 0
        %1649 = vmatprep.subr.bf16.mxu0 0
        %1650 = vmatpush1.bf16.msra.mxu0 0
        %1651 = vmatprep.subr.bf16.mxu0 0
        %1652 = vmatpush1.bf16.msra.mxu0 0
        %1653 = vmatprep.subr.bf16.mxu0 0
        %1654 = vmatpush1.bf16.msra.mxu0 0
        %1655 = vmatprep.subr.bf16.mxu0 0
        %1656 = vmatpush1.bf16.msra.mxu0 0
        %1657 = vmatprep.mubr.bf16.mxu0 0
        %1658 = vmatmul.mubr.bf16.gmra.mrb[0].mxu0 %v1623
        %v1659 = vpop.f32.mrb[0].mxu0
        %v1660 = vadd.f32 0.0, %v1659
        %v1661 = vpop.f32.mrb[0].mxu0
        %v1662 = vpop.f32.mrb[0].mxu0
        %v1663 = vadd.f32 0.0, %v1662
        %v1664 = vpop.f32.mrb[0].mxu0
        %1665 = vdwg.mxu0
        %v1666 = vadd.f32 %v1595, %v1660
        %v1667 = vadd.f32 %v1598, %v1663
        %v1668 = vrcp.pop %v915
        %v1669 = vrcp.pop %v916
        %v1670 = vmul.f32 %v917, %v1668
        %v1671 = vmul.f32 %v918, %v1669
        %v1672 = vpack.c.bf16 %v1671, %v1670
        %v1673 = vld [vmem:[#allocation12 + $0x30] sm:$0xf]
        %v1674 = vld [vmem:[#allocation12 + $0x34] sm:$0xf]
        %v1675 = vld [vmem:[#allocation12 + $0x38] sm:$0xf]
        %v1676 = vld [vmem:[#allocation12 + $0x3c] sm:$0xf]
        %v1681 = vunpack.c.l.b16 %v1673
        %v1682 = vunpack.c.l.b16 %v1674
        %v1683 = vunpack.c.l.b16 %v1675
        %v1684 = vunpack.c.l.b16 %v1676
        %v1685 = vpack.c.b16 %v1682, %v1681
        %v1686 = vpack.c.b16 %v1684, %v1683
        %v1690 = vsel %vm1500, %v1672, 0
        %1692 = vmatprep.subr.bf16.mxu0 0
        %1693 = vmatpush1.bf16.msra.mxu0 %v1685
        %1694 = vmatprep.subr.bf16.mxu0 0
        %1695 = vmatpush1.bf16.msra.mxu0 %v1686
        %1696 = vmatprep.subr.bf16.mxu0 0
        %1697 = vmatpush1.bf16.msra.mxu0 0
        %1698 = vmatprep.subr.bf16.mxu0 0
        %1699 = vmatpush1.bf16.msra.mxu0 0
        %1700 = vmatprep.subr.bf16.mxu0 0
        %1701 = vmatpush1.bf16.msra.mxu0 0
        %1702 = vmatprep.subr.bf16.mxu0 0
        %1703 = vmatpush1.bf16.msra.mxu0 0
        %1704 = vmatprep.subr.bf16.mxu0 0
        %1705 = vmatpush1.bf16.msra.mxu0 0
        %1706 = vmatprep.subr.bf16.mxu0 0
        %1707 = vmatpush1.bf16.msra.mxu0 0
        %1708 = vmatprep.subr.bf16.mxu0 0
        %1709 = vmatpush1.bf16.msra.mxu0 0
        %1710 = vmatprep.subr.bf16.mxu0 0
        %1711 = vmatpush1.bf16.msra.mxu0 0
        %1712 = vmatprep.subr.bf16.mxu0 0
        %1713 = vmatpush1.bf16.msra.mxu0 0
        %1714 = vmatprep.subr.bf16.mxu0 0
        %1715 = vmatpush1.bf16.msra.mxu0 0
        %1716 = vmatprep.subr.bf16.mxu0 0
        %1717 = vmatpush1.bf16.msra.mxu0 0
        %1718 = vmatprep.subr.bf16.mxu0 0
        %1719 = vmatpush1.bf16.msra.mxu0 0
        %1720 = vmatprep.subr.bf16.mxu0 0
        %1721 = vmatpush1.bf16.msra.mxu0 0
        %1722 = vmatprep.subr.bf16.mxu0 0
        %1723 = vmatpush1.bf16.msra.mxu0 0
        %1724 = vmatprep.mubr.bf16.mxu0 0
        %1725 = vmatmul.mubr.bf16.gmra.mrb[0].mxu0 %v1690
        %v1726 = vpop.f32.mrb[0].mxu0
        %v1727 = vadd.f32 0.0, %v1726
        %v1728 = vpop.f32.mrb[0].mxu0
        %v1729 = vpop.f32.mrb[0].mxu0
        %v1730 = vadd.f32 0.0, %v1729
        %v1731 = vpop.f32.mrb[0].mxu0
        %1732 = vdwg.mxu0
        %v1733 = vadd.f32 %v1666, %v1727
        %v1734 = vadd.f32 %v1667, %v1730
        %v1735 = vadd.f32 %v564, %v1733
        %v1736 = vadd.f32 %v565, %v1734
        %v1737 = vld [vmem:[%s6] sm:$0x1]
        %v1739 = vlaneseq
        %v1740 = vshrl.u32 %v1739, 7
        %v1741 = vsub.s32 0, %v1740
        %v1742 = vrot.slane %v1737, %v1741
        %v1744 = vadd.f32 %v1735, %v1742
        %v1745 = vadd.f32 %v1736, %v1742
        %v1746 = vld [vmem:[%s7] sm:$0x1]
        %v1747 = vld [vmem:[%s8] sm:$0x1]
        %1748 = vadd.xlane.f32.xlu0 %v1744
        %v1749 = vpop.xlane.xlu0 %1748
        %1750 = vadd.xlane.f32.xlu0 %v1745
        %v1751 = vpop.xlane.xlu0 %1750
        %v1752 = vmul.f32 %v1749, %v572
        %v1753 = vmul.f32 %v1751, %v572
        %v1754 = vsub.f32 %v1744, %v1752
        %v1755 = vsub.f32 %v1745, %v1753
        %v1756 = vmul.f32 %v1754, %v1754
        %v1757 = vmul.f32 %v1755, %v1755
        %1758 = vadd.xlane.f32.xlu0 %v1756
        %v1759 = vpop.xlane.xlu0 %1758
        %1760 = vadd.xlane.f32.xlu0 %v1757
        %v1761 = vpop.xlane.xlu0 %1760
        %v1762 = vmul.f32 %v1759, %v572
        %v1763 = vmul.f32 %v1761, %v572
        %v1764 = vadd.f32 %v1762, 1e-05
        %v1765 = vadd.f32 %v1763, 1e-05
        %v1766 = vrsqrt.pop %v1764
        %v1767 = vrsqrt.pop %v1765
        %v1768 = vmul.f32 %v1754, %v1766
        %v1769 = vmul.f32 %v1755, %v1767
        %v1771 = vlaneseq
        %v1772 = vshrl.u32 %v1771, 7
        %v1773 = vsub.s32 0, %v1772
        %v1774 = vrot.slane %v1746, %v1773
        %v1776 = vmul.f32 %v1768, %v1774
        %v1777 = vmul.f32 %v1769, %v1774
        %v1779 = vlaneseq
        %v1780 = vshrl.u32 %v1779, 7
        %v1781 = vsub.s32 0, %v1780
        %v1782 = vrot.slane %v1747, %v1781
        %v1784 = vadd.f32 %v1776, %v1782
        %v1785 = vadd.f32 %v1777, %v1782
        %v1786 = vpack.c.bf16 %v1785, %v1784
        %v1787 = vld [vmem:[#allocation13] sm:$0xff]
        %v1788 = vld [vmem:[#allocation13 + $0x8] sm:$0xff]
        %v1789 = vld [vmem:[#allocation13 + $0x10] sm:$0xff]
        %v1790 = vld [vmem:[#allocation13 + $0x18] sm:$0xff]
        %v1791 = vld [vmem:[#allocation13 + $0x20] sm:$0xff]
        %v1792 = vld [vmem:[#allocation13 + $0x28] sm:$0xff]
        %v1793 = vld [vmem:[#allocation13 + $0x30] sm:$0xff]
        %v1794 = vld [vmem:[#allocation13 + $0x38] sm:$0xff]
        %v1795 = vld [vmem:[#allocation13 + $0x40] sm:$0xff]
        %v1796 = vld [vmem:[#allocation13 + $0x48] sm:$0xff]
        %v1797 = vld [vmem:[#allocation13 + $0x50] sm:$0xff]
        %v1798 = vld [vmem:[#allocation13 + $0x58] sm:$0xff]
        %v1799 = vld [vmem:[#allocation13 + $0x60] sm:$0xff]
        %v1800 = vld [vmem:[#allocation13 + $0x68] sm:$0xff]
        %v1801 = vld [vmem:[#allocation13 + $0x70] sm:$0xff]
        %v1802 = vld [vmem:[#allocation13 + $0x78] sm:$0xff]
        %v1803 = vld [vmem:[#allocation13 + $0x80] sm:$0xff]
        %v1804 = vld [vmem:[#allocation13 + $0x88] sm:$0xff]
        %v1805 = vld [vmem:[#allocation13 + $0x90] sm:$0xff]
        %v1806 = vld [vmem:[#allocation13 + $0x98] sm:$0xff]
        %v1807 = vld [vmem:[#allocation13 + $0xa0] sm:$0xff]
        %v1808 = vld [vmem:[#allocation13 + $0xa8] sm:$0xff]
        %v1809 = vld [vmem:[#allocation13 + $0xb0] sm:$0xff]
        %v1810 = vld [vmem:[#allocation13 + $0xb8] sm:$0xff]
        %v1811 = vld [vmem:[#allocation13 + $0xc0] sm:$0xff]
        %v1812 = vld [vmem:[#allocation13 + $0xc8] sm:$0xff]
        %v1813 = vld [vmem:[#allocation13 + $0xd0] sm:$0xff]
        %v1814 = vld [vmem:[#allocation13 + $0xd8] sm:$0xff]
        %v1815 = vld [vmem:[#allocation13 + $0xe0] sm:$0xff]
        %v1816 = vld [vmem:[#allocation13 + $0xe8] sm:$0xff]
        %v1817 = vld [vmem:[#allocation13 + $0xf0] sm:$0xff]
        %v1818 = vld [vmem:[#allocation13 + $0xf8] sm:$0xff]
        %v1819 = vld [vmem:[%s10] sm:$0xf]
        %v1821 = vlaneseq
        %v1822 = vshrl.u32 %v1821, 7
        %v1823 = vsub.s32 0, %v1822
        %v1824 = vrot.slane %v1819, %v1823
        %v1825 = vlaneseq
        %v1826 = vshrl.u32 %v1825, 7
        %v1827 = vsub.s32 1, %v1826
        %v1828 = vrot.slane %v1819, %v1827
        %v1829 = vlaneseq
        %v1830 = vshrl.u32 %v1829, 7
        %v1831 = vsub.s32 2, %v1830
        %v1832 = vrot.slane %v1819, %v1831
        %v1833 = vlaneseq
        %v1834 = vshrl.u32 %v1833, 7
        %v1835 = vsub.s32 3, %v1834
        %v1836 = vrot.slane %v1819, %v1835
        %v1873 = vunpack.c.l.b16 %v1787
        %v1874 = vunpack.c.h.b16 %v1787
        %v1875 = vunpack.c.l.b16 %v1788
        %v1876 = vunpack.c.h.b16 %v1788
        %v1877 = vunpack.c.l.b16 %v1789
        %v1878 = vunpack.c.h.b16 %v1789
        %v1879 = vunpack.c.l.b16 %v1790
        %v1880 = vunpack.c.h.b16 %v1790
        %v1881 = vunpack.c.l.b16 %v1791
        %v1882 = vunpack.c.h.b16 %v1791
        %v1883 = vunpack.c.l.b16 %v1792
        %v1884 = vunpack.c.h.b16 %v1792
        %v1885 = vunpack.c.l.b16 %v1793
        %v1886 = vunpack.c.h.b16 %v1793
        %v1887 = vunpack.c.l.b16 %v1794
        %v1888 = vunpack.c.h.b16 %v1794
        %v1889 = vunpack.c.l.b16 %v1795
        %v1890 = vunpack.c.h.b16 %v1795
        %v1891 = vunpack.c.l.b16 %v1796
        %v1892 = vunpack.c.h.b16 %v1796
        %v1893 = vunpack.c.l.b16 %v1797
        %v1894 = vunpack.c.h.b16 %v1797
        %v1895 = vunpack.c.l.b16 %v1798
        %v1896 = vunpack.c.h.b16 %v1798
        %v1897 = vunpack.c.l.b16 %v1799
        %v1898 = vunpack.c.h.b16 %v1799
        %v1899 = vunpack.c.l.b16 %v1800
        %v1900 = vunpack.c.h.b16 %v1800
        %v1901 = vunpack.c.l.b16 %v1801
        %v1902 = vunpack.c.h.b16 %v1801
        %v1903 = vunpack.c.l.b16 %v1802
        %v1904 = vunpack.c.h.b16 %v1802
        %v1905 = vunpack.c.l.b16 %v1803
        %v1906 = vunpack.c.h.b16 %v1803
        %v1907 = vunpack.c.l.b16 %v1804
        %v1908 = vunpack.c.h.b16 %v1804
        %v1909 = vunpack.c.l.b16 %v1805
        %v1910 = vunpack.c.h.b16 %v1805
        %v1911 = vunpack.c.l.b16 %v1806
        %v1912 = vunpack.c.h.b16 %v1806
        %v1913 = vunpack.c.l.b16 %v1807
        %v1914 = vunpack.c.h.b16 %v1807
        %v1915 = vunpack.c.l.b16 %v1808
        %v1916 = vunpack.c.h.b16 %v1808
        %v1917 = vunpack.c.l.b16 %v1809
        %v1918 = vunpack.c.h.b16 %v1809
        %v1919 = vunpack.c.l.b16 %v1810
        %v1920 = vunpack.c.h.b16 %v1810
        %v1921 = vunpack.c.l.b16 %v1811
        %v1922 = vunpack.c.h.b16 %v1811
        %v1923 = vunpack.c.l.b16 %v1812
        %v1924 = vunpack.c.h.b16 %v1812
        %v1925 = vunpack.c.l.b16 %v1813
        %v1926 = vunpack.c.h.b16 %v1813
        %v1927 = vunpack.c.l.b16 %v1814
        %v1928 = vunpack.c.h.b16 %v1814
        %v1929 = vunpack.c.l.b16 %v1815
        %v1930 = vunpack.c.h.b16 %v1815
        %v1931 = vunpack.c.l.b16 %v1816
        %v1932 = vunpack.c.h.b16 %v1816
        %v1933 = vunpack.c.l.b16 %v1817
        %v1934 = vunpack.c.h.b16 %v1817
        %v1935 = vunpack.c.l.b16 %v1818
        %v1936 = vunpack.c.h.b16 %v1818
        %v1937 = vpack.c.b16 %v1877, %v1873
        %v1938 = vpack.c.b16 %v1878, %v1874
        %v1939 = vpack.c.b16 %v1879, %v1875
        %v1940 = vpack.c.b16 %v1880, %v1876
        %v1941 = vpack.c.b16 %v1885, %v1881
        %v1942 = vpack.c.b16 %v1886, %v1882
        %v1943 = vpack.c.b16 %v1887, %v1883
        %v1944 = vpack.c.b16 %v1888, %v1884
        %v1945 = vpack.c.b16 %v1893, %v1889
        %v1946 = vpack.c.b16 %v1894, %v1890
        %v1947 = vpack.c.b16 %v1895, %v1891
        %v1948 = vpack.c.b16 %v1896, %v1892
        %v1949 = vpack.c.b16 %v1901, %v1897
        %v1950 = vpack.c.b16 %v1902, %v1898
        %v1951 = vpack.c.b16 %v1903, %v1899
        %v1952 = vpack.c.b16 %v1904, %v1900
        %v1953 = vpack.c.b16 %v1909, %v1905
        %v1954 = vpack.c.b16 %v1910, %v1906
        %v1955 = vpack.c.b16 %v1911, %v1907
        %v1956 = vpack.c.b16 %v1912, %v1908
        %v1957 = vpack.c.b16 %v1917, %v1913
        %v1958 = vpack.c.b16 %v1918, %v1914
        %v1959 = vpack.c.b16 %v1919, %v1915
        %v1960 = vpack.c.b16 %v1920, %v1916
        %v1961 = vpack.c.b16 %v1925, %v1921
        %v1962 = vpack.c.b16 %v1926, %v1922
        %v1963 = vpack.c.b16 %v1927, %v1923
        %v1964 = vpack.c.b16 %v1928, %v1924
        %v1965 = vpack.c.b16 %v1933, %v1929
        %v1966 = vpack.c.b16 %v1934, %v1930
        %v1967 = vpack.c.b16 %v1935, %v1931
        %v1968 = vpack.c.b16 %v1936, %v1932
        %2001 = vmatprep.subr.bf16.mxu0 %v1938
        %2002 = vmatpush1.bf16.msra.mxu0 %v1937
        %2003 = vmatprep.subr.bf16.mxu0 %v1942
        %2004 = vmatpush1.bf16.msra.mxu0 %v1941
        %2005 = vmatprep.subr.bf16.mxu0 %v1946
        %2006 = vmatpush1.bf16.msra.mxu0 %v1945
        %2007 = vmatprep.subr.bf16.mxu0 %v1950
        %2008 = vmatpush1.bf16.msra.mxu0 %v1949
        %2009 = vmatprep.subr.bf16.mxu0 %v1954
        %2010 = vmatpush1.bf16.msra.mxu0 %v1953
        %2011 = vmatprep.subr.bf16.mxu0 %v1958
        %2012 = vmatpush1.bf16.msra.mxu0 %v1957
        %2013 = vmatprep.subr.bf16.mxu0 %v1962
        %2014 = vmatpush1.bf16.msra.mxu0 %v1961
        %2015 = vmatprep.subr.bf16.mxu0 %v1966
        %2016 = vmatpush1.bf16.msra.mxu0 %v1965
        %2017 = vmatprep.subr.bf16.mxu0 0
        %2018 = vmatpush1.bf16.msra.mxu0 0
        %2019 = vmatprep.subr.bf16.mxu0 0
        %2020 = vmatpush1.bf16.msra.mxu0 0
        %2021 = vmatprep.subr.bf16.mxu0 0
        %2022 = vmatpush1.bf16.msra.mxu0 0
        %2023 = vmatprep.subr.bf16.mxu0 0
        %2024 = vmatpush1.bf16.msra.mxu0 0
        %2025 = vmatprep.subr.bf16.mxu0 0
        %2026 = vmatpush1.bf16.msra.mxu0 0
        %2027 = vmatprep.subr.bf16.mxu0 0
        %2028 = vmatpush1.bf16.msra.mxu0 0
        %2029 = vmatprep.subr.bf16.mxu0 0
        %2030 = vmatpush1.bf16.msra.mxu0 0
        %2031 = vmatprep.subr.bf16.mxu0 0
        %2032 = vmatpush1.bf16.msra.mxu0 0
        %2033 = vmatprep.mubr.bf16.mxu0 0
        %2034 = vmatmul.mubr.bf16.gmra.mrb[0].mxu0 %v1786
        %v2035 = vpop.f32.mrb[0].mxu0
        %v2036 = vadd.f32 %v1824, %v2035
        %v2037 = vpop.f32.mrb[0].mxu0
        %v2038 = vadd.f32 %v1828, %v2037
        %v2039 = vpop.f32.mrb[0].mxu0
        %v2040 = vadd.f32 %v1824, %v2039
        %v2041 = vpop.f32.mrb[0].mxu0
        %v2042 = vadd.f32 %v1828, %v2041
        %2043 = vdwg.mxu0
        %2044 = vmatprep.subr.bf16.mxu0 %v1940
        %2045 = vmatpush1.bf16.msra.mxu0 %v1939
        %2046 = vmatprep.subr.bf16.mxu0 %v1944
        %2047 = vmatpush1.bf16.msra.mxu0 %v1943
        %2048 = vmatprep.subr.bf16.mxu0 %v1948
        %2049 = vmatpush1.bf16.msra.mxu0 %v1947
        %2050 = vmatprep.subr.bf16.mxu0 %v1952
        %2051 = vmatpush1.bf16.msra.mxu0 %v1951
        %2052 = vmatprep.subr.bf16.mxu0 %v1956
        %2053 = vmatpush1.bf16.msra.mxu0 %v1955
        %2054 = vmatprep.subr.bf16.mxu0 %v1960
        %2055 = vmatpush1.bf16.msra.mxu0 %v1959
        %2056 = vmatprep.subr.bf16.mxu0 %v1964
        %2057 = vmatpush1.bf16.msra.mxu0 %v1963
        %2058 = vmatprep.subr.bf16.mxu0 %v1968
        %2059 = vmatpush1.bf16.msra.mxu0 %v1967
        %2060 = vmatprep.subr.bf16.mxu0 0
        %2061 = vmatpush1.bf16.msra.mxu0 0
        %2062 = vmatprep.subr.bf16.mxu0 0
        %2063 = vmatpush1.bf16.msra.mxu0 0
        %2064 = vmatprep.subr.bf16.mxu0 0
        %2065 = vmatpush1.bf16.msra.mxu0 0
        %2066 = vmatprep.subr.bf16.mxu0 0
        %2067 = vmatpush1.bf16.msra.mxu0 0
        %2068 = vmatprep.subr.bf16.mxu0 0
        %2069 = vmatpush1.bf16.msra.mxu0 0
        %2070 = vmatprep.subr.bf16.mxu0 0
        %2071 = vmatpush1.bf16.msra.mxu0 0
        %2072 = vmatprep.subr.bf16.mxu0 0
        %2073 = vmatpush1.bf16.msra.mxu0 0
        %2074 = vmatprep.subr.bf16.mxu0 0
        %2075 = vmatpush1.bf16.msra.mxu0 0
        %2076 = vmatprep.mubr.bf16.mxu0 0
        %2077 = vmatmul.mubr.bf16.gmra.mrb[0].mxu0 %v1786
        %v2078 = vpop.f32.mrb[0].mxu0
        %v2079 = vadd.f32 %v1832, %v2078
        %v2080 = vpop.f32.mrb[0].mxu0
        %v2081 = vadd.f32 %v1836, %v2080
        %v2082 = vpop.f32.mrb[0].mxu0
        %v2083 = vadd.f32 %v1832, %v2082
        %v2084 = vpop.f32.mrb[0].mxu0
        %v2085 = vadd.f32 %v1836, %v2084
        %2086 = vdwg.mxu0
        %v2087 = vmax.f32 %v2036, 0.0
        %v2088 = vmax.f32 %v2038, 0.0
        %v2089 = vmax.f32 %v2079, 0.0
        %v2090 = vmax.f32 %v2081, 0.0
        %v2091 = vmax.f32 %v2040, 0.0
        %v2092 = vmax.f32 %v2042, 0.0
        %v2093 = vmax.f32 %v2083, 0.0
        %v2094 = vmax.f32 %v2085, 0.0
        %v2095 = vpack.c.bf16 %v2091, %v2087
        %v2096 = vpack.c.bf16 %v2092, %v2088
        %v2097 = vpack.c.bf16 %v2093, %v2089
        %v2098 = vpack.c.bf16 %v2094, %v2090
        %v2099 = vld [vmem:[#allocation15] sm:$0xf]
        %v2100 = vld [vmem:[#allocation15 + $0x4] sm:$0xf]
        %v2101 = vld [vmem:[#allocation15 + $0x8] sm:$0xf]
        %v2102 = vld [vmem:[#allocation15 + $0xc] sm:$0xf]
        %v2103 = vld [vmem:[#allocation15 + $0x10] sm:$0xf]
        %v2104 = vld [vmem:[#allocation15 + $0x14] sm:$0xf]
        %v2105 = vld [vmem:[#allocation15 + $0x18] sm:$0xf]
        %v2106 = vld [vmem:[#allocation15 + $0x1c] sm:$0xf]
        %v2107 = vld [vmem:[#allocation15 + $0x20] sm:$0xf]
        %v2108 = vld [vmem:[#allocation15 + $0x24] sm:$0xf]
        %v2109 = vld [vmem:[#allocation15 + $0x28] sm:$0xf]
        %v2110 = vld [vmem:[#allocation15 + $0x2c] sm:$0xf]
        %v2111 = vld [vmem:[#allocation15 + $0x30] sm:$0xf]
        %v2112 = vld [vmem:[#allocation15 + $0x34] sm:$0xf]
        %v2113 = vld [vmem:[#allocation15 + $0x38] sm:$0xf]
        %v2114 = vld [vmem:[#allocation15 + $0x3c] sm:$0xf]
        %v2115 = vld [vmem:[#allocation15 + $0x40] sm:$0xf]
        %v2116 = vld [vmem:[#allocation15 + $0x44] sm:$0xf]
        %v2117 = vld [vmem:[#allocation15 + $0x48] sm:$0xf]
        %v2118 = vld [vmem:[#allocation15 + $0x4c] sm:$0xf]
        %v2119 = vld [vmem:[#allocation15 + $0x50] sm:$0xf]
        %v2120 = vld [vmem:[#allocation15 + $0x54] sm:$0xf]
        %v2121 = vld [vmem:[#allocation15 + $0x58] sm:$0xf]
        %v2122 = vld [vmem:[#allocation15 + $0x5c] sm:$0xf]
        %v2123 = vld [vmem:[#allocation15 + $0x60] sm:$0xf]
        %v2124 = vld [vmem:[#allocation15 + $0x64] sm:$0xf]
        %v2125 = vld [vmem:[#allocation15 + $0x68] sm:$0xf]
        %v2126 = vld [vmem:[#allocation15 + $0x6c] sm:$0xf]
        %v2127 = vld [vmem:[#allocation15 + $0x70] sm:$0xf]
        %v2128 = vld [vmem:[#allocation15 + $0x74] sm:$0xf]
        %v2129 = vld [vmem:[#allocation15 + $0x78] sm:$0xf]
        %v2130 = vld [vmem:[#allocation15 + $0x7c] sm:$0xf]
        %v2131 = vld [vmem:[#allocation15 + $0x80] sm:$0xf]
        %v2132 = vld [vmem:[#allocation15 + $0x84] sm:$0xf]
        %v2133 = vld [vmem:[#allocation15 + $0x88] sm:$0xf]
        %v2134 = vld [vmem:[#allocation15 + $0x8c] sm:$0xf]
        %v2135 = vld [vmem:[#allocation15 + $0x90] sm:$0xf]
        %v2136 = vld [vmem:[#allocation15 + $0x94] sm:$0xf]
        %v2137 = vld [vmem:[#allocation15 + $0x98] sm:$0xf]
        %v2138 = vld [vmem:[#allocation15 + $0x9c] sm:$0xf]
        %v2139 = vld [vmem:[#allocation15 + $0xa0] sm:$0xf]
        %v2140 = vld [vmem:[#allocation15 + $0xa4] sm:$0xf]
        %v2141 = vld [vmem:[#allocation15 + $0xa8] sm:$0xf]
        %v2142 = vld [vmem:[#allocation15 + $0xac] sm:$0xf]
        %v2143 = vld [vmem:[#allocation15 + $0xb0] sm:$0xf]
        %v2144 = vld [vmem:[#allocation15 + $0xb4] sm:$0xf]
        %v2145 = vld [vmem:[#allocation15 + $0xb8] sm:$0xf]
        %v2146 = vld [vmem:[#allocation15 + $0xbc] sm:$0xf]
        %v2147 = vld [vmem:[#allocation15 + $0xc0] sm:$0xf]
        %v2148 = vld [vmem:[#allocation15 + $0xc4] sm:$0xf]
        %v2149 = vld [vmem:[#allocation15 + $0xc8] sm:$0xf]
        %v2150 = vld [vmem:[#allocation15 + $0xcc] sm:$0xf]
        %v2151 = vld [vmem:[#allocation15 + $0xd0] sm:$0xf]
        %v2152 = vld [vmem:[#allocation15 + $0xd4] sm:$0xf]
        %v2153 = vld [vmem:[#allocation15 + $0xd8] sm:$0xf]
        %v2154 = vld [vmem:[#allocation15 + $0xdc] sm:$0xf]
        %v2155 = vld [vmem:[#allocation15 + $0xe0] sm:$0xf]
        %v2156 = vld [vmem:[#allocation15 + $0xe4] sm:$0xf]
        %v2157 = vld [vmem:[#allocation15 + $0xe8] sm:$0xf]
        %v2158 = vld [vmem:[#allocation15 + $0xec] sm:$0xf]
        %v2159 = vld [vmem:[#allocation15 + $0xf0] sm:$0xf]
        %v2160 = vld [vmem:[#allocation15 + $0xf4] sm:$0xf]
        %v2161 = vld [vmem:[#allocation15 + $0xf8] sm:$0xf]
        %v2162 = vld [vmem:[#allocation15 + $0xfc] sm:$0xf]
        %v2163 = vld [vmem:[%s12] sm:$0x1]
        %v2165 = vlaneseq
        %v2166 = vshrl.u32 %v2165, 7
        %v2167 = vsub.s32 0, %v2166
        %v2168 = vrot.slane %v2163, %v2167
        %v2234 = vunpack.c.l.b16 %v2099
        %v2235 = vunpack.c.l.b16 %v2100
        %v2236 = vunpack.c.l.b16 %v2101
        %v2237 = vunpack.c.l.b16 %v2102
        %v2238 = vunpack.c.l.b16 %v2103
        %v2239 = vunpack.c.l.b16 %v2104
        %v2240 = vunpack.c.l.b16 %v2105
        %v2241 = vunpack.c.l.b16 %v2106
        %v2242 = vunpack.c.l.b16 %v2107
        %v2243 = vunpack.c.l.b16 %v2108
        %v2244 = vunpack.c.l.b16 %v2109
        %v2245 = vunpack.c.l.b16 %v2110
        %v2246 = vunpack.c.l.b16 %v2111
        %v2247 = vunpack.c.l.b16 %v2112
        %v2248 = vunpack.c.l.b16 %v2113
        %v2249 = vunpack.c.l.b16 %v2114
        %v2250 = vunpack.c.l.b16 %v2115
        %v2251 = vunpack.c.l.b16 %v2116
        %v2252 = vunpack.c.l.b16 %v2117
        %v2253 = vunpack.c.l.b16 %v2118
        %v2254 = vunpack.c.l.b16 %v2119
        %v2255 = vunpack.c.l.b16 %v2120
        %v2256 = vunpack.c.l.b16 %v2121
        %v2257 = vunpack.c.l.b16 %v2122
        %v2258 = vunpack.c.l.b16 %v2123
        %v2259 = vunpack.c.l.b16 %v2124
        %v2260 = vunpack.c.l.b16 %v2125
        %v2261 = vunpack.c.l.b16 %v2126
        %v2262 = vunpack.c.l.b16 %v2127
        %v2263 = vunpack.c.l.b16 %v2128
        %v2264 = vunpack.c.l.b16 %v2129
        %v2265 = vunpack.c.l.b16 %v2130
        %v2266 = vunpack.c.l.b16 %v2131
        %v2267 = vunpack.c.l.b16 %v2132
        %v2268 = vunpack.c.l.b16 %v2133
        %v2269 = vunpack.c.l.b16 %v2134
        %v2270 = vunpack.c.l.b16 %v2135
        %v2271 = vunpack.c.l.b16 %v2136
        %v2272 = vunpack.c.l.b16 %v2137
        %v2273 = vunpack.c.l.b16 %v2138
        %v2274 = vunpack.c.l.b16 %v2139
        %v2275 = vunpack.c.l.b16 %v2140
        %v2276 = vunpack.c.l.b16 %v2141
        %v2277 = vunpack.c.l.b16 %v2142
        %v2278 = vunpack.c.l.b16 %v2143
        %v2279 = vunpack.c.l.b16 %v2144
        %v2280 = vunpack.c.l.b16 %v2145
        %v2281 = vunpack.c.l.b16 %v2146
        %v2282 = vunpack.c.l.b16 %v2147
        %v2283 = vunpack.c.l.b16 %v2148
        %v2284 = vunpack.c.l.b16 %v2149
        %v2285 = vunpack.c.l.b16 %v2150
        %v2286 = vunpack.c.l.b16 %v2151
        %v2287 = vunpack.c.l.b16 %v2152
        %v2288 = vunpack.c.l.b16 %v2153
        %v2289 = vunpack.c.l.b16 %v2154
        %v2290 = vunpack.c.l.b16 %v2155
        %v2291 = vunpack.c.l.b16 %v2156
        %v2292 = vunpack.c.l.b16 %v2157
        %v2293 = vunpack.c.l.b16 %v2158
        %v2294 = vunpack.c.l.b16 %v2159
        %v2295 = vunpack.c.l.b16 %v2160
        %v2296 = vunpack.c.l.b16 %v2161
        %v2297 = vunpack.c.l.b16 %v2162
        %v2298 = vpack.c.b16 %v2235, %v2234
        %v2299 = vpack.c.b16 %v2237, %v2236
        %v2300 = vpack.c.b16 %v2239, %v2238
        %v2301 = vpack.c.b16 %v2241, %v2240
        %v2302 = vpack.c.b16 %v2243, %v2242
        %v2303 = vpack.c.b16 %v2245, %v2244
        %v2304 = vpack.c.b16 %v2247, %v2246
        %v2305 = vpack.c.b16 %v2249, %v2248
        %v2306 = vpack.c.b16 %v2251, %v2250
        %v2307 = vpack.c.b16 %v2253, %v2252
        %v2308 = vpack.c.b16 %v2255, %v2254
        %v2309 = vpack.c.b16 %v2257, %v2256
        %v2310 = vpack.c.b16 %v2259, %v2258
        %v2311 = vpack.c.b16 %v2261, %v2260
        %v2312 = vpack.c.b16 %v2263, %v2262
        %v2313 = vpack.c.b16 %v2265, %v2264
        %v2314 = vpack.c.b16 %v2267, %v2266
        %v2315 = vpack.c.b16 %v2269, %v2268
        %v2316 = vpack.c.b16 %v2271, %v2270
        %v2317 = vpack.c.b16 %v2273, %v2272
        %v2318 = vpack.c.b16 %v2275, %v2274
        %v2319 = vpack.c.b16 %v2277, %v2276
        %v2320 = vpack.c.b16 %v2279, %v2278
        %v2321 = vpack.c.b16 %v2281, %v2280
        %v2322 = vpack.c.b16 %v2283, %v2282
        %v2323 = vpack.c.b16 %v2285, %v2284
        %v2324 = vpack.c.b16 %v2287, %v2286
        %v2325 = vpack.c.b16 %v2289, %v2288
        %v2326 = vpack.c.b16 %v2291, %v2290
        %v2327 = vpack.c.b16 %v2293, %v2292
        %v2328 = vpack.c.b16 %v2295, %v2294
        %v2329 = vpack.c.b16 %v2297, %v2296
        %2362 = vmatprep.subr.bf16.mxu0 0
        %2363 = vmatpush1.bf16.msra.mxu0 %v2298
        %2364 = vmatprep.subr.bf16.mxu0 0
        %2365 = vmatpush1.bf16.msra.mxu0 %v2299
        %2366 = vmatprep.subr.bf16.mxu0 0
        %2367 = vmatpush1.bf16.msra.mxu0 %v2300
        %2368 = vmatprep.subr.bf16.mxu0 0
        %2369 = vmatpush1.bf16.msra.mxu0 %v2301
        %2370 = vmatprep.subr.bf16.mxu0 0
        %2371 = vmatpush1.bf16.msra.mxu0 %v2302
        %2372 = vmatprep.subr.bf16.mxu0 0
        %2373 = vmatpush1.bf16.msra.mxu0 %v2303
        %2374 = vmatprep.subr.bf16.mxu0 0
        %2375 = vmatpush1.bf16.msra.mxu0 %v2304
        %2376 = vmatprep.subr.bf16.mxu0 0
        %2377 = vmatpush1.bf16.msra.mxu0 %v2305
        %2378 = vmatprep.subr.bf16.mxu0 0
        %2379 = vmatpush1.bf16.msra.mxu0 %v2306
        %2380 = vmatprep.subr.bf16.mxu0 0
        %2381 = vmatpush1.bf16.msra.mxu0 %v2307
        %2382 = vmatprep.subr.bf16.mxu0 0
        %2383 = vmatpush1.bf16.msra.mxu0 %v2308
        %2384 = vmatprep.subr.bf16.mxu0 0
        %2385 = vmatpush1.bf16.msra.mxu0 %v2309
        %2386 = vmatprep.subr.bf16.mxu0 0
        %2387 = vmatpush1.bf16.msra.mxu0 %v2310
        %2388 = vmatprep.subr.bf16.mxu0 0
        %2389 = vmatpush1.bf16.msra.mxu0 %v2311
        %2390 = vmatprep.subr.bf16.mxu0 0
        %2391 = vmatpush1.bf16.msra.mxu0 %v2312
        %2392 = vmatprep.subr.bf16.mxu0 0
        %2393 = vmatpush1.bf16.msra.mxu0 %v2313
        %2394 = vmatprep.mubr.bf16.mxu0 %v2096
        %2395 = vmatmul.mubr.bf16.gmra.mrb[0].mxu0 %v2095
        %v2396 = vpop.f32.mrb[0].mxu0
        %v2397 = vadd.f32 %v2168, %v2396
        %v2398 = vpop.f32.mrb[0].mxu0
        %v2399 = vpop.f32.mrb[0].mxu0
        %v2400 = vadd.f32 %v2168, %v2399
        %v2401 = vpop.f32.mrb[0].mxu0
        %2402 = vdwg.mxu0
        %2403 = vmatprep.subr.bf16.mxu0 0
        %2404 = vmatpush1.bf16.msra.mxu0 %v2314
        %2405 = vmatprep.subr.bf16.mxu0 0
        %2406 = vmatpush1.bf16.msra.mxu0 %v2315
        %2407 = vmatprep.subr.bf16.mxu0 0
        %2408 = vmatpush1.bf16.msra.mxu0 %v2316
        %2409 = vmatprep.subr.bf16.mxu0 0
        %2410 = vmatpush1.bf16.msra.mxu0 %v2317
        %2411 = vmatprep.subr.bf16.mxu0 0
        %2412 = vmatpush1.bf16.msra.mxu0 %v2318
        %2413 = vmatprep.subr.bf16.mxu0 0
        %2414 = vmatpush1.bf16.msra.mxu0 %v2319
        %2415 = vmatprep.subr.bf16.mxu0 0
        %2416 = vmatpush1.bf16.msra.mxu0 %v2320
        %2417 = vmatprep.subr.bf16.mxu0 0
        %2418 = vmatpush1.bf16.msra.mxu0 %v2321
        %2419 = vmatprep.subr.bf16.mxu0 0
        %2420 = vmatpush1.bf16.msra.mxu0 %v2322
        %2421 = vmatprep.subr.bf16.mxu0 0
        %2422 = vmatpush1.bf16.msra.mxu0 %v2323
        %2423 = vmatprep.subr.bf16.mxu0 0
        %2424 = vmatpush1.bf16.msra.mxu0 %v2324
        %2425 = vmatprep.subr.bf16.mxu0 0
        %2426 = vmatpush1.bf16.msra.mxu0 %v2325
        %2427 = vmatprep.subr.bf16.mxu0 0
        %2428 = vmatpush1.bf16.msra.mxu0 %v2326
        %2429 = vmatprep.subr.bf16.mxu0 0
        %2430 = vmatpush1.bf16.msra.mxu0 %v2327
        %2431 = vmatprep.subr.bf16.mxu0 0
        %2432 = vmatpush1.bf16.msra.mxu0 %v2328
        %2433 = vmatprep.subr.bf16.mxu0 0
        %2434 = vmatpush1.bf16.msra.mxu0 %v2329
        %2435 = vmatprep.mubr.bf16.mxu0 %v2098
        %2436 = vmatmul.mubr.bf16.gmra.mrb[0].mxu0 %v2097
        %v2437 = vpop.f32.mrb[0].mxu0
        %v2438 = vadd.f32 %v2397, %v2437
        %v2439 = vpop.f32.mrb[0].mxu0
        %v2440 = vpop.f32.mrb[0].mxu0
        %v2441 = vadd.f32 %v2400, %v2440
        %v2442 = vpop.f32.mrb[0].mxu0
        %2443 = vdwg.mxu0
        %v2444 = vadd.f32 %v1744, %v2438
        %v2445 = vadd.f32 %v1745, %v2441
        %2446 = vst [vmem:[%s559] sm:$0xff] %v2444
        %2447 = vst [vmem:[%s559 + $0x8] sm:$0xff] %v2445
        %s2448 = sand.u32 %s335, 1
        %s2449 = scalar_lea.sflag [#allocation6], %s2448
        %s2450 = sand.u32 %s335, 1
        %s2451 = smul.addr %s2450, 16
        %s2452 = scalar_lea.vmem [#allocation16], %s2451
        // Predicated region
        $region108: #{tpu_custom_call.1} parent=71 // pred_check
          %p2453 = pneg %p345
        $region109: #{tpu_custom_call.1} parent=71 // pred_check_branch
          %2455 = sbr.rel (%p2453) target = $region111
        $region110: #{tpu_custom_call.1} parent=71 // pred_region
          %s2456 = smul.u32 2, %s38
          %s2458 = ssub.s32 256, 256
          %2459 = vsyncadd %s2449, %s2458
          %s2460 = smul.addr %s37, 4
          %s2461 = sadd.s32 %s2456, %s2460
          %s2462 = smul.addr %s2461, 128
          %s2463 = scalar_lea.hbm %s13, %s2462
          %s2464 = sshll.u32 %s2452, 4
          %s2465 = int_to_ptr.vmem [resolvable:$true] %s2464
          %2470 = dma.vmem_to_hbm [thread:$0]  %s2465, 256, %s2463, %s2449, 128, 128, 8
        $region111: #{tpu_custom_call.1} parent=71 // pred_fallthru
          _
      $region72: #{tpu_custom_call.1} parent=5 // pred_fallthru
        _
      %p2471 = scmp.le.s32.totalorder 2, %s28
      // Predicated region
      $region112: #{tpu_custom_call.1} parent=5 // pred_check
        %p2472 = pneg %p2471
      $region113: #{tpu_custom_call.1} parent=5 // pred_check_branch
        %2474 = sbr.rel (%p2472) target = $region115
      $region114: #{tpu_custom_call.1} parent=5 // pred_region
        %s2475 = ssub.s32 %s28, 2
        // Predicated region
        $region116: #{tpu_custom_call.1} parent=114 // pred_check
          %p2476 = pneg %p351
        $region117: #{tpu_custom_call.1} parent=114 // pred_check_branch
          %2478 = sbr.rel (%p2476) target = $region119
        $region118: #{tpu_custom_call.1} parent=114 // pred_region
          %s2479 = sand.u32 %s336, 1
          %s2480 = scalar_lea.sflag [#allocation6], %s2479
          %s2481 = sand.u32 %s336, 1
          %s2482 = smul.addr %s2481, 16
          %s2483 = scalar_lea.vmem [#allocation16], %s2482
          %2484 = dma.done %s2480, 256
        $region119: #{tpu_custom_call.1} parent=114 // pred_fallthru
          _
      $region115: #{tpu_custom_call.1} parent=5 // pred_fallthru
        _
    $region6: #{tpu_custom_call.1} parent=1 // loop_footer
      %s32 = sadd.s32 1, %s28
    $region7: #{tpu_custom_call.1} parent=1 // loop_footer_branch
      %27 = sbr.rel target = $region3
    $region8: #{tpu_custom_call.1} parent=1 // loop_exit
      _
    %2485 = vsyncpa [#allocation5], 1
    %s2486 = scalar_lea.sflag [#allocation5], 1
    %2487 = vsyncpa %s2486, 1
    %2488 = vsyncpa [#allocation8], 1
    %2489 = vsyncpa [#allocation11], 1
    %2490 = vsyncpa [#allocation14], 1
    %2491 = vsyncpa [#allocation6], 1
    %s2492 = scalar_lea.sflag [#allocation6], 1
    %2493 = vsyncpa %s2492, 1

</llo_original>
